<compile_context>
chip_gen: v7x
topology: tpu7x:2x2x1
jax: 0.10.0
libtpu: 0.0.40
codegen_flags: <defaults>
</compile_context>

<pallas_src>
import functools
import math

import numpy as np
import jax
import jax.numpy as jnp
from jax.experimental import pallas as pl

# ----------------------------- config -----------------------------
B = 2            # batch
S_ENC = 8        # encoder seq len
S_DEC = 8        # decoder seq len
H = 32           # hidden size
NH = 2           # attention heads
DH = H // NH     # head dim
FFN = 64         # MLP inner dim
V_ENC = 100      # encoder vocab
V_DEC = 100      # decoder vocab
NUM_LABELS = 4
N_ENC_LAYERS = 1
N_DEC_LAYERS = 1
LN_EPS = 1e-5
NEG = -1e9

V_PAD = 128      # lane-dense padded LM-head width (tail disabled via -1e9 bias)
C_PAD = 128      # lane-dense padded classifier width


# ----------------------------- in-kernel helpers -----------------------------
def _ln(x, g, b, eps=LN_EPS):
    # x: (M, H) f32; g/b: (1, H) f32
    mu = jnp.mean(x, axis=-1, keepdims=True)
    xc = x - mu
    var = jnp.mean(xc * xc, axis=-1, keepdims=True)
    return xc * jax.lax.rsqrt(var + eps) * g + b


def _proj(x_f32, w_ref, b_row):
    # bf16 MXU matmul with f32 accumulation; bias added in f32.
    return jnp.dot(x_f32.astype(jnp.bfloat16), w_ref[...],
                   preferred_element_type=jnp.float32) + b_row


def _mha(q_flat, k_flat, v_flat, mask, wo_ref, bo_row, bsz, sq, sk, nh, dh):
    """Multi-head attention; heads are static lane slices; per-head out-proj is
    accumulated directly (avoids concat/relayout).  All matmuls bf16 -> f32 acc.

      q_flat: (B*Sq, nh*dh) f32;  k_flat/v_flat: (B*Sk, nh*dh) f32
      mask:   (B, Sq, Sk) additive f32
      wo_ref: (nh*dh, H) bf16 ref; bo_row: (1, H) f32
      returns (B*Sq, H) f32
    """
    hd = nh * dh
    scale = 1.0 / math.sqrt(dh)
    out = jnp.broadcast_to(bo_row, (bsz * sq, hd)).astype(jnp.float32)
    for hh in range(nh):
        lo, hi = hh * dh, (hh + 1) * dh
        qh = q_flat[:, lo:hi].reshape(bsz, sq, dh).astype(jnp.bfloat16)
        kh = k_flat[:, lo:hi].reshape(bsz, sk, dh).astype(jnp.bfloat16)
        vh = v_flat[:, lo:hi].reshape(bsz, sk, dh).astype(jnp.bfloat16)
        s = jnp.einsum('bqd,bkd->bqk', qh, kh,
                       preferred_element_type=jnp.float32) * scale + mask
        s = s - jnp.max(s, axis=-1, keepdims=True)
        p = jnp.exp(s)
        p = p * pl.reciprocal(jnp.sum(p, axis=-1, keepdims=True), approx=True)
        oh = jnp.einsum('bqk,bkd->bqd', p.astype(jnp.bfloat16), vh,
                        preferred_element_type=jnp.float32).reshape(bsz * sq, dh)
        out = out + jnp.dot(oh.astype(jnp.bfloat16), wo_ref[lo:hi, :],
                            preferred_element_type=jnp.float32)
    return out


def _mlp(x, fc1w_ref, fc1b_row, fc2w_ref, fc2b_row):
    h = jax.nn.gelu(_proj(x, fc1w_ref, fc1b_row))
    return _proj(h, fc2w_ref, fc2b_row)


# ----------------------------- fused layer kernels -----------------------------
def _enc_layer_kernel(h_ref, mask_ref, embg_ref, embb_ref,
                      wqkv_ref, bqkv_ref, wo_ref, bo_ref,
                      ln1g_ref, ln1b_ref,
                      fc1w_ref, fc1b_ref, fc2w_ref, fc2b_ref,
                      ln2g_ref, ln2b_ref,
                      o_ref, *, nh, dh, input_ln):
    bsz, ss, hd = h_ref.shape
    m = bsz * ss
    x = h_ref[...].astype(jnp.float32).reshape(m, hd)
    if input_ln:                                  # embedding LN fused into layer 0
        x = _ln(x, embg_ref[...], embb_ref[...])
    mask = mask_ref[...]

    # self-attention (BERT post-LN), fused QKV projection
    qkv = _proj(x, wqkv_ref, bqkv_ref[...])                       # (M, 3H)
    attn = _mha(qkv[:, :hd], qkv[:, hd:2 * hd], qkv[:, 2 * hd:],
                mask, wo_ref, bo_ref[...], bsz, ss, ss, nh, dh)
    x = _ln(x + attn, ln1g_ref[...], ln1b_ref[...])

    # MLP
    mlp_out = _mlp(x, fc1w_ref, fc1b_ref[...], fc2w_ref, fc2b_ref[...])
    x = _ln(x + mlp_out, ln2g_ref[...], ln2b_ref[...])

    o_ref[...] = x.reshape(bsz, ss, hd).astype(o_ref.dtype)


def _dec_layer_kernel(h_ref, enc_ref, smask_ref, cmask_ref,
                      ln1g_ref, ln1b_ref,
                      wqkv_ref, bqkv_ref, wo_ref, bo_ref,
                      lncg_ref, lncb_ref,
                      wqc_ref, bqc_ref, wkvc_ref, bkvc_ref, woc_ref, boc_ref,
                      ln2g_ref, ln2b_ref,
                      fc1w_ref, fc1b_ref, fc2w_ref, fc2b_ref,
                      o_ref, *, nh, dh):
    bsz, sd, hd = h_ref.shape
    se = enc_ref.shape[1]
    md = bsz * sd
    h = h_ref[...].astype(jnp.float32).reshape(md, hd)
    enc = enc_ref[...].astype(jnp.float32).reshape(bsz * se, hd)

    # masked self-attention (GPT-2 pre-LN), fused QKV
    x = _ln(h, ln1g_ref[...], ln1b_ref[...])
    qkv = _proj(x, wqkv_ref, bqkv_ref[...])                       # (Md, 3H)
    h = h + _mha(qkv[:, :hd], qkv[:, hd:2 * hd], qkv[:, 2 * hd:],
                 smask_ref[...], wo_ref, bo_ref[...], bsz, sd, sd, nh, dh)

    # cross-attention over encoder hidden states, fused KV
    x = _ln(h, lncg_ref[...], lncb_ref[...])
    q = _proj(x, wqc_ref, bqc_ref[...])                           # (Md, H)
    kv = _proj(enc, wkvc_ref, bkvc_ref[...])                      # (B*Se, 2H)
    h = h + _mha(q, kv[:, :hd], kv[:, hd:],
                 cmask_ref[...], woc_ref, boc_ref[...], bsz, sd, se, nh, dh)

    # MLP
    x = _ln(h, ln2g_ref[...], ln2b_ref[...])
    h = h + _mlp(x, fc1w_ref, fc1b_ref[...], fc2w_ref, fc2b_ref[...])

    o_ref[...] = h.reshape(bsz, sd, hd).astype(o_ref.dtype)


def _head_ce_kernel(x_ref, lng_ref, lnb_ref, w_ref, b_ref, tgt_ref,
                    logits_ref, loss_ref, *, apply_ln, denom):
    # (optional final-LN) + linear head (lane-dense padded width) + soft-target CE.
    x = x_ref[...].astype(jnp.float32)
    if apply_ln:
        x = _ln(x, lng_ref[...], lnb_ref[...])
    logits = _proj(x, w_ref, b_ref[...])                          # (M, 128)
    logits_ref[...] = logits.astype(logits_ref.dtype)

    z = logits - jnp.max(logits, axis=-1, keepdims=True)
    lse = jnp.log(jnp.sum(jnp.exp(z), axis=-1, keepdims=True))
    logp = z - lse
    per_row = -jnp.sum(tgt_ref[...].astype(jnp.float32) * logp,
                       axis=-1, keepdims=True)                    # (M, 1)
    total = jnp.sum(per_row, axis=0, keepdims=True)               # (1, 1)
    loss_ref[...] = total * (1.0 / denom)


# ----------------------------- pallas_call wrappers -----------------------------
def pallas_encoder_layer(h, mask, emb_g, emb_b, lp, *, input_ln):
    kernel = functools.partial(_enc_layer_kernel, nh=NH, dh=DH, input_ln=input_ln)
    return pl.pallas_call(
        kernel, out_shape=jax.ShapeDtypeStruct(h.shape, jnp.float32),
    )(h, mask, emb_g, emb_b,
      lp["attn"]["wqkv"], lp["attn"]["bqkv"], lp["attn"]["wo"], lp["attn"]["bo"],
      lp["ln1_g"], lp["ln1_b"],
      lp["fc1_w"], lp["fc1_b"], lp["fc2_w"], lp["fc2_b"],
      lp["ln2_g"], lp["ln2_b"])


def pallas_decoder_layer(h, enc_h, self_mask, cross_mask, lp):
    kernel = functools.partial(_dec_layer_kernel, nh=NH, dh=DH)
    return pl.pallas_call(
        kernel, out_shape=jax.ShapeDtypeStruct(h.shape, jnp.float32),
    )(h, enc_h, self_mask, cross_mask,
      lp["ln1_g"], lp["ln1_b"],
      lp["attn"]["wqkv"], lp["attn"]["bqkv"], lp["attn"]["wo"], lp["attn"]["bo"],
      lp["lnc_g"], lp["lnc_b"],
      lp["cross"]["wq"], lp["cross"]["bq"], lp["cross"]["wkv"], lp["cross"]["bkv"],
      lp["cross"]["wo"], lp["cross"]["bo"],
      lp["ln2_g"], lp["ln2_b"],
      lp["fc1_w"], lp["fc1_b"], lp["fc2_w"], lp["fc2_b"])


def pallas_head_with_ce(x2d, ln_g, ln_b, w, b, targets, *, apply_ln, denom):
    m = x2d.shape[0]
    n = w.shape[1]
    kernel = functools.partial(_head_ce_kernel, apply_ln=apply_ln, denom=float(denom))
    return pl.pallas_call(
        kernel,
        out_shape=(jax.ShapeDtypeStruct((m, n), jnp.float32),
                   jax.ShapeDtypeStruct((1, 1), jnp.float32)),
    )(x2d, ln_g, ln_b, w, b, targets)


# ----------------------------- model forward -----------------------------
def custom_model_forward(params, encoder_input_ids, encoder_attention_mask,
                         decoder_input_ids, decoder_attention_mask,
                         departmentlabels):
    bsz, se = encoder_input_ids.shape
    sd = decoder_input_ids.shape[1]

    # ---------- encoder (BERT-style, post-LN) ----------
    enc = params["encoder"]
    h = enc["tok_emb"][encoder_input_ids] + enc["pos_emb"][None, :se, :]
    key_pad = (1.0 - encoder_attention_mask.astype(jnp.float32)) * NEG       # [B, Se]
    enc_mask = jnp.broadcast_to(key_pad[:, None, :], (bsz, se, se))
    for li, lp in enumerate(enc["layers"]):
        h = pallas_encoder_layer(h, enc_mask, enc["emb_ln_g"], enc["emb_ln_b"],
                                 lp, input_ln=(li == 0))
    hidden_states = h                                                        # [B, Se, H]

    # ---------- decoder (GPT-2-style, pre-LN, w/ cross-attention) ----------
    dec = params["decoder"]
    hd = dec["tok_emb"][decoder_input_ids] + dec["pos_emb"][None, :sd, :]
    causal = jnp.tril(jnp.ones((sd, sd), jnp.float32))
    keep = causal[None, :, :] * decoder_attention_mask.astype(jnp.float32)[:, None, :]
    self_mask = (1.0 - keep) * NEG                                           # [B, Sd, Sd]
    cross_keep = jnp.broadcast_to(
        encoder_attention_mask.astype(jnp.float32)[:, None, :], (bsz, sd, se))
    cross_mask = (1.0 - cross_keep) * NEG                                    # [B, Sd, Se]
    for lp in dec["layers"]:
        hd = pallas_decoder_layer(hd, hidden_states, self_mask, cross_mask, lp)

    # ---------- final LN + LM head + shifted LM loss (fused, lane-dense 128) ----------
    shifted = jnp.concatenate(
        [decoder_input_ids[:, 1:], jnp.zeros((bsz, 1), jnp.int32)], axis=1)
    valid = jnp.concatenate(
        [jnp.ones((bsz, sd - 1), jnp.float32), jnp.zeros((bsz, 1), jnp.float32)], axis=1)
    lm_targets = (jax.nn.one_hot(shifted, V_PAD, dtype=jnp.float32)
                  * valid[..., None]).reshape(bsz * sd, V_PAD)
    lm_logits_pad, lm_loss_arr = pallas_head_with_ce(
        hd.reshape(bsz * sd, H), dec["lnf_g"], dec["lnf_b"],
        dec["lm_w"], dec["lm_b"], lm_targets,
        apply_ln=True, denom=bsz * (sd - 1))
    lm_logits = lm_logits_pad.reshape(bsz, sd, V_PAD)[:, :, :V_DEC]
    lm_loss = lm_loss_arr[0, 0]

    # ---------- classification head on CLS token (dropout = identity in eval) ----------
    cls_tok = hidden_states[:, 0, :]                                         # [B, H]
    cls_targets = jnp.pad(departmentlabels.astype(jnp.float32),
                          ((0, 0), (0, C_PAD - NUM_LABELS)))
    cls_logits_pad, cls_loss_arr = pallas_head_with_ce(
        cls_tok, dec["lnf_g"], dec["lnf_b"],       # LN params unused (apply_ln=False)
        params["cls_w"], params["cls_b"], cls_targets,
        apply_ln=False, denom=bsz)
    classification_logits = cls_logits_pad[:, :NUM_LABELS]
    classification_loss = cls_loss_arr[0, 0]

    return (hidden_states, (lm_loss, lm_logits),
            classification_loss, classification_logits)


# ------------------------- host-side metrics (sklearn equivalents) -------------------------
def _macro_prf(y_true, y_pred):
    labels = np.union1d(y_true, y_pred)
    ps, rs, fs = [], [], []
    for c in labels:
        tp = np.sum((y_pred == c) & (y_true == c))
        fp = np.sum((y_pred == c) & (y_true != c))
        fn = np.sum((y_pred != c) & (y_true == c))
        p = tp / (tp + fp) if (tp + fp) > 0 else 0.0
        r = tp / (tp + fn) if (tp + fn) > 0 else 0.0
        f = 2 * p * r / (p + r) if (p + r) > 0 else 0.0
        ps.append(p); rs.append(r); fs.append(f)
    return float(np.mean(ps)), float(np.mean(rs)), float(np.mean(fs))


# ----------------------------- param init -----------------------------
def _dense(key, fi, fo, scale=0.02):
    return jax.random.normal(key, (fi, fo), jnp.float32) * scale


def init_self_attn(key):
    ks = jax.random.split(key, 4)
    wq, wk, wv, wo = [_dense(k, H, H) for k in ks]
    return {
        "wqkv": jnp.concatenate([wq, wk, wv], axis=1).astype(jnp.bfloat16),
        "bqkv": jnp.zeros((1, 3 * H), jnp.float32),
        "wo": wo.astype(jnp.bfloat16),
        "bo": jnp.zeros((1, H), jnp.float32),
    }


def init_cross_attn(key):
    ks = jax.random.split(key, 4)
    wq, wk, wv, wo = [_dense(k, H, H) for k in ks]
    return {
        "wq": wq.astype(jnp.bfloat16), "bq": jnp.zeros((1, H), jnp.float32),
        "wkv": jnp.concatenate([wk, wv], axis=1).astype(jnp.bfloat16),
        "bkv": jnp.zeros((1, 2 * H), jnp.float32),
        "wo": wo.astype(jnp.bfloat16), "bo": jnp.zeros((1, H), jnp.float32),
    }


def init_enc_layer(key):
    ks = jax.random.split(key, 3)
    return {
        "attn": init_self_attn(ks[0]),
        "ln1_g": jnp.ones((1, H), jnp.float32), "ln1_b": jnp.zeros((1, H), jnp.float32),
        "fc1_w": _dense(ks[1], H, FFN).astype(jnp.bfloat16),
        "fc1_b": jnp.zeros((1, FFN), jnp.float32),
        "fc2_w": _dense(ks[2], FFN, H).astype(jnp.bfloat16),
        "fc2_b": jnp.zeros((1, H), jnp.float32),
        "ln2_g": jnp.ones((1, H), jnp.float32), "ln2_b": jnp.zeros((1, H), jnp.float32),
    }


def init_dec_layer(key):
    ks = jax.random.split(key, 4)
    return {
        "ln1_g": jnp.ones((1, H), jnp.float32), "ln1_b": jnp.zeros((1, H), jnp.float32),
        "attn": init_self_attn(ks[0]),
        "lnc_g": jnp.ones((1, H), jnp.float32), "lnc_b": jnp.zeros((1, H), jnp.float32),
        "cross": init_cross_attn(ks[1]),
        "ln2_g": jnp.ones((1, H), jnp.float32), "ln2_b": jnp.zeros((1, H), jnp.float32),
        "fc1_w": _dense(ks[2], H, FFN).astype(jnp.bfloat16),
        "fc1_b": jnp.zeros((1, FFN), jnp.float32),
        "fc2_w": _dense(ks[3], FFN, H).astype(jnp.bfloat16),
        "fc2_b": jnp.zeros((1, H), jnp.float32),
    }


def init_params(key):
    k = jax.random.split(key, 8)
    encoder = {
        "tok_emb": _dense(k[0], V_ENC, H),
        "pos_emb": _dense(k[1], S_ENC, H),
        "emb_ln_g": jnp.ones((1, H), jnp.float32),
        "emb_ln_b": jnp.zeros((1, H), jnp.float32),
        "layers": [init_enc_layer(kk) for kk in jax.random.split(k[2], N_ENC_LAYERS)],
    }
    # LM head padded to 128 lanes; disabled tail columns get bias -1e9 (softmax-exact).
    lm_w = jnp.zeros((H, V_PAD), jnp.float32).at[:, :V_DEC].set(_dense(k[6], H, V_DEC))
    lm_b = jnp.full((1, V_PAD), NEG, jnp.float32).at[:, :V_DEC].set(0.0)
    decoder = {
        "tok_emb": _dense(k[3], V_DEC, H),
        "pos_emb": _dense(k[4], S_DEC, H),
        "layers": [init_dec_layer(kk) for kk in jax.random.split(k[5], N_DEC_LAYERS)],
        "lnf_g": jnp.ones((1, H), jnp.float32),
        "lnf_b": jnp.zeros((1, H), jnp.float32),
        "lm_w": lm_w.astype(jnp.bfloat16),
        "lm_b": lm_b,
    }
    cls_w = jnp.zeros((H, C_PAD), jnp.float32).at[:, :NUM_LABELS].set(
        _dense(k[7], H, NUM_LABELS))
    cls_b = jnp.full((1, C_PAD), NEG, jnp.float32).at[:, :NUM_LABELS].set(0.0)
    return {
        "encoder": encoder,
        "decoder": decoder,
        "cls_w": cls_w.astype(jnp.bfloat16),
        "cls_b": cls_b,
    }


# ----------------------------- main -----------------------------
if __name__ == "__main__":
    root = jax.random.PRNGKey(0)
    kp, ki = jax.random.split(root)
    params = init_params(kp)

    ks = jax.random.split(ki, 4)
    encoder_input_ids = jax.random.randint(ks[0], (B, S_ENC), 0, V_ENC, dtype=jnp.int32)
    decoder_input_ids = jax.random.randint(ks[1], (B, S_DEC), 0, V_DEC, dtype=jnp.int32)
    encoder_attention_mask = jnp.array([[1] * S_ENC,
                                        [1] * (S_ENC - 2) + [0, 0]], dtype=jnp.int32)
    decoder_attention_mask = jnp.ones((B, S_DEC), dtype=jnp.int32)
    label_idx = jax.random.randint(ks[2], (B,), 0, NUM_LABELS, dtype=jnp.int32)
    departmentlabels = jax.nn.one_hot(label_idx, NUM_LABELS, dtype=jnp.float32)

    fwd = jax.jit(custom_model_forward)
    hidden_states, (lm_loss, lm_logits), cls_loss, cls_logits = fwd(
        params, encoder_input_ids, encoder_attention_mask,
        decoder_input_ids, decoder_attention_mask, departmentlabels)

    jax.block_until_ready((hidden_states, lm_loss, lm_logits, cls_loss, cls_logits))

    # sklearn-style metrics on host (glue, not hot path)
    y_true = np.asarray(jnp.argmax(departmentlabels, axis=1))
    y_pred = np.asarray(jnp.argmax(cls_logits, axis=1))
    accuracy = float(np.mean(y_true == y_pred))
    f1_micro = accuracy  # micro F1 == accuracy for single-label multiclass
    prec_macro, rec_macro, f1_macro = _macro_prf(y_true, y_pred)

    outputs = (hidden_states, (lm_loss, lm_logits), cls_loss,
               accuracy, f1_micro, f1_macro, prec_macro, rec_macro)

    assert hidden_states.shape == (B, S_ENC, H)
    assert lm_logits.shape == (B, S_DEC, V_DEC)
    assert cls_logits.shape == (B, NUM_LABELS)
    assert np.isfinite(float(lm_loss)) and np.isfinite(float(cls_loss))
    print("KERNEL_OK")
</pallas_src>

<mosaic_0001>
module attributes {stable_mosaic.version = 11 : i64} {
  func.func @_enc_layer_kernel(%arg0: memref<2x8x32xf32, #tpu.memory_space<vmem>>, %arg1: memref<2x8x8xf32, #tpu.memory_space<vmem>>, %arg2: memref<1x32xf32, #tpu.memory_space<vmem>>, %arg3: memref<1x32xf32, #tpu.memory_space<vmem>>, %arg4: memref<32x96xbf16, #tpu.memory_space<vmem>>, %arg5: memref<1x96xf32, #tpu.memory_space<vmem>>, %arg6: memref<32x32xbf16, #tpu.memory_space<vmem>>, %arg7: memref<1x32xf32, #tpu.memory_space<vmem>>, %arg8: memref<1x32xf32, #tpu.memory_space<vmem>>, %arg9: memref<1x32xf32, #tpu.memory_space<vmem>>, %arg10: memref<32x64xbf16, #tpu.memory_space<vmem>>, %arg11: memref<1x64xf32, #tpu.memory_space<vmem>>, %arg12: memref<64x32xbf16, #tpu.memory_space<vmem>>, %arg13: memref<1x32xf32, #tpu.memory_space<vmem>>, %arg14: memref<1x32xf32, #tpu.memory_space<vmem>>, %arg15: memref<1x32xf32, #tpu.memory_space<vmem>>, %arg16: memref<2x8x32xf32, #tpu.memory_space<vmem>>) attributes {dimension_semantics = [], scalar_prefetch = 0 : i64, scratch_operands = 0 : i64, tpu.core_type = #tpu.core_type<tc>} {
    %c0 = arith.constant 0 : index
    %c0_0 = arith.constant 0 : index
    %c0_1 = arith.constant 0 : index
    %0 = vector.load %arg0[%c0, %c0_0, %c0_1] : memref<2x8x32xf32, #tpu.memory_space<vmem>>, vector<2x8x32xf32>
    %1 = vector.shape_cast %0 : vector<2x8x32xf32> to vector<16x32xf32>
    %c0_2 = arith.constant 0 : index
    %c0_3 = arith.constant 0 : index
    %2 = vector.load %arg2[%c0_2, %c0_3] : memref<1x32xf32, #tpu.memory_space<vmem>>, vector<1x32xf32>
    %c0_4 = arith.constant 0 : index
    %c0_5 = arith.constant 0 : index
    %3 = vector.load %arg3[%c0_4, %c0_5] : memref<1x32xf32, #tpu.memory_space<vmem>>, vector<1x32xf32>
    %cst = arith.constant dense<0.000000e+00> : vector<16xf32>
    %4 = vector.multi_reduction <add>, %1, %cst [1] : vector<16x32xf32> to vector<16xf32>
    %5 = vector.shape_cast %4 : vector<16xf32> to vector<16x1xf32>
    %cst_6 = arith.constant 3.200000e+01 : f32
    %6 = vector.broadcast %cst_6 : f32 to vector<16x1xf32>
    %7 = arith.divf %5, %6 : vector<16x1xf32>
    %8 = vector.broadcast %7 : vector<16x1xf32> to vector<16x32xf32>
    %9 = arith.subf %1, %8 : vector<16x32xf32>
    %10 = arith.mulf %9, %9 : vector<16x32xf32>
    %cst_7 = arith.constant dense<0.000000e+00> : vector<16xf32>
    %11 = vector.multi_reduction <add>, %10, %cst_7 [1] : vector<16x32xf32> to vector<16xf32>
    %12 = vector.shape_cast %11 : vector<16xf32> to vector<16x1xf32>
    %cst_8 = arith.constant 3.200000e+01 : f32
    %13 = vector.broadcast %cst_8 : f32 to vector<16x1xf32>
    %14 = arith.divf %12, %13 : vector<16x1xf32>
    %cst_9 = arith.constant 9.99999974E-6 : f32
    %15 = vector.broadcast %cst_9 : f32 to vector<16x1xf32>
    %16 = arith.addf %14, %15 : vector<16x1xf32>
    %17 = math.rsqrt %16 : vector<16x1xf32>
    %18 = vector.broadcast %17 : vector<16x1xf32> to vector<16x32xf32>
    %19 = arith.mulf %9, %18 : vector<16x32xf32>
    %20 = vector.broadcast %2 : vector<1x32xf32> to vector<16x32xf32>
    %21 = arith.mulf %19, %20 : vector<16x32xf32>
    %22 = vector.broadcast %3 : vector<1x32xf32> to vector<16x32xf32>
    %23 = arith.addf %21, %22 : vector<16x32xf32>
    %c0_10 = arith.constant 0 : index
    %c0_11 = arith.constant 0 : index
    %c0_12 = arith.constant 0 : index
    %24 = vector.load %arg1[%c0_10, %c0_11, %c0_12] : memref<2x8x8xf32, #tpu.memory_space<vmem>>, vector<2x8x8xf32>
    %c0_13 = arith.constant 0 : index
    %c0_14 = arith.constant 0 : index
    %25 = vector.load %arg5[%c0_13, %c0_14] : memref<1x96xf32, #tpu.memory_space<vmem>>, vector<1x96xf32>
    %26 = arith.truncf %23 : vector<16x32xf32> to vector<16x32xbf16>
    %c0_15 = arith.constant 0 : index
    %c0_16 = arith.constant 0 : index
    %27 = vector.load %arg4[%c0_15, %c0_16] : memref<32x96xbf16, #tpu.memory_space<vmem>>, vector<32x96xbf16>
    %cst_17 = arith.constant dense<0.000000e+00> : vector<16x96xf32>
    %28 = tpu.matmul %26, %27, %cst_17 {dimension_numbers = #tpu.dot_dimension_numbers<[1], [0], [0], [1], [0, 0, 1, 1], [], []>} : vector<16x32xbf16>, vector<32x96xbf16>, vector<16x96xf32> -> vector<16x96xf32>
    %29 = vector.broadcast %25 : vector<1x96xf32> to vector<16x96xf32>
    %30 = arith.addf %28, %29 : vector<16x96xf32>
    %31 = vector.extract_strided_slice %30 {offsets = [0, 0], sizes = [16, 32], strides = [1, 1]} : vector<16x96xf32> to vector<16x32xf32>
    %32 = vector.extract_strided_slice %30 {offsets = [0, 32], sizes = [16, 32], strides = [1, 1]} : vector<16x96xf32> to vector<16x32xf32>
    %33 = vector.extract_strided_slice %30 {offsets = [0, 64], sizes = [16, 32], strides = [1, 1]} : vector<16x96xf32> to vector<16x32xf32>
    %c0_18 = arith.constant 0 : index
    %c0_19 = arith.constant 0 : index
    %34 = vector.load %arg7[%c0_18, %c0_19] : memref<1x32xf32, #tpu.memory_space<vmem>>, vector<1x32xf32>
    %35 = vector.shape_cast %34 : vector<1x32xf32> to vector<1x32xf32>
    %36 = vector.broadcast %35 : vector<1x32xf32> to vector<16x32xf32>
    %37 = vector.extract_strided_slice %31 {offsets = [0, 0], sizes = [16, 16], strides = [1, 1]} : vector<16x32xf32> to vector<16x16xf32>
    %38 = vector.shape_cast %37 : vector<16x16xf32> to vector<2x8x16xf32>
    %39 = arith.truncf %38 : vector<2x8x16xf32> to vector<2x8x16xbf16>
    %40 = vector.extract_strided_slice %32 {offsets = [0, 0], sizes = [16, 16], strides = [1, 1]} : vector<16x32xf32> to vector<16x16xf32>
    %41 = vector.shape_cast %40 : vector<16x16xf32> to vector<2x8x16xf32>
    %42 = arith.truncf %41 : vector<2x8x16xf32> to vector<2x8x16xbf16>
    %43 = vector.extract_strided_slice %33 {offsets = [0, 0], sizes = [16, 16], strides = [1, 1]} : vector<16x32xf32> to vector<16x16xf32>
    %44 = vector.shape_cast %43 : vector<16x16xf32> to vector<2x8x16xf32>
    %45 = arith.truncf %44 : vector<2x8x16xf32> to vector<2x8x16xbf16>
    "tpu.trace_start"() <{level = 10 : i32, message = "bqd,bkd->bqk"}> : () -> ()
    %cst_20 = arith.constant dense<0.000000e+00> : vector<2x8x8xf32>
    %46 = tpu.matmul %39, %42, %cst_20 {dimension_numbers = #tpu.dot_dimension_numbers<[2], [2], [1], [1], [0, 0, 0, 1, 1, 1], [0], [0]>} : vector<2x8x16xbf16>, vector<2x8x16xbf16>, vector<2x8x8xf32> -> vector<2x8x8xf32>
    "tpu.trace_stop"() : () -> ()
    %cst_21 = arith.constant 2.500000e-01 : f32
    %47 = vector.broadcast %cst_21 : f32 to vector<2x8x8xf32>
    %48 = arith.mulf %46, %47 : vector<2x8x8xf32>
    %49 = arith.addf %48, %24 : vector<2x8x8xf32>
    %cst_22 = arith.constant dense<0xFF800000> : vector<2x8xf32>
    %50 = vector.multi_reduction <maximumf>, %49, %cst_22 [2] : vector<2x8x8xf32> to vector<2x8xf32>
    %51 = vector.shape_cast %50 : vector<2x8xf32> to vector<2x8x1xf32>
    %52 = vector.broadcast %51 : vector<2x8x1xf32> to vector<2x8x8xf32>
    %53 = arith.subf %49, %52 : vector<2x8x8xf32>
    %54 = math.exp %53 : vector<2x8x8xf32>
    %cst_23 = arith.constant dense<0.000000e+00> : vector<2x8xf32>
    %55 = vector.multi_reduction <add>, %54, %cst_23 [2] : vector<2x8x8xf32> to vector<2x8xf32>
    %56 = vector.shape_cast %55 : vector<2x8xf32> to vector<2x8x1xf32>
    %57 = tpu.reciprocal %56 {approx = true} : vector<2x8x1xf32> -> vector<2x8x1xf32>
    %58 = vector.broadcast %57 : vector<2x8x1xf32> to vector<2x8x8xf32>
    %59 = arith.mulf %54, %58 : vector<2x8x8xf32>
    %60 = arith.truncf %59 : vector<2x8x8xf32> to vector<2x8x8xbf16>
    "tpu.trace_start"() <{level = 10 : i32, message = "bqk,bkd->bqd"}> : () -> ()
    %cst_24 = arith.constant dense<0.000000e+00> : vector<2x8x16xf32>
    %61 = tpu.matmul %60, %45, %cst_24 {dimension_numbers = #tpu.dot_dimension_numbers<[2], [1], [1], [2], [0, 0, 0, 1, 1, 2], [0], [0]>} : vector<2x8x8xbf16>, vector<2x8x16xbf16>, vector<2x8x16xf32> -> vector<2x8x16xf32>
    "tpu.trace_stop"() : () -> ()
    %62 = vector.shape_cast %61 : vector<2x8x16xf32> to vector<16x16xf32>
    %63 = arith.truncf %62 : vector<16x16xf32> to vector<16x16xbf16>
    %c0_25 = arith.constant 0 : index
    %c0_26 = arith.constant 0 : index
    %64 = vector.load %arg6[%c0_25, %c0_26] : memref<32x32xbf16, #tpu.memory_space<vmem>>, vector<16x32xbf16>
    %cst_27 = arith.constant dense<0.000000e+00> : vector<16x32xf32>
    %65 = tpu.matmul %63, %64, %cst_27 {dimension_numbers = #tpu.dot_dimension_numbers<[1], [0], [0], [1], [0, 0, 1, 1], [], []>} : vector<16x16xbf16>, vector<16x32xbf16>, vector<16x32xf32> -> vector<16x32xf32>
    %66 = arith.addf %36, %65 : vector<16x32xf32>
    %67 = vector.extract_strided_slice %31 {offsets = [0, 16], sizes = [16, 16], strides = [1, 1]} : vector<16x32xf32> to vector<16x16xf32>
    %68 = vector.shape_cast %67 : vector<16x16xf32> to vector<2x8x16xf32>
    %69 = arith.truncf %68 : vector<2x8x16xf32> to vector<2x8x16xbf16>
    %70 = vector.extract_strided_slice %32 {offsets = [0, 16], sizes = [16, 16], strides = [1, 1]} : vector<16x32xf32> to vector<16x16xf32>
    %71 = vector.shape_cast %70 : vector<16x16xf32> to vector<2x8x16xf32>
    %72 = arith.truncf %71 : vector<2x8x16xf32> to vector<2x8x16xbf16>
    %73 = vector.extract_strided_slice %33 {offsets = [0, 16], sizes = [16, 16], strides = [1, 1]} : vector<16x32xf32> to vector<16x16xf32>
    %74 = vector.shape_cast %73 : vector<16x16xf32> to vector<2x8x16xf32>
    %75 = arith.truncf %74 : vector<2x8x16xf32> to vector<2x8x16xbf16>
    "tpu.trace_start"() <{level = 10 : i32, message = "bqd,bkd->bqk"}> : () -> ()
    %cst_28 = arith.constant dense<0.000000e+00> : vector<2x8x8xf32>
    %76 = tpu.matmul %69, %72, %cst_28 {dimension_numbers = #tpu.dot_dimension_numbers<[2], [2], [1], [1], [0, 0, 0, 1, 1, 1], [0], [0]>} : vector<2x8x16xbf16>, vector<2x8x16xbf16>, vector<2x8x8xf32> -> vector<2x8x8xf32>
    "tpu.trace_stop"() : () -> ()
    %cst_29 = arith.constant 2.500000e-01 : f32
    %77 = vector.broadcast %cst_29 : f32 to vector<2x8x8xf32>
    %78 = arith.mulf %76, %77 : vector<2x8x8xf32>
    %79 = arith.addf %78, %24 : vector<2x8x8xf32>
    %cst_30 = arith.constant dense<0xFF800000> : vector<2x8xf32>
    %80 = vector.multi_reduction <maximumf>, %79, %cst_30 [2] : vector<2x8x8xf32> to vector<2x8xf32>
    %81 = vector.shape_cast %80 : vector<2x8xf32> to vector<2x8x1xf32>
    %82 = vector.broadcast %81 : vector<2x8x1xf32> to vector<2x8x8xf32>
    %83 = arith.subf %79, %82 : vector<2x8x8xf32>
    %84 = math.exp %83 : vector<2x8x8xf32>
    %cst_31 = arith.constant dense<0.000000e+00> : vector<2x8xf32>
    %85 = vector.multi_reduction <add>, %84, %cst_31 [2] : vector<2x8x8xf32> to vector<2x8xf32>
    %86 = vector.shape_cast %85 : vector<2x8xf32> to vector<2x8x1xf32>
    %87 = tpu.reciprocal %86 {approx = true} : vector<2x8x1xf32> -> vector<2x8x1xf32>
    %88 = vector.broadcast %87 : vector<2x8x1xf32> to vector<2x8x8xf32>
    %89 = arith.mulf %84, %88 : vector<2x8x8xf32>
    %90 = arith.truncf %89 : vector<2x8x8xf32> to vector<2x8x8xbf16>
    "tpu.trace_start"() <{level = 10 : i32, message = "bqk,bkd->bqd"}> : () -> ()
    %cst_32 = arith.constant dense<0.000000e+00> : vector<2x8x16xf32>
    %91 = tpu.matmul %90, %75, %cst_32 {dimension_numbers = #tpu.dot_dimension_numbers<[2], [1], [1], [2], [0, 0, 0, 1, 1, 2], [0], [0]>} : vector<2x8x8xbf16>, vector<2x8x16xbf16>, vector<2x8x16xf32> -> vector<2x8x16xf32>
    "tpu.trace_stop"() : () -> ()
    %92 = vector.shape_cast %91 : vector<2x8x16xf32> to vector<16x16xf32>
    %93 = arith.truncf %92 : vector<16x16xf32> to vector<16x16xbf16>
    %c16 = arith.constant 16 : index
    %c0_33 = arith.constant 0 : index
    %94 = vector.load %arg6[%c16, %c0_33] : memref<32x32xbf16, #tpu.memory_space<vmem>>, vector<16x32xbf16>
    %cst_34 = arith.constant dense<0.000000e+00> : vector<16x32xf32>
    %95 = tpu.matmul %93, %94, %cst_34 {dimension_numbers = #tpu.dot_dimension_numbers<[1], [0], [0], [1], [0, 0, 1, 1], [], []>} : vector<16x16xbf16>, vector<16x32xbf16>, vector<16x32xf32> -> vector<16x32xf32>
    %96 = arith.addf %66, %95 : vector<16x32xf32>
    %97 = arith.addf %23, %96 : vector<16x32xf32>
    %c0_35 = arith.constant 0 : index
    %c0_36 = arith.constant 0 : index
    %98 = vector.load %arg8[%c0_35, %c0_36] : memref<1x32xf32, #tpu.memory_space<vmem>>, vector<1x32xf32>
    %c0_37 = arith.constant 0 : index
    %c0_38 = arith.constant 0 : index
    %99 = vector.load %arg9[%c0_37, %c0_38] : memref<1x32xf32, #tpu.memory_space<vmem>>, vector<1x32xf32>
    %cst_39 = arith.constant dense<0.000000e+00> : vector<16xf32>
    %100 = vector.multi_reduction <add>, %97, %cst_39 [1] : vector<16x32xf32> to vector<16xf32>
    %101 = vector.shape_cast %100 : vector<16xf32> to vector<16x1xf32>
    %cst_40 = arith.constant 3.200000e+01 : f32
    %102 = vector.broadcast %cst_40 : f32 to vector<16x1xf32>
    %103 = arith.divf %101, %102 : vector<16x1xf32>
    %104 = vector.broadcast %103 : vector<16x1xf32> to vector<16x32xf32>
    %105 = arith.subf %97, %104 : vector<16x32xf32>
    %106 = arith.mulf %105, %105 : vector<16x32xf32>
    %cst_41 = arith.constant dense<0.000000e+00> : vector<16xf32>
    %107 = vector.multi_reduction <add>, %106, %cst_41 [1] : vector<16x32xf32> to vector<16xf32>
    %108 = vector.shape_cast %107 : vector<16xf32> to vector<16x1xf32>
    %cst_42 = arith.constant 3.200000e+01 : f32
    %109 = vector.broadcast %cst_42 : f32 to vector<16x1xf32>
    %110 = arith.divf %108, %109 : vector<16x1xf32>
    %cst_43 = arith.constant 9.99999974E-6 : f32
    %111 = vector.broadcast %cst_43 : f32 to vector<16x1xf32>
    %112 = arith.addf %110, %111 : vector<16x1xf32>
    %113 = math.rsqrt %112 : vector<16x1xf32>
    %114 = vector.broadcast %113 : vector<16x1xf32> to vector<16x32xf32>
    %115 = arith.mulf %105, %114 : vector<16x32xf32>
    %116 = vector.broadcast %98 : vector<1x32xf32> to vector<16x32xf32>
    %117 = arith.mulf %115, %116 : vector<16x32xf32>
    %118 = vector.broadcast %99 : vector<1x32xf32> to vector<16x32xf32>
    %119 = arith.addf %117, %118 : vector<16x32xf32>
    %c0_44 = arith.constant 0 : index
    %c0_45 = arith.constant 0 : index
    %120 = vector.load %arg11[%c0_44, %c0_45] : memref<1x64xf32, #tpu.memory_space<vmem>>, vector<1x64xf32>
    %c0_46 = arith.constant 0 : index
    %c0_47 = arith.constant 0 : index
    %121 = vector.load %arg13[%c0_46, %c0_47] : memref<1x32xf32, #tpu.memory_space<vmem>>, vector<1x32xf32>
    %122 = arith.truncf %119 : vector<16x32xf32> to vector<16x32xbf16>
    %c0_48 = arith.constant 0 : index
    %c0_49 = arith.constant 0 : index
    %123 = vector.load %arg10[%c0_48, %c0_49] : memref<32x64xbf16, #tpu.memory_space<vmem>>, vector<32x64xbf16>
    %cst_50 = arith.constant dense<0.000000e+00> : vector<16x64xf32>
    %124 = tpu.matmul %122, %123, %cst_50 {dimension_numbers = #tpu.dot_dimension_numbers<[1], [0], [0], [1], [0, 0, 1, 1], [], []>} : vector<16x32xbf16>, vector<32x64xbf16>, vector<16x64xf32> -> vector<16x64xf32>
    %125 = vector.broadcast %120 : vector<1x64xf32> to vector<16x64xf32>
    %126 = arith.addf %124, %125 : vector<16x64xf32>
    %127 = arith.mulf %126, %126 : vector<16x64xf32>
    %128 = arith.mulf %126, %127 : vector<16x64xf32>
    %cst_51 = arith.constant 4.471500e-02 : f32
    %129 = vector.broadcast %cst_51 : f32 to vector<16x64xf32>
    %130 = arith.mulf %129, %128 : vector<16x64xf32>
    %131 = arith.addf %126, %130 : vector<16x64xf32>
    %cst_52 = arith.constant 0.797884583 : f32
    %132 = vector.broadcast %cst_52 : f32 to vector<16x64xf32>
    %133 = arith.mulf %132, %131 : vector<16x64xf32>
    %134 = math.tanh %133 : vector<16x64xf32>
    %cst_53 = arith.constant 1.000000e+00 : f32
    %135 = vector.broadcast %cst_53 : f32 to vector<16x64xf32>
    %136 = arith.addf %135, %134 : vector<16x64xf32>
    %cst_54 = arith.constant 5.000000e-01 : f32
    %137 = vector.broadcast %cst_54 : f32 to vector<16x64xf32>
    %138 = arith.mulf %137, %136 : vector<16x64xf32>
    %139 = arith.mulf %126, %138 : vector<16x64xf32>
    %140 = arith.truncf %139 : vector<16x64xf32> to vector<16x64xbf16>
    %c0_55 = arith.constant 0 : index
    %c0_56 = arith.constant 0 : index
    %141 = vector.load %arg12[%c0_55, %c0_56] : memref<64x32xbf16, #tpu.memory_space<vmem>>, vector<64x32xbf16>
    %cst_57 = arith.constant dense<0.000000e+00> : vector<16x32xf32>
    %142 = tpu.matmul %140, %141, %cst_57 {dimension_numbers = #tpu.dot_dimension_numbers<[1], [0], [0], [1], [0, 0, 1, 1], [], []>} : vector<16x64xbf16>, vector<64x32xbf16>, vector<16x32xf32> -> vector<16x32xf32>
    %143 = vector.broadcast %121 : vector<1x32xf32> to vector<16x32xf32>
    %144 = arith.addf %142, %143 : vector<16x32xf32>
    %145 = arith.addf %119, %144 : vector<16x32xf32>
    %c0_58 = arith.constant 0 : index
    %c0_59 = arith.constant 0 : index
    %146 = vector.load %arg14[%c0_58, %c0_59] : memref<1x32xf32, #tpu.memory_space<vmem>>, vector<1x32xf32>
    %c0_60 = arith.constant 0 : index
    %c0_61 = arith.constant 0 : index
    %147 = vector.load %arg15[%c0_60, %c0_61] : memref<1x32xf32, #tpu.memory_space<vmem>>, vector<1x32xf32>
    %cst_62 = arith.constant dense<0.000000e+00> : vector<16xf32>
    %148 = vector.multi_reduction <add>, %145, %cst_62 [1] : vector<16x32xf32> to vector<16xf32>
    %149 = vector.shape_cast %148 : vector<16xf32> to vector<16x1xf32>
    %cst_63 = arith.constant 3.200000e+01 : f32
    %150 = vector.broadcast %cst_63 : f32 to vector<16x1xf32>
    %151 = arith.divf %149, %150 : vector<16x1xf32>
    %152 = vector.broadcast %151 : vector<16x1xf32> to vector<16x32xf32>
    %153 = arith.subf %145, %152 : vector<16x32xf32>
    %154 = arith.mulf %153, %153 : vector<16x32xf32>
    %cst_64 = arith.constant dense<0.000000e+00> : vector<16xf32>
    %155 = vector.multi_reduction <add>, %154, %cst_64 [1] : vector<16x32xf32> to vector<16xf32>
    %156 = vector.shape_cast %155 : vector<16xf32> to vector<16x1xf32>
    %cst_65 = arith.constant 3.200000e+01 : f32
    %157 = vector.broadcast %cst_65 : f32 to vector<16x1xf32>
    %158 = arith.divf %156, %157 : vector<16x1xf32>
    %cst_66 = arith.constant 9.99999974E-6 : f32
    %159 = vector.broadcast %cst_66 : f32 to vector<16x1xf32>
    %160 = arith.addf %158, %159 : vector<16x1xf32>
    %161 = math.rsqrt %160 : vector<16x1xf32>
    %162 = vector.broadcast %161 : vector<16x1xf32> to vector<16x32xf32>
    %163 = arith.mulf %153, %162 : vector<16x32xf32>
    %164 = vector.broadcast %146 : vector<1x32xf32> to vector<16x32xf32>
    %165 = arith.mulf %163, %164 : vector<16x32xf32>
    %166 = vector.broadcast %147 : vector<1x32xf32> to vector<16x32xf32>
    %167 = arith.addf %165, %166 : vector<16x32xf32>
    %168 = vector.shape_cast %167 : vector<16x32xf32> to vector<2x8x32xf32>
    %c0_67 = arith.constant 0 : index
    %c0_68 = arith.constant 0 : index
    %c0_69 = arith.constant 0 : index
    %169 = vector.load %arg16[%c0_67, %c0_68, %c0_69] : memref<2x8x32xf32, #tpu.memory_space<vmem>>, vector<2x8x32xf32>
    tpu.vector_store %arg16[%c0_67, %c0_68, %c0_69], %168 {strides = array<i32>} : memref<2x8x32xf32, #tpu.memory_space<vmem>>, vector<2x8x32xf32>,
    return
  }
}

module attributes {stable_mosaic.version = 11 : i64} {
  func.func @_head_ce_kernel(%arg0: memref<16x32xf32, #tpu.memory_space<vmem>>, %arg1: memref<1x32xf32, #tpu.memory_space<vmem>>, %arg2: memref<1x32xf32, #tpu.memory_space<vmem>>, %arg3: memref<32x128xbf16, #tpu.memory_space<vmem>>, %arg4: memref<1x128xf32, #tpu.memory_space<vmem>>, %arg5: memref<16x128xf32, #tpu.memory_space<vmem>>, %arg6: memref<16x128xf32, #tpu.memory_space<vmem>>, %arg7: memref<1x1xf32, #tpu.memory_space<vmem>>) attributes {dimension_semantics = [], scalar_prefetch = 0 : i64, scratch_operands = 0 : i64, tpu.core_type = #tpu.core_type<tc>} {
    %c0 = arith.constant 0 : index
    %c0_0 = arith.constant 0 : index
    %0 = vector.load %arg0[%c0, %c0_0] : memref<16x32xf32, #tpu.memory_space<vmem>>, vector<16x32xf32>
    %c0_1 = arith.constant 0 : index
    %c0_2 = arith.constant 0 : index
    %1 = vector.load %arg1[%c0_1, %c0_2] : memref<1x32xf32, #tpu.memory_space<vmem>>, vector<1x32xf32>
    %c0_3 = arith.constant 0 : index
    %c0_4 = arith.constant 0 : index
    %2 = vector.load %arg2[%c0_3, %c0_4] : memref<1x32xf32, #tpu.memory_space<vmem>>, vector<1x32xf32>
    %cst = arith.constant dense<0.000000e+00> : vector<16xf32>
    %3 = vector.multi_reduction <add>, %0, %cst [1] : vector<16x32xf32> to vector<16xf32>
    %4 = vector.shape_cast %3 : vector<16xf32> to vector<16x1xf32>
    %cst_5 = arith.constant 3.200000e+01 : f32
    %5 = vector.broadcast %cst_5 : f32 to vector<16x1xf32>
    %6 = arith.divf %4, %5 : vector<16x1xf32>
    %7 = vector.broadcast %6 : vector<16x1xf32> to vector<16x32xf32>
    %8 = arith.subf %0, %7 : vector<16x32xf32>
    %9 = arith.mulf %8, %8 : vector<16x32xf32>
    %cst_6 = arith.constant dense<0.000000e+00> : vector<16xf32>
    %10 = vector.multi_reduction <add>, %9, %cst_6 [1] : vector<16x32xf32> to vector<16xf32>
    %11 = vector.shape_cast %10 : vector<16xf32> to vector<16x1xf32>
    %cst_7 = arith.constant 3.200000e+01 : f32
    %12 = vector.broadcast %cst_7 : f32 to vector<16x1xf32>
    %13 = arith.divf %11, %12 : vector<16x1xf32>
    %cst_8 = arith.constant 9.99999974E-6 : f32
    %14 = vector.broadcast %cst_8 : f32 to vector<16x1xf32>
    %15 = arith.addf %13, %14 : vector<16x1xf32>
    %16 = math.rsqrt %15 : vector<16x1xf32>
    %17 = vector.broadcast %16 : vector<16x1xf32> to vector<16x32xf32>
    %18 = arith.mulf %8, %17 : vector<16x32xf32>
    %19 = vector.broadcast %1 : vector<1x32xf32> to vector<16x32xf32>
    %20 = arith.mulf %18, %19 : vector<16x32xf32>
    %21 = vector.broadcast %2 : vector<1x32xf32> to vector<16x32xf32>
    %22 = arith.addf %20, %21 : vector<16x32xf32>
    %c0_9 = arith.constant 0 : index
    %c0_10 = arith.constant 0 : index
    %23 = vector.load %arg4[%c0_9, %c0_10] : memref<1x128xf32, #tpu.memory_space<vmem>>, vector<1x128xf32>
    %24 = arith.truncf %22 : vector<16x32xf32> to vector<16x32xbf16>
    %c0_11 = arith.constant 0 : index
    %c0_12 = arith.constant 0 : index
    %25 = vector.load %arg3[%c0_11, %c0_12] : memref<32x128xbf16, #tpu.memory_space<vmem>>, vector<32x128xbf16>
    %cst_13 = arith.constant dense<0.000000e+00> : vector<16x128xf32>
    %26 = tpu.matmul %24, %25, %cst_13 {dimension_numbers = #tpu.dot_dimension_numbers<[1], [0], [0], [1], [0, 0, 1, 1], [], []>} : vector<16x32xbf16>, vector<32x128xbf16>, vector<16x128xf32> -> vector<16x128xf32>
    %27 = vector.broadcast %23 : vector<1x128xf32> to vector<16x128xf32>
    %28 = arith.addf %26, %27 : vector<16x128xf32>
    %c0_14 = arith.constant 0 : index
    %c0_15 = arith.constant 0 : index
    %29 = vector.load %arg6[%c0_14, %c0_15] : memref<16x128xf32, #tpu.memory_space<vmem>>, vector<16x128xf32>
    tpu.vector_store %arg6[%c0_14, %c0_15], %28 {strides = array<i32>} : memref<16x128xf32, #tpu.memory_space<vmem>>, vector<16x128xf32>,
    %cst_16 = arith.constant dense<0xFF800000> : vector<16xf32>
    %30 = vector.multi_reduction <maximumf>, %28, %cst_16 [1] : vector<16x128xf32> to vector<16xf32>
    %31 = vector.shape_cast %30 : vector<16xf32> to vector<16x1xf32>
    %32 = vector.broadcast %31 : vector<16x1xf32> to vector<16x128xf32>
    %33 = arith.subf %28, %32 : vector<16x128xf32>
    %34 = math.exp %33 : vector<16x128xf32>
    %cst_17 = arith.constant dense<0.000000e+00> : vector<16xf32>
    %35 = vector.multi_reduction <add>, %34, %cst_17 [1] : vector<16x128xf32> to vector<16xf32>
    %36 = vector.shape_cast %35 : vector<16xf32> to vector<16x1xf32>
    %37 = math.log %36 : vector<16x1xf32>
    %38 = vector.broadcast %37 : vector<16x1xf32> to vector<16x128xf32>
    %39 = arith.subf %33, %38 : vector<16x128xf32>
    %c0_18 = arith.constant 0 : index
    %c0_19 = arith.constant 0 : index
    %40 = vector.load %arg5[%c0_18, %c0_19] : memref<16x128xf32, #tpu.memory_space<vmem>>, vector<16x128xf32>
    %41 = arith.mulf %40, %39 : vector<16x128xf32>
    %cst_20 = arith.constant dense<0.000000e+00> : vector<16xf32>
    %42 = vector.multi_reduction <add>, %41, %cst_20 [1] : vector<16x128xf32> to vector<16xf32>
    %43 = vector.shape_cast %42 : vector<16xf32> to vector<16x1xf32>
    %cst_21 = arith.constant 0.000000e+00 : f32
    %44 = vector.broadcast %cst_21 : f32 to vector<16x1xf32>
    %45 = arith.subf %44, %43 : vector<16x1xf32>
    %cst_22 = arith.constant dense<0.000000e+00> : vector<1xf32>
    %46 = vector.multi_reduction <add>, %45, %cst_22 [0] : vector<16x1xf32> to vector<1xf32>
    %47 = vector.shape_cast %46 : vector<1xf32> to vector<1x1xf32>
    %cst_23 = arith.constant 0.0714285746 : f32
    %48 = vector.broadcast %cst_23 : f32 to vector<1x1xf32>
    %49 = arith.mulf %47, %48 : vector<1x1xf32>
    %c0_24 = arith.constant 0 : index
    %c0_25 = arith.constant 0 : index
    %50 = vector.load %arg7[%c0_24, %c0_25] : memref<1x1xf32, #tpu.memory_space<vmem>>, vector<1x1xf32>
    tpu.vector_store %arg7[%c0_24, %c0_25], %49 {strides = array<i32>} : memref<1x1xf32, #tpu.memory_space<vmem>>, vector<1x1xf32>,
    return
  }
}

module attributes {stable_mosaic.version = 11 : i64} {
  func.func @_dec_layer_kernel(%arg0: memref<2x8x32xf32, #tpu.memory_space<vmem>>, %arg1: memref<2x8x32xf32, #tpu.memory_space<vmem>>, %arg2: memref<2x8x8xf32, #tpu.memory_space<vmem>>, %arg3: memref<2x8x8xf32, #tpu.memory_space<vmem>>, %arg4: memref<1x32xf32, #tpu.memory_space<vmem>>, %arg5: memref<1x32xf32, #tpu.memory_space<vmem>>, %arg6: memref<32x96xbf16, #tpu.memory_space<vmem>>, %arg7: memref<1x96xf32, #tpu.memory_space<vmem>>, %arg8: memref<32x32xbf16, #tpu.memory_space<vmem>>, %arg9: memref<1x32xf32, #tpu.memory_space<vmem>>, %arg10: memref<1x32xf32, #tpu.memory_space<vmem>>, %arg11: memref<1x32xf32, #tpu.memory_space<vmem>>, %arg12: memref<32x32xbf16, #tpu.memory_space<vmem>>, %arg13: memref<1x32xf32, #tpu.memory_space<vmem>>, %arg14: memref<32x64xbf16, #tpu.memory_space<vmem>>, %arg15: memref<1x64xf32, #tpu.memory_space<vmem>>, %arg16: memref<32x32xbf16, #tpu.memory_space<vmem>>, %arg17: memref<1x32xf32, #tpu.memory_space<vmem>>, %arg18: memref<1x32xf32, #tpu.memory_space<vmem>>, %arg19: memref<1x32xf32, #tpu.memory_space<vmem>>, %arg20: memref<32x64xbf16, #tpu.memory_space<vmem>>, %arg21: memref<1x64xf32, #tpu.memory_space<vmem>>, %arg22: memref<64x32xbf16, #tpu.memory_space<vmem>>, %arg23: memref<1x32xf32, #tpu.memory_space<vmem>>, %arg24: memref<2x8x32xf32, #tpu.memory_space<vmem>>) attributes {dimension_semantics = [], scalar_prefetch = 0 : i64, scratch_operands = 0 : i64, tpu.core_type = #tpu.core_type<tc>} {
    %c0 = arith.constant 0 : index
    %c0_0 = arith.constant 0 : index
    %c0_1 = arith.constant 0 : index
    %0 = vector.load %arg0[%c0, %c0_0, %c0_1] : memref<2x8x32xf32, #tpu.memory_space<vmem>>, vector<2x8x32xf32>
    %1 = vector.shape_cast %0 : vector<2x8x32xf32> to vector<16x32xf32>
    %c0_2 = arith.constant 0 : index
    %c0_3 = arith.constant 0 : index
    %c0_4 = arith.constant 0 : index
    %2 = vector.load %arg1[%c0_2, %c0_3, %c0_4] : memref<2x8x32xf32, #tpu.memory_space<vmem>>, vector<2x8x32xf32>
    %3 = vector.shape_cast %2 : vector<2x8x32xf32> to vector<16x32xf32>
    %c0_5 = arith.constant 0 : index
    %c0_6 = arith.constant 0 : index
    %4 = vector.load %arg4[%c0_5, %c0_6] : memref<1x32xf32, #tpu.memory_space<vmem>>, vector<1x32xf32>
    %c0_7 = arith.constant 0 : index
    %c0_8 = arith.constant 0 : index
    %5 = vector.load %arg5[%c0_7, %c0_8] : memref<1x32xf32, #tpu.memory_space<vmem>>, vector<1x32xf32>
    %cst = arith.constant dense<0.000000e+00> : vector<16xf32>
    %6 = vector.multi_reduction <add>, %1, %cst [1] : vector<16x32xf32> to vector<16xf32>
    %7 = vector.shape_cast %6 : vector<16xf32> to vector<16x1xf32>
    %cst_9 = arith.constant 3.200000e+01 : f32
    %8 = vector.broadcast %cst_9 : f32 to vector<16x1xf32>
    %9 = arith.divf %7, %8 : vector<16x1xf32>
    %10 = vector.broadcast %9 : vector<16x1xf32> to vector<16x32xf32>
    %11 = arith.subf %1, %10 : vector<16x32xf32>
    %12 = arith.mulf %11, %11 : vector<16x32xf32>
    %cst_10 = arith.constant dense<0.000000e+00> : vector<16xf32>
    %13 = vector.multi_reduction <add>, %12, %cst_10 [1] : vector<16x32xf32> to vector<16xf32>
    %14 = vector.shape_cast %13 : vector<16xf32> to vector<16x1xf32>
    %cst_11 = arith.constant 3.200000e+01 : f32
    %15 = vector.broadcast %cst_11 : f32 to vector<16x1xf32>
    %16 = arith.divf %14, %15 : vector<16x1xf32>
    %cst_12 = arith.constant 9.99999974E-6 : f32
    %17 = vector.broadcast %cst_12 : f32 to vector<16x1xf32>
    %18 = arith.addf %16, %17 : vector<16x1xf32>
    %19 = math.rsqrt %18 : vector<16x1xf32>
    %20 = vector.broadcast %19 : vector<16x1xf32> to vector<16x32xf32>
    %21 = arith.mulf %11, %20 : vector<16x32xf32>
    %22 = vector.broadcast %4 : vector<1x32xf32> to vector<16x32xf32>
    %23 = arith.mulf %21, %22 : vector<16x32xf32>
    %24 = vector.broadcast %5 : vector<1x32xf32> to vector<16x32xf32>
    %25 = arith.addf %23, %24 : vector<16x32xf32>
    %c0_13 = arith.constant 0 : index
    %c0_14 = arith.constant 0 : index
    %26 = vector.load %arg7[%c0_13, %c0_14] : memref<1x96xf32, #tpu.memory_space<vmem>>, vector<1x96xf32>
    %27 = arith.truncf %25 : vector<16x32xf32> to vector<16x32xbf16>
    %c0_15 = arith.constant 0 : index
    %c0_16 = arith.constant 0 : index
    %28 = vector.load %arg6[%c0_15, %c0_16] : memref<32x96xbf16, #tpu.memory_space<vmem>>, vector<32x96xbf16>
    %cst_17 = arith.constant dense<0.000000e+00> : vector<16x96xf32>
    %29 = tpu.matmul %27, %28, %cst_17 {dimension_numbers = #tpu.dot_dimension_numbers<[1], [0], [0], [1], [0, 0, 1, 1], [], []>} : vector<16x32xbf16>, vector<32x96xbf16>, vector<16x96xf32> -> vector<16x96xf32>
    %30 = vector.broadcast %26 : vector<1x96xf32> to vector<16x96xf32>
    %31 = arith.addf %29, %30 : vector<16x96xf32>
    %32 = vector.extract_strided_slice %31 {offsets = [0, 0], sizes = [16, 32], strides = [1, 1]} : vector<16x96xf32> to vector<16x32xf32>
    %33 = vector.extract_strided_slice %31 {offsets = [0, 32], sizes = [16, 32], strides = [1, 1]} : vector<16x96xf32> to vector<16x32xf32>
    %34 = vector.extract_strided_slice %31 {offsets = [0, 64], sizes = [16, 32], strides = [1, 1]} : vector<16x96xf32> to vector<16x32xf32>
    %c0_18 = arith.constant 0 : index
    %c0_19 = arith.constant 0 : index
    %c0_20 = arith.constant 0 : index
    %35 = vector.load %arg2[%c0_18, %c0_19, %c0_20] : memref<2x8x8xf32, #tpu.memory_space<vmem>>, vector<2x8x8xf32>
    %c0_21 = arith.constant 0 : index
    %c0_22 = arith.constant 0 : index
    %36 = vector.load %arg9[%c0_21, %c0_22] : memref<1x32xf32, #tpu.memory_space<vmem>>, vector<1x32xf32>
    %37 = vector.shape_cast %36 : vector<1x32xf32> to vector<1x32xf32>
    %38 = vector.broadcast %37 : vector<1x32xf32> to vector<16x32xf32>
    %39 = vector.extract_strided_slice %32 {offsets = [0, 0], sizes = [16, 16], strides = [1, 1]} : vector<16x32xf32> to vector<16x16xf32>
    %40 = vector.shape_cast %39 : vector<16x16xf32> to vector<2x8x16xf32>
    %41 = arith.truncf %40 : vector<2x8x16xf32> to vector<2x8x16xbf16>
    %42 = vector.extract_strided_slice %33 {offsets = [0, 0], sizes = [16, 16], strides = [1, 1]} : vector<16x32xf32> to vector<16x16xf32>
    %43 = vector.shape_cast %42 : vector<16x16xf32> to vector<2x8x16xf32>
    %44 = arith.truncf %43 : vector<2x8x16xf32> to vector<2x8x16xbf16>
    %45 = vector.extract_strided_slice %34 {offsets = [0, 0], sizes = [16, 16], strides = [1, 1]} : vector<16x32xf32> to vector<16x16xf32>
    %46 = vector.shape_cast %45 : vector<16x16xf32> to vector<2x8x16xf32>
    %47 = arith.truncf %46 : vector<2x8x16xf32> to vector<2x8x16xbf16>
    "tpu.trace_start"() <{level = 10 : i32, message = "bqd,bkd->bqk"}> : () -> ()
    %cst_23 = arith.constant dense<0.000000e+00> : vector<2x8x8xf32>
    %48 = tpu.matmul %41, %44, %cst_23 {dimension_numbers = #tpu.dot_dimension_numbers<[2], [2], [1], [1], [0, 0, 0, 1, 1, 1], [0], [0]>} : vector<2x8x16xbf16>, vector<2x8x16xbf16>, vector<2x8x8xf32> -> vector<2x8x8xf32>
    "tpu.trace_stop"() : () -> ()
    %cst_24 = arith.constant 2.500000e-01 : f32
    %49 = vector.broadcast %cst_24 : f32 to vector<2x8x8xf32>
    %50 = arith.mulf %48, %49 : vector<2x8x8xf32>
    %51 = arith.addf %50, %35 : vector<2x8x8xf32>
    %cst_25 = arith.constant dense<0xFF800000> : vector<2x8xf32>
    %52 = vector.multi_reduction <maximumf>, %51, %cst_25 [2] : vector<2x8x8xf32> to vector<2x8xf32>
    %53 = vector.shape_cast %52 : vector<2x8xf32> to vector<2x8x1xf32>
    %54 = vector.broadcast %53 : vector<2x8x1xf32> to vector<2x8x8xf32>
    %55 = arith.subf %51, %54 : vector<2x8x8xf32>
    %56 = math.exp %55 : vector<2x8x8xf32>
    %cst_26 = arith.constant dense<0.000000e+00> : vector<2x8xf32>
    %57 = vector.multi_reduction <add>, %56, %cst_26 [2] : vector<2x8x8xf32> to vector<2x8xf32>
    %58 = vector.shape_cast %57 : vector<2x8xf32> to vector<2x8x1xf32>
    %59 = tpu.reciprocal %58 {approx = true} : vector<2x8x1xf32> -> vector<2x8x1xf32>
    %60 = vector.broadcast %59 : vector<2x8x1xf32> to vector<2x8x8xf32>
    %61 = arith.mulf %56, %60 : vector<2x8x8xf32>
    %62 = arith.truncf %61 : vector<2x8x8xf32> to vector<2x8x8xbf16>
    "tpu.trace_start"() <{level = 10 : i32, message = "bqk,bkd->bqd"}> : () -> ()
    %cst_27 = arith.constant dense<0.000000e+00> : vector<2x8x16xf32>
    %63 = tpu.matmul %62, %47, %cst_27 {dimension_numbers = #tpu.dot_dimension_numbers<[2], [1], [1], [2], [0, 0, 0, 1, 1, 2], [0], [0]>} : vector<2x8x8xbf16>, vector<2x8x16xbf16>, vector<2x8x16xf32> -> vector<2x8x16xf32>
    "tpu.trace_stop"() : () -> ()
    %64 = vector.shape_cast %63 : vector<2x8x16xf32> to vector<16x16xf32>
    %65 = arith.truncf %64 : vector<16x16xf32> to vector<16x16xbf16>
    %c0_28 = arith.constant 0 : index
    %c0_29 = arith.constant 0 : index
    %66 = vector.load %arg8[%c0_28, %c0_29] : memref<32x32xbf16, #tpu.memory_space<vmem>>, vector<16x32xbf16>
    %cst_30 = arith.constant dense<0.000000e+00> : vector<16x32xf32>
    %67 = tpu.matmul %65, %66, %cst_30 {dimension_numbers = #tpu.dot_dimension_numbers<[1], [0], [0], [1], [0, 0, 1, 1], [], []>} : vector<16x16xbf16>, vector<16x32xbf16>, vector<16x32xf32> -> vector<16x32xf32>
    %68 = arith.addf %38, %67 : vector<16x32xf32>
    %69 = vector.extract_strided_slice %32 {offsets = [0, 16], sizes = [16, 16], strides = [1, 1]} : vector<16x32xf32> to vector<16x16xf32>
    %70 = vector.shape_cast %69 : vector<16x16xf32> to vector<2x8x16xf32>
    %71 = arith.truncf %70 : vector<2x8x16xf32> to vector<2x8x16xbf16>
    %72 = vector.extract_strided_slice %33 {offsets = [0, 16], sizes = [16, 16], strides = [1, 1]} : vector<16x32xf32> to vector<16x16xf32>
    %73 = vector.shape_cast %72 : vector<16x16xf32> to vector<2x8x16xf32>
    %74 = arith.truncf %73 : vector<2x8x16xf32> to vector<2x8x16xbf16>
    %75 = vector.extract_strided_slice %34 {offsets = [0, 16], sizes = [16, 16], strides = [1, 1]} : vector<16x32xf32> to vector<16x16xf32>
    %76 = vector.shape_cast %75 : vector<16x16xf32> to vector<2x8x16xf32>
    %77 = arith.truncf %76 : vector<2x8x16xf32> to vector<2x8x16xbf16>
    "tpu.trace_start"() <{level = 10 : i32, message = "bqd,bkd->bqk"}> : () -> ()
    %cst_31 = arith.constant dense<0.000000e+00> : vector<2x8x8xf32>
    %78 = tpu.matmul %71, %74, %cst_31 {dimension_numbers = #tpu.dot_dimension_numbers<[2], [2], [1], [1], [0, 0, 0, 1, 1, 1], [0], [0]>} : vector<2x8x16xbf16>, vector<2x8x16xbf16>, vector<2x8x8xf32> -> vector<2x8x8xf32>
    "tpu.trace_stop"() : () -> ()
    %cst_32 = arith.constant 2.500000e-01 : f32
    %79 = vector.broadcast %cst_32 : f32 to vector<2x8x8xf32>
    %80 = arith.mulf %78, %79 : vector<2x8x8xf32>
    %81 = arith.addf %80, %35 : vector<2x8x8xf32>
    %cst_33 = arith.constant dense<0xFF800000> : vector<2x8xf32>
    %82 = vector.multi_reduction <maximumf>, %81, %cst_33 [2] : vector<2x8x8xf32> to vector<2x8xf32>
    %83 = vector.shape_cast %82 : vector<2x8xf32> to vector<2x8x1xf32>
    %84 = vector.broadcast %83 : vector<2x8x1xf32> to vector<2x8x8xf32>
    %85 = arith.subf %81, %84 : vector<2x8x8xf32>
    %86 = math.exp %85 : vector<2x8x8xf32>
    %cst_34 = arith.constant dense<0.000000e+00> : vector<2x8xf32>
    %87 = vector.multi_reduction <add>, %86, %cst_34 [2] : vector<2x8x8xf32> to vector<2x8xf32>
    %88 = vector.shape_cast %87 : vector<2x8xf32> to vector<2x8x1xf32>
    %89 = tpu.reciprocal %88 {approx = true} : vector<2x8x1xf32> -> vector<2x8x1xf32>
    %90 = vector.broadcast %89 : vector<2x8x1xf32> to vector<2x8x8xf32>
    %91 = arith.mulf %86, %90 : vector<2x8x8xf32>
    %92 = arith.truncf %91 : vector<2x8x8xf32> to vector<2x8x8xbf16>
    "tpu.trace_start"() <{level = 10 : i32, message = "bqk,bkd->bqd"}> : () -> ()
    %cst_35 = arith.constant dense<0.000000e+00> : vector<2x8x16xf32>
    %93 = tpu.matmul %92, %77, %cst_35 {dimension_numbers = #tpu.dot_dimension_numbers<[2], [1], [1], [2], [0, 0, 0, 1, 1, 2], [0], [0]>} : vector<2x8x8xbf16>, vector<2x8x16xbf16>, vector<2x8x16xf32> -> vector<2x8x16xf32>
    "tpu.trace_stop"() : () -> ()
    %94 = vector.shape_cast %93 : vector<2x8x16xf32> to vector<16x16xf32>
    %95 = arith.truncf %94 : vector<16x16xf32> to vector<16x16xbf16>
    %c16 = arith.constant 16 : index
    %c0_36 = arith.constant 0 : index
    %96 = vector.load %arg8[%c16, %c0_36] : memref<32x32xbf16, #tpu.memory_space<vmem>>, vector<16x32xbf16>
    %cst_37 = arith.constant dense<0.000000e+00> : vector<16x32xf32>
    %97 = tpu.matmul %95, %96, %cst_37 {dimension_numbers = #tpu.dot_dimension_numbers<[1], [0], [0], [1], [0, 0, 1, 1], [], []>} : vector<16x16xbf16>, vector<16x32xbf16>, vector<16x32xf32> -> vector<16x32xf32>
    %98 = arith.addf %68, %97 : vector<16x32xf32>
    %99 = arith.addf %1, %98 : vector<16x32xf32>
    %c0_38 = arith.constant 0 : index
    %c0_39 = arith.constant 0 : index
    %100 = vector.load %arg10[%c0_38, %c0_39] : memref<1x32xf32, #tpu.memory_space<vmem>>, vector<1x32xf32>
    %c0_40 = arith.constant 0 : index
    %c0_41 = arith.constant 0 : index
    %101 = vector.load %arg11[%c0_40, %c0_41] : memref<1x32xf32, #tpu.memory_space<vmem>>, vector<1x32xf32>
    %cst_42 = arith.constant dense<0.000000e+00> : vector<16xf32>
    %102 = vector.multi_reduction <add>, %99, %cst_42 [1] : vector<16x32xf32> to vector<16xf32>
    %103 = vector.shape_cast %102 : vector<16xf32> to vector<16x1xf32>
    %cst_43 = arith.constant 3.200000e+01 : f32
    %104 = vector.broadcast %cst_43 : f32 to vector<16x1xf32>
    %105 = arith.divf %103, %104 : vector<16x1xf32>
    %106 = vector.broadcast %105 : vector<16x1xf32> to vector<16x32xf32>
    %107 = arith.subf %99, %106 : vector<16x32xf32>
    %108 = arith.mulf %107, %107 : vector<16x32xf32>
    %cst_44 = arith.constant dense<0.000000e+00> : vector<16xf32>
    %109 = vector.multi_reduction <add>, %108, %cst_44 [1] : vector<16x32xf32> to vector<16xf32>
    %110 = vector.shape_cast %109 : vector<16xf32> to vector<16x1xf32>
    %cst_45 = arith.constant 3.200000e+01 : f32
    %111 = vector.broadcast %cst_45 : f32 to vector<16x1xf32>
    %112 = arith.divf %110, %111 : vector<16x1xf32>
    %cst_46 = arith.constant 9.99999974E-6 : f32
    %113 = vector.broadcast %cst_46 : f32 to vector<16x1xf32>
    %114 = arith.addf %112, %113 : vector<16x1xf32>
    %115 = math.rsqrt %114 : vector<16x1xf32>
    %116 = vector.broadcast %115 : vector<16x1xf32> to vector<16x32xf32>
    %117 = arith.mulf %107, %116 : vector<16x32xf32>
    %118 = vector.broadcast %100 : vector<1x32xf32> to vector<16x32xf32>
    %119 = arith.mulf %117, %118 : vector<16x32xf32>
    %120 = vector.broadcast %101 : vector<1x32xf32> to vector<16x32xf32>
    %121 = arith.addf %119, %120 : vector<16x32xf32>
    %c0_47 = arith.constant 0 : index
    %c0_48 = arith.constant 0 : index
    %122 = vector.load %arg13[%c0_47, %c0_48] : memref<1x32xf32, #tpu.memory_space<vmem>>, vector<1x32xf32>
    %123 = arith.truncf %121 : vector<16x32xf32> to vector<16x32xbf16>
    %c0_49 = arith.constant 0 : index
    %c0_50 = arith.constant 0 : index
    %124 = vector.load %arg12[%c0_49, %c0_50] : memref<32x32xbf16, #tpu.memory_space<vmem>>, vector<32x32xbf16>
    %cst_51 = arith.constant dense<0.000000e+00> : vector<16x32xf32>
    %125 = tpu.matmul %123, %124, %cst_51 {dimension_numbers = #tpu.dot_dimension_numbers<[1], [0], [0], [1], [0, 0, 1, 1], [], []>} : vector<16x32xbf16>, vector<32x32xbf16>, vector<16x32xf32> -> vector<16x32xf32>
    %126 = vector.broadcast %122 : vector<1x32xf32> to vector<16x32xf32>
    %127 = arith.addf %125, %126 : vector<16x32xf32>
    %c0_52 = arith.constant 0 : index
    %c0_53 = arith.constant 0 : index
    %128 = vector.load %arg15[%c0_52, %c0_53] : memref<1x64xf32, #tpu.memory_space<vmem>>, vector<1x64xf32>
    %129 = arith.truncf %3 : vector<16x32xf32> to vector<16x32xbf16>
    %c0_54 = arith.constant 0 : index
    %c0_55 = arith.constant 0 : index
    %130 = vector.load %arg14[%c0_54, %c0_55] : memref<32x64xbf16, #tpu.memory_space<vmem>>, vector<32x64xbf16>
    %cst_56 = arith.constant dense<0.000000e+00> : vector<16x64xf32>
    %131 = tpu.matmul %129, %130, %cst_56 {dimension_numbers = #tpu.dot_dimension_numbers<[1], [0], [0], [1], [0, 0, 1, 1], [], []>} : vector<16x32xbf16>, vector<32x64xbf16>, vector<16x64xf32> -> vector<16x64xf32>
    %132 = vector.broadcast %128 : vector<1x64xf32> to vector<16x64xf32>
    %133 = arith.addf %131, %132 : vector<16x64xf32>
    %134 = vector.extract_strided_slice %133 {offsets = [0, 0], sizes = [16, 32], strides = [1, 1]} : vector<16x64xf32> to vector<16x32xf32>
    %135 = vector.extract_strided_slice %133 {offsets = [0, 32], sizes = [16, 32], strides = [1, 1]} : vector<16x64xf32> to vector<16x32xf32>
    %c0_57 = arith.constant 0 : index
    %c0_58 = arith.constant 0 : index
    %c0_59 = arith.constant 0 : index
    %136 = vector.load %arg3[%c0_57, %c0_58, %c0_59] : memref<2x8x8xf32, #tpu.memory_space<vmem>>, vector<2x8x8xf32>
    %c0_60 = arith.constant 0 : index
    %c0_61 = arith.constant 0 : index
    %137 = vector.load %arg17[%c0_60, %c0_61] : memref<1x32xf32, #tpu.memory_space<vmem>>, vector<1x32xf32>
    %138 = vector.shape_cast %137 : vector<1x32xf32> to vector<1x32xf32>
    %139 = vector.broadcast %138 : vector<1x32xf32> to vector<16x32xf32>
    %140 = vector.extract_strided_slice %127 {offsets = [0, 0], sizes = [16, 16], strides = [1, 1]} : vector<16x32xf32> to vector<16x16xf32>
    %141 = vector.shape_cast %140 : vector<16x16xf32> to vector<2x8x16xf32>
    %142 = arith.truncf %141 : vector<2x8x16xf32> to vector<2x8x16xbf16>
    %143 = vector.extract_strided_slice %134 {offsets = [0, 0], sizes = [16, 16], strides = [1, 1]} : vector<16x32xf32> to vector<16x16xf32>
    %144 = vector.shape_cast %143 : vector<16x16xf32> to vector<2x8x16xf32>
    %145 = arith.truncf %144 : vector<2x8x16xf32> to vector<2x8x16xbf16>
    %146 = vector.extract_strided_slice %135 {offsets = [0, 0], sizes = [16, 16], strides = [1, 1]} : vector<16x32xf32> to vector<16x16xf32>
    %147 = vector.shape_cast %146 : vector<16x16xf32> to vector<2x8x16xf32>
    %148 = arith.truncf %147 : vector<2x8x16xf32> to vector<2x8x16xbf16>
    "tpu.trace_start"() <{level = 10 : i32, message = "bqd,bkd->bqk"}> : () -> ()
    %cst_62 = arith.constant dense<0.000000e+00> : vector<2x8x8xf32>
    %149 = tpu.matmul %142, %145, %cst_62 {dimension_numbers = #tpu.dot_dimension_numbers<[2], [2], [1], [1], [0, 0, 0, 1, 1, 1], [0], [0]>} : vector<2x8x16xbf16>, vector<2x8x16xbf16>, vector<2x8x8xf32> -> vector<2x8x8xf32>
    "tpu.trace_stop"() : () -> ()
    %cst_63 = arith.constant 2.500000e-01 : f32
    %150 = vector.broadcast %cst_63 : f32 to vector<2x8x8xf32>
    %151 = arith.mulf %149, %150 : vector<2x8x8xf32>
    %152 = arith.addf %151, %136 : vector<2x8x8xf32>
    %cst_64 = arith.constant dense<0xFF800000> : vector<2x8xf32>
    %153 = vector.multi_reduction <maximumf>, %152, %cst_64 [2] : vector<2x8x8xf32> to vector<2x8xf32>
    %154 = vector.shape_cast %153 : vector<2x8xf32> to vector<2x8x1xf32>
    %155 = vector.broadcast %154 : vector<2x8x1xf32> to vector<2x8x8xf32>
    %156 = arith.subf %152, %155 : vector<2x8x8xf32>
    %157 = math.exp %156 : vector<2x8x8xf32>
    %cst_65 = arith.constant dense<0.000000e+00> : vector<2x8xf32>
    %158 = vector.multi_reduction <add>, %157, %cst_65 [2] : vector<2x8x8xf32> to vector<2x8xf32>
    %159 = vector.shape_cast %158 : vector<2x8xf32> to vector<2x8x1xf32>
    %160 = tpu.reciprocal %159 {approx = true} : vector<2x8x1xf32> -> vector<2x8x1xf32>
    %161 = vector.broadcast %160 : vector<2x8x1xf32> to vector<2x8x8xf32>
    %162 = arith.mulf %157, %161 : vector<2x8x8xf32>
    %163 = arith.truncf %162 : vector<2x8x8xf32> to vector<2x8x8xbf16>
    "tpu.trace_start"() <{level = 10 : i32, message = "bqk,bkd->bqd"}> : () -> ()
    %cst_66 = arith.constant dense<0.000000e+00> : vector<2x8x16xf32>
    %164 = tpu.matmul %163, %148, %cst_66 {dimension_numbers = #tpu.dot_dimension_numbers<[2], [1], [1], [2], [0, 0, 0, 1, 1, 2], [0], [0]>} : vector<2x8x8xbf16>, vector<2x8x16xbf16>, vector<2x8x16xf32> -> vector<2x8x16xf32>
    "tpu.trace_stop"() : () -> ()
    %165 = vector.shape_cast %164 : vector<2x8x16xf32> to vector<16x16xf32>
    %166 = arith.truncf %165 : vector<16x16xf32> to vector<16x16xbf16>
    %c0_67 = arith.constant 0 : index
    %c0_68 = arith.constant 0 : index
    %167 = vector.load %arg16[%c0_67, %c0_68] : memref<32x32xbf16, #tpu.memory_space<vmem>>, vector<16x32xbf16>
    %cst_69 = arith.constant dense<0.000000e+00> : vector<16x32xf32>
    %168 = tpu.matmul %166, %167, %cst_69 {dimension_numbers = #tpu.dot_dimension_numbers<[1], [0], [0], [1], [0, 0, 1, 1], [], []>} : vector<16x16xbf16>, vector<16x32xbf16>, vector<16x32xf32> -> vector<16x32xf32>
    %169 = arith.addf %139, %168 : vector<16x32xf32>
    %170 = vector.extract_strided_slice %127 {offsets = [0, 16], sizes = [16, 16], strides = [1, 1]} : vector<16x32xf32> to vector<16x16xf32>
    %171 = vector.shape_cast %170 : vector<16x16xf32> to vector<2x8x16xf32>
    %172 = arith.truncf %171 : vector<2x8x16xf32> to vector<2x8x16xbf16>
    %173 = vector.extract_strided_slice %134 {offsets = [0, 16], sizes = [16, 16], strides = [1, 1]} : vector<16x32xf32> to vector<16x16xf32>
    %174 = vector.shape_cast %173 : vector<16x16xf32> to vector<2x8x16xf32>
    %175 = arith.truncf %174 : vector<2x8x16xf32> to vector<2x8x16xbf16>
    %176 = vector.extract_strided_slice %135 {offsets = [0, 16], sizes = [16, 16], strides = [1, 1]} : vector<16x32xf32> to vector<16x16xf32>
    %177 = vector.shape_cast %176 : vector<16x16xf32> to vector<2x8x16xf32>
    %178 = arith.truncf %177 : vector<2x8x16xf32> to vector<2x8x16xbf16>
    "tpu.trace_start"() <{level = 10 : i32, message = "bqd,bkd->bqk"}> : () -> ()
    %cst_70 = arith.constant dense<0.000000e+00> : vector<2x8x8xf32>
    %179 = tpu.matmul %172, %175, %cst_70 {dimension_numbers = #tpu.dot_dimension_numbers<[2], [2], [1], [1], [0, 0, 0, 1, 1, 1], [0], [0]>} : vector<2x8x16xbf16>, vector<2x8x16xbf16>, vector<2x8x8xf32> -> vector<2x8x8xf32>
    "tpu.trace_stop"() : () -> ()
    %cst_71 = arith.constant 2.500000e-01 : f32
    %180 = vector.broadcast %cst_71 : f32 to vector<2x8x8xf32>
    %181 = arith.mulf %179, %180 : vector<2x8x8xf32>
    %182 = arith.addf %181, %136 : vector<2x8x8xf32>
    %cst_72 = arith.constant dense<0xFF800000> : vector<2x8xf32>
    %183 = vector.multi_reduction <maximumf>, %182, %cst_72 [2] : vector<2x8x8xf32> to vector<2x8xf32>
    %184 = vector.shape_cast %183 : vector<2x8xf32> to vector<2x8x1xf32>
    %185 = vector.broadcast %184 : vector<2x8x1xf32> to vector<2x8x8xf32>
    %186 = arith.subf %182, %185 : vector<2x8x8xf32>
    %187 = math.exp %186 : vector<2x8x8xf32>
    %cst_73 = arith.constant dense<0.000000e+00> : vector<2x8xf32>
    %188 = vector.multi_reduction <add>, %187, %cst_73 [2] : vector<2x8x8xf32> to vector<2x8xf32>
    %189 = vector.shape_cast %188 : vector<2x8xf32> to vector<2x8x1xf32>
    %190 = tpu.reciprocal %189 {approx = true} : vector<2x8x1xf32> -> vector<2x8x1xf32>
    %191 = vector.broadcast %190 : vector<2x8x1xf32> to vector<2x8x8xf32>
    %192 = arith.mulf %187, %191 : vector<2x8x8xf32>
    %193 = arith.truncf %192 : vector<2x8x8xf32> to vector<2x8x8xbf16>
    "tpu.trace_start"() <{level = 10 : i32, message = "bqk,bkd->bqd"}> : () -> ()
    %cst_74 = arith.constant dense<0.000000e+00> : vector<2x8x16xf32>
    %194 = tpu.matmul %193, %178, %cst_74 {dimension_numbers = #tpu.dot_dimension_numbers<[2], [1], [1], [2], [0, 0, 0, 1, 1, 2], [0], [0]>} : vector<2x8x8xbf16>, vector<2x8x16xbf16>, vector<2x8x16xf32> -> vector<2x8x16xf32>
    "tpu.trace_stop"() : () -> ()
    %195 = vector.shape_cast %194 : vector<2x8x16xf32> to vector<16x16xf32>
    %196 = arith.truncf %195 : vector<16x16xf32> to vector<16x16xbf16>
    %c16_75 = arith.constant 16 : index
    %c0_76 = arith.constant 0 : index
    %197 = vector.load %arg16[%c16_75, %c0_76] : memref<32x32xbf16, #tpu.memory_space<vmem>>, vector<16x32xbf16>
    %cst_77 = arith.constant dense<0.000000e+00> : vector<16x32xf32>
    %198 = tpu.matmul %196, %197, %cst_77 {dimension_numbers = #tpu.dot_dimension_numbers<[1], [0], [0], [1], [0, 0, 1, 1], [], []>} : vector<16x16xbf16>, vector<16x32xbf16>, vector<16x32xf32> -> vector<16x32xf32>
    %199 = arith.addf %169, %198 : vector<16x32xf32>
    %200 = arith.addf %99, %199 : vector<16x32xf32>
    %c0_78 = arith.constant 0 : index
    %c0_79 = arith.constant 0 : index
    %201 = vector.load %arg18[%c0_78, %c0_79] : memref<1x32xf32, #tpu.memory_space<vmem>>, vector<1x32xf32>
    %c0_80 = arith.constant 0 : index
    %c0_81 = arith.constant 0 : index
    %202 = vector.load %arg19[%c0_80, %c0_81] : memref<1x32xf32, #tpu.memory_space<vmem>>, vector<1x32xf32>
    %cst_82 = arith.constant dense<0.000000e+00> : vector<16xf32>
    %203 = vector.multi_reduction <add>, %200, %cst_82 [1] : vector<16x32xf32> to vector<16xf32>
    %204 = vector.shape_cast %203 : vector<16xf32> to vector<16x1xf32>
    %cst_83 = arith.constant 3.200000e+01 : f32
    %205 = vector.broadcast %cst_83 : f32 to vector<16x1xf32>
    %206 = arith.divf %204, %205 : vector<16x1xf32>
    %207 = vector.broadcast %206 : vector<16x1xf32> to vector<16x32xf32>
    %208 = arith.subf %200, %207 : vector<16x32xf32>
    %209 = arith.mulf %208, %208 : vector<16x32xf32>
    %cst_84 = arith.constant dense<0.000000e+00> : vector<16xf32>
    %210 = vector.multi_reduction <add>, %209, %cst_84 [1] : vector<16x32xf32> to vector<16xf32>
    %211 = vector.shape_cast %210 : vector<16xf32> to vector<16x1xf32>
    %cst_85 = arith.constant 3.200000e+01 : f32
    %212 = vector.broadcast %cst_85 : f32 to vector<16x1xf32>
    %213 = arith.divf %211, %212 : vector<16x1xf32>
    %cst_86 = arith.constant 9.99999974E-6 : f32
    %214 = vector.broadcast %cst_86 : f32 to vector<16x1xf32>
    %215 = arith.addf %213, %214 : vector<16x1xf32>
    %216 = math.rsqrt %215 : vector<16x1xf32>
    %217 = vector.broadcast %216 : vector<16x1xf32> to vector<16x32xf32>
    %218 = arith.mulf %208, %217 : vector<16x32xf32>
    %219 = vector.broadcast %201 : vector<1x32xf32> to vector<16x32xf32>
    %220 = arith.mulf %218, %219 : vector<16x32xf32>
    %221 = vector.broadcast %202 : vector<1x32xf32> to vector<16x32xf32>
    %222 = arith.addf %220, %221 : vector<16x32xf32>
    %c0_87 = arith.constant 0 : index
    %c0_88 = arith.constant 0 : index
    %223 = vector.load %arg21[%c0_87, %c0_88] : memref<1x64xf32, #tpu.memory_space<vmem>>, vector<1x64xf32>
    %c0_89 = arith.constant 0 : index
    %c0_90 = arith.constant 0 : index
    %224 = vector.load %arg23[%c0_89, %c0_90] : memref<1x32xf32, #tpu.memory_space<vmem>>, vector<1x32xf32>
    %225 = arith.truncf %222 : vector<16x32xf32> to vector<16x32xbf16>
    %c0_91 = arith.constant 0 : index
    %c0_92 = arith.constant 0 : index
    %226 = vector.load %arg20[%c0_91, %c0_92] : memref<32x64xbf16, #tpu.memory_space<vmem>>, vector<32x64xbf16>
    %cst_93 = arith.constant dense<0.000000e+00> : vector<16x64xf32>
    %227 = tpu.matmul %225, %226, %cst_93 {dimension_numbers = #tpu.dot_dimension_numbers<[1], [0], [0], [1], [0, 0, 1, 1], [], []>} : vector<16x32xbf16>, vector<32x64xbf16>, vector<16x64xf32> -> vector<16x64xf32>
    %228 = vector.broadcast %223 : vector<1x64xf32> to vector<16x64xf32>
    %229 = arith.addf %227, %228 : vector<16x64xf32>
    %230 = arith.mulf %229, %229 : vector<16x64xf32>
    %231 = arith.mulf %229, %230 : vector<16x64xf32>
    %cst_94 = arith.constant 4.471500e-02 : f32
    %232 = vector.broadcast %cst_94 : f32 to vector<16x64xf32>
    %233 = arith.mulf %232, %231 : vector<16x64xf32>
    %234 = arith.addf %229, %233 : vector<16x64xf32>
    %cst_95 = arith.constant 0.797884583 : f32
    %235 = vector.broadcast %cst_95 : f32 to vector<16x64xf32>
    %236 = arith.mulf %235, %234 : vector<16x64xf32>
    %237 = math.tanh %236 : vector<16x64xf32>
    %cst_96 = arith.constant 1.000000e+00 : f32
    %238 = vector.broadcast %cst_96 : f32 to vector<16x64xf32>
    %239 = arith.addf %238, %237 : vector<16x64xf32>
    %cst_97 = arith.constant 5.000000e-01 : f32
    %240 = vector.broadcast %cst_97 : f32 to vector<16x64xf32>
    %241 = arith.mulf %240, %239 : vector<16x64xf32>
    %242 = arith.mulf %229, %241 : vector<16x64xf32>
    %243 = arith.truncf %242 : vector<16x64xf32> to vector<16x64xbf16>
    %c0_98 = arith.constant 0 : index
    %c0_99 = arith.constant 0 : index
    %244 = vector.load %arg22[%c0_98, %c0_99] : memref<64x32xbf16, #tpu.memory_space<vmem>>, vector<64x32xbf16>
    %cst_100 = arith.constant dense<0.000000e+00> : vector<16x32xf32>
    %245 = tpu.matmul %243, %244, %cst_100 {dimension_numbers = #tpu.dot_dimension_numbers<[1], [0], [0], [1], [0, 0, 1, 1], [], []>} : vector<16x64xbf16>, vector<64x32xbf16>, vector<16x32xf32> -> vector<16x32xf32>
    %246 = vector.broadcast %224 : vector<1x32xf32> to vector<16x32xf32>
    %247 = arith.addf %245, %246 : vector<16x32xf32>
    %248 = arith.addf %200, %247 : vector<16x32xf32>
    %249 = vector.shape_cast %248 : vector<16x32xf32> to vector<2x8x32xf32>
    %c0_101 = arith.constant 0 : index
    %c0_102 = arith.constant 0 : index
    %c0_103 = arith.constant 0 : index
    %250 = vector.load %arg24[%c0_101, %c0_102, %c0_103] : memref<2x8x32xf32, #tpu.memory_space<vmem>>, vector<2x8x32xf32>
    tpu.vector_store %arg24[%c0_101, %c0_102, %c0_103], %249 {strides = array<i32>} : memref<2x8x32xf32, #tpu.memory_space<vmem>>, vector<2x8x32xf32>,
    return
  }
}

module attributes {stable_mosaic.version = 11 : i64} {
  func.func @_head_ce_kernel(%arg0: memref<2x32xf32, #tpu.memory_space<vmem>>, %arg1: memref<1x32xf32, #tpu.memory_space<vmem>>, %arg2: memref<1x32xf32, #tpu.memory_space<vmem>>, %arg3: memref<32x128xbf16, #tpu.memory_space<vmem>>, %arg4: memref<1x128xf32, #tpu.memory_space<vmem>>, %arg5: memref<2x128xf32, #tpu.memory_space<vmem>>, %arg6: memref<2x128xf32, #tpu.memory_space<vmem>>, %arg7: memref<1x1xf32, #tpu.memory_space<vmem>>) attributes {dimension_semantics = [], scalar_prefetch = 0 : i64, scratch_operands = 0 : i64, tpu.core_type = #tpu.core_type<tc>} {
    %c0 = arith.constant 0 : index
    %c0_0 = arith.constant 0 : index
    %0 = vector.load %arg0[%c0, %c0_0] : memref<2x32xf32, #tpu.memory_space<vmem>>, vector<2x32xf32>
    %c0_1 = arith.constant 0 : index
    %c0_2 = arith.constant 0 : index
    %1 = vector.load %arg4[%c0_1, %c0_2] : memref<1x128xf32, #tpu.memory_space<vmem>>, vector<1x128xf32>
    %2 = arith.truncf %0 : vector<2x32xf32> to vector<2x32xbf16>
    %c0_3 = arith.constant 0 : index
    %c0_4 = arith.constant 0 : index
    %3 = vector.load %arg3[%c0_3, %c0_4] : memref<32x128xbf16, #tpu.memory_space<vmem>>, vector<32x128xbf16>
    %cst = arith.constant dense<0.000000e+00> : vector<2x128xf32>
    %4 = tpu.matmul %2, %3, %cst {dimension_numbers = #tpu.dot_dimension_numbers<[1], [0], [0], [1], [0, 0, 1, 1], [], []>} : vector<2x32xbf16>, vector<32x128xbf16>, vector<2x128xf32> -> vector<2x128xf32>
    %5 = vector.broadcast %1 : vector<1x128xf32> to vector<2x128xf32>
    %6 = arith.addf %4, %5 : vector<2x128xf32>
    %c0_5 = arith.constant 0 : index
    %c0_6 = arith.constant 0 : index
    %7 = vector.load %arg6[%c0_5, %c0_6] : memref<2x128xf32, #tpu.memory_space<vmem>>, vector<2x128xf32>
    tpu.vector_store %arg6[%c0_5, %c0_6], %6 {strides = array<i32>} : memref<2x128xf32, #tpu.memory_space<vmem>>, vector<2x128xf32>,
    %cst_7 = arith.constant dense<0xFF800000> : vector<2xf32>
    %8 = vector.multi_reduction <maximumf>, %6, %cst_7 [1] : vector<2x128xf32> to vector<2xf32>
    %9 = vector.shape_cast %8 : vector<2xf32> to vector<2x1xf32>
    %10 = vector.broadcast %9 : vector<2x1xf32> to vector<2x128xf32>
    %11 = arith.subf %6, %10 : vector<2x128xf32>
    %12 = math.exp %11 : vector<2x128xf32>
    %cst_8 = arith.constant dense<0.000000e+00> : vector<2xf32>
    %13 = vector.multi_reduction <add>, %12, %cst_8 [1] : vector<2x128xf32> to vector<2xf32>
    %14 = vector.shape_cast %13 : vector<2xf32> to vector<2x1xf32>
    %15 = math.log %14 : vector<2x1xf32>
    %16 = vector.broadcast %15 : vector<2x1xf32> to vector<2x128xf32>
    %17 = arith.subf %11, %16 : vector<2x128xf32>
    %c0_9 = arith.constant 0 : index
    %c0_10 = arith.constant 0 : index
    %18 = vector.load %arg5[%c0_9, %c0_10] : memref<2x128xf32, #tpu.memory_space<vmem>>, vector<2x128xf32>
    %19 = arith.mulf %18, %17 : vector<2x128xf32>
    %cst_11 = arith.constant dense<0.000000e+00> : vector<2xf32>
    %20 = vector.multi_reduction <add>, %19, %cst_11 [1] : vector<2x128xf32> to vector<2xf32>
    %21 = vector.shape_cast %20 : vector<2xf32> to vector<2x1xf32>
    %cst_12 = arith.constant 0.000000e+00 : f32
    %22 = vector.broadcast %cst_12 : f32 to vector<2x1xf32>
    %23 = arith.subf %22, %21 : vector<2x1xf32>
    %cst_13 = arith.constant dense<0.000000e+00> : vector<1xf32>
    %24 = vector.multi_reduction <add>, %23, %cst_13 [0] : vector<2x1xf32> to vector<1xf32>
    %25 = vector.shape_cast %24 : vector<1xf32> to vector<1x1xf32>
    %cst_14 = arith.constant 5.000000e-01 : f32
    %26 = vector.broadcast %cst_14 : f32 to vector<1x1xf32>
    %27 = arith.mulf %25, %26 : vector<1x1xf32>
    %c0_15 = arith.constant 0 : index
    %c0_16 = arith.constant 0 : index
    %28 = vector.load %arg7[%c0_15, %c0_16] : memref<1x1xf32, #tpu.memory_space<vmem>>, vector<1x1xf32>
    tpu.vector_store %arg7[%c0_15, %c0_16], %27 {strides = array<i32>} : memref<1x1xf32, #tpu.memory_space<vmem>>, vector<1x1xf32>,
    return
  }
}

</mosaic_0001>

<llo_original>
// kernel: custom_model_forward.6
$region0: #{custom_model_forward.6}
  #allocation0 [shape = 'u32[]', space=smem, size = 0x4, offset = 0x4, fixed_abs, tag = 'smem constant byte address 0x4 - core index']
  #allocation1 [shape = 'u32[144,128]{1,0:T(1,128)}', space=vmem, size = 0x12000, scoped, tag = 'internal scratch']
  %s0 = inlined_call_operand.vmem [shape: f32[16,32], index: 0, kind: input, shape index: {}]
  %s1 = inlined_call_operand.vmem [shape: f32[1,32], index: 1, kind: input, shape index: {}]
  %s2 = inlined_call_operand.vmem [shape: f32[1,32], index: 2, kind: input, shape index: {}]
  %s3 = inlined_call_operand.vmem [shape: bf16[32,128], index: 3, kind: input, shape index: {}]
  %s4 = inlined_call_operand.vmem [shape: f32[1,128], index: 4, kind: input, shape index: {}]
  %s5 = inlined_call_operand.vmem [shape: f32[16,128], index: 5, kind: input, shape index: {}]
  %s6 = inlined_call_operand.hbm [shape: f32[16,128], index: 6, kind: output, shape index: {0}]
  %s7 = inlined_call_operand.hbm [shape: f32[1,1], index: 7, kind: output, shape index: {1}]
  %8 = xla_tuple %s6, %s7
  %s9 = sld [smem:[#allocation0]]
  $region42: #{custom_model_forward.6} parent=0
    _
  %s11 = ssub.s32 1, %s9
  %s12 = scalar_select 0, %s11, %s9
  $region1: #{custom_model_forward.6} parent=0
    #allocation2 [shape = 'u8[8192]{0}', space=vmem, size = 0x2000, scoped, tag = 'output window, operand 0, single buffered']
    #allocation3 [shape = 's32[1]{0}', space=sflag, size = 0x4, scoped, tag = 'scoped memory for custom_model_forward.6']
    #allocation4 [shape = 'u8[512]{0}', space=vmem, size = 0x400, scoped, tag = 'output window, operand 1, single buffered']
    #allocation5 [shape = 's32[1]{0}', space=sflag, size = 0x4, scoped, tag = 'scoped memory for custom_model_forward.6']
    %13 = vsyncpa [#allocation3], 0
    %14 = vsyncpa [#allocation5], 0
    // Predicated region
    $region2: #{custom_model_forward.6} parent=1 // pred_check
      _
    $region3: #{custom_model_forward.6} parent=1 // pred_check_branch
      %16 = sbr.rel (0) target = $region5
    $region4: #{custom_model_forward.6} parent=1 // pred_region
      _
    $region5: #{custom_model_forward.6} parent=1 // pred_fallthru
      _
    // Predicated region
    $region6: #{custom_model_forward.6} parent=1 // pred_check
      _
    $region7: #{custom_model_forward.6} parent=1 // pred_check_branch
      %18 = sbr.rel (0) target = $region9
    $region8: #{custom_model_forward.6} parent=1 // pred_region
      _
    $region9: #{custom_model_forward.6} parent=1 // pred_fallthru
      _
    // Predicated region
    $region10: #{custom_model_forward.6} parent=1 // pred_check
      _
    $region11: #{custom_model_forward.6} parent=1 // pred_check_branch
      %20 = sbr.rel (0) target = $region13
    $region12: #{custom_model_forward.6} parent=1 // pred_region
      _
    $region13: #{custom_model_forward.6} parent=1 // pred_fallthru
      _
    // Predicated region
    $region14: #{custom_model_forward.6} parent=1 // pred_check
      _
    $region15: #{custom_model_forward.6} parent=1 // pred_check_branch
      %22 = sbr.rel (0) target = $region17
    $region16: #{custom_model_forward.6} parent=1 // pred_region
      _
    $region17: #{custom_model_forward.6} parent=1 // pred_fallthru
      _
    // Predicated region
    $region18: #{custom_model_forward.6} parent=1 // pred_check
      _
    $region19: #{custom_model_forward.6} parent=1 // pred_check_branch
      %24 = sbr.rel (0) target = $region21
    $region20: #{custom_model_forward.6} parent=1 // pred_region
      _
    $region21: #{custom_model_forward.6} parent=1 // pred_fallthru
      _
    // Predicated region
    $region22: #{custom_model_forward.6} parent=1 // pred_check
      _
    $region23: #{custom_model_forward.6} parent=1 // pred_check_branch
      %26 = sbr.rel (0) target = $region25
    $region24: #{custom_model_forward.6} parent=1 // pred_region
      _
    $region25: #{custom_model_forward.6} parent=1 // pred_fallthru
      _
    %v28 = vld [vmem:[%s0] sm:$0xff]
    %v29 = vld [vmem:[%s0 + $0x8] sm:$0xff]
    %v30 = vld [vmem:[%s1] sm:$0x1]
    %v31 = vld [vmem:[%s2] sm:$0x1]
    %vm32 = vcmask 261120
    %v33 = vsel %vm32, %v28, 0.0
    %34 = vadd.xlane.f32.xlu0 %v33
    %v35 = vpop.xlane.xlu0 %34
    %v36 = vsel %vm32, %v29, 0.0
    %37 = vadd.xlane.f32.xlu0 %v36
    %v38 = vpop.xlane.xlu0 %37
    %v39 = vrcp.pop 32.0
    %v40 = vmul.f32 %v35, %v39
    %v41 = vmul.f32 %v38, %v39
    %v42 = vsub.f32 %v28, %v40
    %v43 = vsub.f32 %v29, %v41
    %v44 = vmul.f32 %v42, %v42
    %v45 = vmul.f32 %v43, %v43
    %v46 = vsel %vm32, %v44, 0.0
    %47 = vadd.xlane.f32.xlu0 %v46
    %v48 = vpop.xlane.xlu0 %47
    %v49 = vsel %vm32, %v45, 0.0
    %50 = vadd.xlane.f32.xlu0 %v49
    %v51 = vpop.xlane.xlu0 %50
    %v52 = vmul.f32 %v48, %v39
    %v53 = vmul.f32 %v51, %v39
    %v54 = vadd.f32 %v52, 1e-05
    %v55 = vadd.f32 %v53, 1e-05
    %v56 = vrsqrt.pop %v54
    %v57 = vrsqrt.pop %v55
    %v58 = vmul.f32 %v42, %v56
    %v59 = vmul.f32 %v43, %v57
    %v61 = vlaneseq
    %v62 = vshrl.u32 %v61, 7
    %v63 = vsub.s32 0, %v62
    %v64 = vrot.slane %v30, %v63
    %v66 = vmul.f32 %v58, %v64
    %v67 = vmul.f32 %v59, %v64
    %v69 = vlaneseq
    %v70 = vshrl.u32 %v69, 7
    %v71 = vsub.s32 0, %v70
    %v72 = vrot.slane %v31, %v71
    %v74 = vadd.f32 %v66, %v72
    %v75 = vadd.f32 %v67, %v72
    %v76 = vld [vmem:[%s4] sm:$0x1]
    %v77 = vpack.c.bf16 %v75, %v74
    %v78 = vld [vmem:[%s3] sm:$0xf]
    %v79 = vld [vmem:[%s3 + $0x4] sm:$0xf]
    %v80 = vld [vmem:[%s3 + $0x8] sm:$0xf]
    %v81 = vld [vmem:[%s3 + $0xc] sm:$0xf]
    %v83 = vlaneseq
    %v84 = vshrl.u32 %v83, 7
    %v85 = vsub.s32 0, %v84
    %v86 = vrot.slane %v76, %v85
    %v92 = vunpack.c.l.b16 %v78
    %v93 = vunpack.c.l.b16 %v79
    %v94 = vunpack.c.l.b16 %v80
    %v95 = vunpack.c.l.b16 %v81
    %v96 = vpack.c.b16 %v93, %v92
    %v97 = vpack.c.b16 %v95, %v94
    %v101 = vsel %vm32, %v77, 0
    %103 = vmatprep.subr.bf16.mxu0 0
    %104 = vmatpush1.bf16.msra.mxu0 %v96
    %105 = vmatprep.subr.bf16.mxu0 0
    %106 = vmatpush1.bf16.msra.mxu0 %v97
    %107 = vmatprep.subr.bf16.mxu0 0
    %108 = vmatpush1.bf16.msra.mxu0 0
    %109 = vmatprep.subr.bf16.mxu0 0
    %110 = vmatpush1.bf16.msra.mxu0 0
    %111 = vmatprep.subr.bf16.mxu0 0
    %112 = vmatpush1.bf16.msra.mxu0 0
    %113 = vmatprep.subr.bf16.mxu0 0
    %114 = vmatpush1.bf16.msra.mxu0 0
    %115 = vmatprep.subr.bf16.mxu0 0
    %116 = vmatpush1.bf16.msra.mxu0 0
    %117 = vmatprep.subr.bf16.mxu0 0
    %118 = vmatpush1.bf16.msra.mxu0 0
    %119 = vmatprep.subr.bf16.mxu0 0
    %120 = vmatpush1.bf16.msra.mxu0 0
    %121 = vmatprep.subr.bf16.mxu0 0
    %122 = vmatpush1.bf16.msra.mxu0 0
    %123 = vmatprep.subr.bf16.mxu0 0
    %124 = vmatpush1.bf16.msra.mxu0 0
    %125 = vmatprep.subr.bf16.mxu0 0
    %126 = vmatpush1.bf16.msra.mxu0 0
    %127 = vmatprep.subr.bf16.mxu0 0
    %128 = vmatpush1.bf16.msra.mxu0 0
    %129 = vmatprep.subr.bf16.mxu0 0
    %130 = vmatpush1.bf16.msra.mxu0 0
    %131 = vmatprep.subr.bf16.mxu0 0
    %132 = vmatpush1.bf16.msra.mxu0 0
    %133 = vmatprep.subr.bf16.mxu0 0
    %134 = vmatpush1.bf16.msra.mxu0 0
    %135 = vmatprep.mubr.bf16.mxu0 0
    %136 = vmatmul.mubr.bf16.gmra.mrb[0].mxu0 %v101
    %v137 = vpop.f32.mrb[0].mxu0
    %v138 = vadd.f32 %v86, %v137
    %v139 = vpop.f32.mrb[0].mxu0
    %v140 = vpop.f32.mrb[0].mxu0
    %v141 = vadd.f32 %v86, %v140
    %v142 = vpop.f32.mrb[0].mxu0
    %143 = vdwg.mxu0
    %144 = vst [vmem:[#allocation2] sm:$0xff] %v138
    %145 = vst [vmem:[#allocation2 + $0x8] sm:$0xff] %v141
    %146 = vmax.xlane.f32.xlu0 %v138
    %v147 = vpop.xlane.xlu0 %146
    %148 = vmax.xlane.f32.xlu0 %v141
    %v149 = vpop.xlane.xlu0 %148
    %v150 = vsub.f32 %v138, %v147
    %v151 = vsub.f32 %v141, %v149
    %v152 = vmul.f32 %v150, 1.442695
    %v153 = vpow.pop %v152
    %v154 = vmul.f32 %v151, 1.442695
    %v155 = vpow.pop %v154
    %156 = vadd.xlane.f32.xlu0 %v153
    %v157 = vpop.xlane.xlu0 %156
    %158 = vadd.xlane.f32.xlu0 %v155
    %v159 = vpop.xlane.xlu0 %158
    %v160 = vlog2.pop %v157
    %v161 = vmul.f32 %v160, 0.6931472
    %v162 = vlog2.pop %v159
    %v163 = vmul.f32 %v162, 0.6931472
    %v164 = vsub.f32 %v150, %v161
    %v165 = vsub.f32 %v151, %v163
    %v166 = vld [vmem:[%s5] sm:$0xff]
    %v167 = vld [vmem:[%s5 + $0x8] sm:$0xff]
    %v168 = vmul.f32 %v166, %v164
    %v169 = vmul.f32 %v167, %v165
    %170 = vadd.xlane.f32.xlu0 %v168
    %v171 = vpop.xlane.xlu0 %170
    %172 = vadd.xlane.f32.xlu0 %v169
    %v173 = vpop.xlane.xlu0 %172
    %v174 = vsub.f32 0.0, %v171
    %v175 = vsub.f32 0.0, %v173
    %v176 = vadd.f32 %v174, %v175
    %v177 = vrot.slane %v176, 4
    %v178 = vadd.f32 %v176, %v177
    %v179 = vrot.slane %v178, 2
    %v180 = vadd.f32 %v178, %v179
    %v181 = vrot.slane %v180, 1
    %v182 = vadd.f32 %v180, %v181
    %v183 = vmul.f32 %v182, 0.071428575
    %vm184 = vcmask 0
    %185 = vst.msk [vmem:[#allocation4] sm:$0x1] %vm184, %v183
    // Predicated region
    $region26: #{custom_model_forward.6} parent=1 // pred_check
      _
    $region27: #{custom_model_forward.6} parent=1 // pred_check_branch
      %187 = sbr.rel (0) target = $region29
    $region28: #{custom_model_forward.6} parent=1 // pred_region
      %s189 = ssub.s32 256, 256
      %190 = vsyncadd [#allocation3], %s189
      %s191 = sshll.u32 [#allocation2], 4
      %s192 = int_to_ptr.vmem [resolvable:$true] %s191
      %197 = dma.vmem_to_hbm [thread:$0]  %s192, 256, %s6, [#allocation3], 128, 128, 8
    $region29: #{custom_model_forward.6} parent=1 // pred_fallthru
      _
    // Predicated region
    $region30: #{custom_model_forward.6} parent=1 // pred_check
      _
    $region31: #{custom_model_forward.6} parent=1 // pred_check_branch
      %199 = sbr.rel (0) target = $region33
    $region32: #{custom_model_forward.6} parent=1 // pred_region
      %s201 = ssub.s32 16, 16
      %202 = vsyncadd [#allocation5], %s201
      %s204 = sshll.u32 [#allocation4], 4
      %s205 = int_to_ptr.vmem [resolvable:$true] %s204
      %207 = dma.vmem_to_hbm [thread:$0]  %s205, 16, %s7, [#allocation5]
    $region33: #{custom_model_forward.6} parent=1 // pred_fallthru
      _
    // Predicated region
    $region34: #{custom_model_forward.6} parent=1 // pred_check
      _
    $region35: #{custom_model_forward.6} parent=1 // pred_check_branch
      %209 = sbr.rel (0) target = $region37
    $region36: #{custom_model_forward.6} parent=1 // pred_region
      %210 = dma.done [#allocation3], 256
    $region37: #{custom_model_forward.6} parent=1 // pred_fallthru
      _
    // Predicated region
    $region38: #{custom_model_forward.6} parent=1 // pred_check
      _
    $region39: #{custom_model_forward.6} parent=1 // pred_check_branch
      %212 = sbr.rel (0) target = $region41
    $region40: #{custom_model_forward.6} parent=1 // pred_region
      %213 = dma.done [#allocation5], 16
    $region41: #{custom_model_forward.6} parent=1 // pred_fallthru
      _
    %214 = vsyncpa [#allocation3], 1
    %215 = vsyncpa [#allocation5], 1

// kernel: custom_model_forward.7
$region0: #{custom_model_forward.7}
  #allocation0 [shape = 'u32[]', space=smem, size = 0x4, offset = 0x4, fixed_abs, tag = 'smem constant byte address 0x4 - core index']
  #allocation1 [shape = 'u32[144,128]{1,0:T(1,128)}', space=vmem, size = 0x12000, scoped, tag = 'internal scratch']
  %s0 = inlined_call_operand.vmem [shape: f32[2,32], index: 0, kind: input, shape index: {}]
  %s1 = inlined_call_operand.vmem [shape: f32[1,32], index: 1, kind: input, shape index: {}]
  %s2 = inlined_call_operand.vmem [shape: f32[1,32], index: 2, kind: input, shape index: {}]
  %s3 = inlined_call_operand.vmem [shape: bf16[32,128], index: 3, kind: input, shape index: {}]
  %s4 = inlined_call_operand.vmem [shape: f32[1,128], index: 4, kind: input, shape index: {}]
  %s5 = inlined_call_operand.vmem [shape: f32[2,128], index: 5, kind: input, shape index: {}]
  %s6 = inlined_call_operand.hbm [shape: f32[2,128], index: 6, kind: output, shape index: {0}]
  %s7 = inlined_call_operand.hbm [shape: f32[1,1], index: 7, kind: output, shape index: {1}]
  %8 = xla_tuple %s6, %s7
  %s9 = sld [smem:[#allocation0]]
  $region42: #{custom_model_forward.7} parent=0
    _
  %s11 = ssub.s32 1, %s9
  %s12 = scalar_select 0, %s11, %s9
  $region1: #{custom_model_forward.7} parent=0
    #allocation2 [shape = 'u8[1024]{0}', space=vmem, size = 0x400, scoped, tag = 'output window, operand 0, single buffered']
    #allocation3 [shape = 's32[1]{0}', space=sflag, size = 0x4, scoped, tag = 'scoped memory for custom_model_forward.7']
    #allocation4 [shape = 'u8[512]{0}', space=vmem, size = 0x400, scoped, tag = 'output window, operand 1, single buffered']
    #allocation5 [shape = 's32[1]{0}', space=sflag, size = 0x4, scoped, tag = 'scoped memory for custom_model_forward.7']
    %13 = vsyncpa [#allocation3], 0
    %14 = vsyncpa [#allocation5], 0
    // Predicated region
    $region2: #{custom_model_forward.7} parent=1 // pred_check
      _
    $region3: #{custom_model_forward.7} parent=1 // pred_check_branch
      %16 = sbr.rel (0) target = $region5
    $region4: #{custom_model_forward.7} parent=1 // pred_region
      _
    $region5: #{custom_model_forward.7} parent=1 // pred_fallthru
      _
    // Predicated region
    $region6: #{custom_model_forward.7} parent=1 // pred_check
      _
    $region7: #{custom_model_forward.7} parent=1 // pred_check_branch
      %18 = sbr.rel (0) target = $region9
    $region8: #{custom_model_forward.7} parent=1 // pred_region
      _
    $region9: #{custom_model_forward.7} parent=1 // pred_fallthru
      _
    // Predicated region
    $region10: #{custom_model_forward.7} parent=1 // pred_check
      _
    $region11: #{custom_model_forward.7} parent=1 // pred_check_branch
      %20 = sbr.rel (0) target = $region13
    $region12: #{custom_model_forward.7} parent=1 // pred_region
      _
    $region13: #{custom_model_forward.7} parent=1 // pred_fallthru
      _
    // Predicated region
    $region14: #{custom_model_forward.7} parent=1 // pred_check
      _
    $region15: #{custom_model_forward.7} parent=1 // pred_check_branch
      %22 = sbr.rel (0) target = $region17
    $region16: #{custom_model_forward.7} parent=1 // pred_region
      _
    $region17: #{custom_model_forward.7} parent=1 // pred_fallthru
      _
    // Predicated region
    $region18: #{custom_model_forward.7} parent=1 // pred_check
      _
    $region19: #{custom_model_forward.7} parent=1 // pred_check_branch
      %24 = sbr.rel (0) target = $region21
    $region20: #{custom_model_forward.7} parent=1 // pred_region
      _
    $region21: #{custom_model_forward.7} parent=1 // pred_fallthru
      _
    // Predicated region
    $region22: #{custom_model_forward.7} parent=1 // pred_check
      _
    $region23: #{custom_model_forward.7} parent=1 // pred_check_branch
      %26 = sbr.rel (0) target = $region25
    $region24: #{custom_model_forward.7} parent=1 // pred_region
      _
    $region25: #{custom_model_forward.7} parent=1 // pred_fallthru
      _
    %v28 = vld [vmem:[%s0] sm:$0x3]
    %v29 = vld [vmem:[%s4] sm:$0x1]
    %v30 = vpack.c.bf16 %v28, %v28
    %v31 = vld [vmem:[%s3] sm:$0xf]
    %v32 = vld [vmem:[%s3 + $0x4] sm:$0xf]
    %v33 = vld [vmem:[%s3 + $0x8] sm:$0xf]
    %v34 = vld [vmem:[%s3 + $0xc] sm:$0xf]
    %v36 = vlaneseq
    %v37 = vshrl.u32 %v36, 7
    %v38 = vsub.s32 0, %v37
    %v39 = vrot.slane %v29, %v38
    %v45 = vunpack.c.l.b16 %v31
    %v46 = vunpack.c.l.b16 %v32
    %v47 = vunpack.c.l.b16 %v33
    %v48 = vunpack.c.l.b16 %v34
    %v49 = vpack.c.b16 %v46, %v45
    %v50 = vpack.c.b16 %v48, %v47
    %vm53 = vcmask 261120
    %v55 = vsel %vm53, %v30, 0
    %57 = vmatprep.subr.bf16.mxu0 0
    %58 = vmatpush1.bf16.msra.mxu0 %v49
    %59 = vmatprep.subr.bf16.mxu0 0
    %60 = vmatpush1.bf16.msra.mxu0 %v50
    %61 = vmatprep.subr.bf16.mxu0 0
    %62 = vmatpush1.bf16.msra.mxu0 0
    %63 = vmatprep.subr.bf16.mxu0 0
    %64 = vmatpush1.bf16.msra.mxu0 0
    %65 = vmatprep.subr.bf16.mxu0 0
    %66 = vmatpush1.bf16.msra.mxu0 0
    %67 = vmatprep.subr.bf16.mxu0 0
    %68 = vmatpush1.bf16.msra.mxu0 0
    %69 = vmatprep.subr.bf16.mxu0 0
    %70 = vmatpush1.bf16.msra.mxu0 0
    %71 = vmatprep.subr.bf16.mxu0 0
    %72 = vmatpush1.bf16.msra.mxu0 0
    %73 = vmatprep.subr.bf16.mxu0 0
    %74 = vmatpush1.bf16.msra.mxu0 0
    %75 = vmatprep.subr.bf16.mxu0 0
    %76 = vmatpush1.bf16.msra.mxu0 0
    %77 = vmatprep.subr.bf16.mxu0 0
    %78 = vmatpush1.bf16.msra.mxu0 0
    %79 = vmatprep.subr.bf16.mxu0 0
    %80 = vmatpush1.bf16.msra.mxu0 0
    %81 = vmatprep.subr.bf16.mxu0 0
    %82 = vmatpush1.bf16.msra.mxu0 0
    %83 = vmatprep.subr.bf16.mxu0 0
    %84 = vmatpush1.bf16.msra.mxu0 0
    %85 = vmatprep.subr.bf16.mxu0 0
    %86 = vmatpush1.bf16.msra.mxu0 0
    %87 = vmatprep.subr.bf16.mxu0 0
    %88 = vmatpush1.bf16.msra.mxu0 0
    %89 = vmatprep.mubr.bf16.mxu0 0
    %90 = vmatmul.mubr.bf16.gmra.mrb[0].mxu0 %v55
    %v91 = vpop.f32.mrb[0].mxu0
    %v92 = vadd.f32 %v39, %v91
    %v93 = vpop.f32.mrb[0].mxu0
    %v94 = vpop.f32.mrb[0].mxu0
    %v95 = vpop.f32.mrb[0].mxu0
    %96 = vdwg.mxu0
    %97 = vst [vmem:[#allocation2] sm:$0x3] %v92
    %vm98 = vcmask 1041408
    %v99 = vsel %vm98, %v92, -inf
    %100 = vmax.xlane.f32.xlu0 %v99
    %v101 = vpop.xlane.xlu0 %100
    %v102 = vsub.f32 %v92, %v101
    %v103 = vmul.f32 %v102, 1.442695
    %v104 = vpow.pop %v103
    %v105 = vsel %vm98, %v104, 0.0
    %106 = vadd.xlane.f32.xlu0 %v105
    %v107 = vpop.xlane.xlu0 %106
    %v108 = vlog2.pop %v107
    %v109 = vmul.f32 %v108, 0.6931472
    %v110 = vsub.f32 %v102, %v109
    %v111 = vld [vmem:[%s5] sm:$0x3]
    %v112 = vmul.f32 %v111, %v110
    %v113 = vsel %vm98, %v112, 0.0
    %114 = vadd.xlane.f32.xlu0 %v113
    %v115 = vpop.xlane.xlu0 %114
    %v116 = vsub.f32 0.0, %v115
    %v117 = vsel %vm98, %v116, 0.0
    %v118 = vrot.slane %v117, 4
    %v119 = vadd.f32 %v117, %v118
    %v120 = vrot.slane %v119, 2
    %v121 = vadd.f32 %v119, %v120
    %v122 = vrot.slane %v121, 1
    %v123 = vadd.f32 %v121, %v122
    %v124 = vmul.f32 %v123, 0.5
    %vm125 = vcmask 0
    %126 = vst.msk [vmem:[#allocation4] sm:$0x1] %vm125, %v124
    // Predicated region
    $region26: #{custom_model_forward.7} parent=1 // pred_check
      _
    $region27: #{custom_model_forward.7} parent=1 // pred_check_branch
      %128 = sbr.rel (0) target = $region29
    $region28: #{custom_model_forward.7} parent=1 // pred_region
      %s130 = ssub.s32 32, 32
      %131 = vsyncadd [#allocation3], %s130
      %s133 = sshll.u32 [#allocation2], 4
      %s134 = int_to_ptr.vmem [resolvable:$true] %s133
      %136 = dma.vmem_to_hbm [thread:$0]  %s134, 32, %s6, [#allocation3]
    $region29: #{custom_model_forward.7} parent=1 // pred_fallthru
      _
    // Predicated region
    $region30: #{custom_model_forward.7} parent=1 // pred_check
      _
    $region31: #{custom_model_forward.7} parent=1 // pred_check_branch
      %138 = sbr.rel (0) target = $region33
    $region32: #{custom_model_forward.7} parent=1 // pred_region
      %s140 = ssub.s32 16, 16
      %141 = vsyncadd [#allocation5], %s140
      %s143 = sshll.u32 [#allocation4], 4
      %s144 = int_to_ptr.vmem [resolvable:$true] %s143
      %146 = dma.vmem_to_hbm [thread:$0]  %s144, 16, %s7, [#allocation5]
    $region33: #{custom_model_forward.7} parent=1 // pred_fallthru
      _
    // Predicated region
    $region34: #{custom_model_forward.7} parent=1 // pred_check
      _
    $region35: #{custom_model_forward.7} parent=1 // pred_check_branch
      %148 = sbr.rel (0) target = $region37
    $region36: #{custom_model_forward.7} parent=1 // pred_region
      %149 = dma.done [#allocation3], 32
    $region37: #{custom_model_forward.7} parent=1 // pred_fallthru
      _
    // Predicated region
    $region38: #{custom_model_forward.7} parent=1 // pred_check
      _
    $region39: #{custom_model_forward.7} parent=1 // pred_check_branch
      %151 = sbr.rel (0) target = $region41
    $region40: #{custom_model_forward.7} parent=1 // pred_region
      %152 = dma.done [#allocation5], 16
    $region41: #{custom_model_forward.7} parent=1 // pred_fallthru
      _
    %153 = vsyncpa [#allocation3], 1
    %154 = vsyncpa [#allocation5], 1

// kernel: custom_model_forward.4
$region0: #{custom_model_forward.4}
  #allocation0 [shape = 'u32[]', space=smem, size = 0x4, offset = 0x4, fixed_abs, tag = 'smem constant byte address 0x4 - core index']
  #allocation1 [shape = 'u32[144,128]{1,0:T(1,128)}', space=vmem, size = 0x12000, scoped, tag = 'internal scratch']
  %s0 = inlined_call_operand.vmem [shape: f32[2,8,32], index: 0, kind: input, shape index: {}]
  %s1 = inlined_call_operand.vmem [shape: f32[2,8,8], index: 1, kind: input, shape index: {}]
  %s2 = inlined_call_operand.vmem [shape: f32[1,32], index: 2, kind: input, shape index: {}]
  %s3 = inlined_call_operand.vmem [shape: f32[1,32], index: 3, kind: input, shape index: {}]
  %s4 = inlined_call_operand.vmem [shape: bf16[32,96], index: 4, kind: input, shape index: {}]
  %s5 = inlined_call_operand.vmem [shape: f32[1,96], index: 5, kind: input, shape index: {}]
  %s6 = inlined_call_operand.vmem [shape: bf16[32,32], index: 6, kind: input, shape index: {}]
  %s7 = inlined_call_operand.vmem [shape: f32[1,32], index: 7, kind: input, shape index: {}]
  %s8 = inlined_call_operand.vmem [shape: f32[1,32], index: 8, kind: input, shape index: {}]
  %s9 = inlined_call_operand.vmem [shape: f32[1,32], index: 9, kind: input, shape index: {}]
  %s10 = inlined_call_operand.vmem [shape: bf16[32,64], index: 10, kind: input, shape index: {}]
  %s11 = inlined_call_operand.vmem [shape: f32[1,64], index: 11, kind: input, shape index: {}]
  %s12 = inlined_call_operand.vmem [shape: bf16[64,32], index: 12, kind: input, shape index: {}]
  %s13 = inlined_call_operand.vmem [shape: f32[1,32], index: 13, kind: input, shape index: {}]
  %s14 = inlined_call_operand.vmem [shape: f32[1,32], index: 14, kind: input, shape index: {}]
  %s15 = inlined_call_operand.vmem [shape: f32[1,32], index: 15, kind: input, shape index: {}]
  %s16 = inlined_call_operand.vmem [shape: f32[2,8,32], index: 16, kind: output, shape index: {}]
  %s17 = sld [smem:[#allocation0]]
  $region74: #{custom_model_forward.4} parent=0
    _
  %s19 = ssub.s32 1, %s17
  %s20 = scalar_select 0, %s19, %s17
  // Predicated region
  $region2: #{custom_model_forward.4} parent=0 // pred_check
    _
  $region3: #{custom_model_forward.4} parent=0 // pred_check_branch
    %22 = sbr.rel (0) target = $region5
  $region4: #{custom_model_forward.4} parent=0 // pred_region
    _
  $region5: #{custom_model_forward.4} parent=0 // pred_fallthru
    _
  // Predicated region
  $region6: #{custom_model_forward.4} parent=0 // pred_check
    _
  $region7: #{custom_model_forward.4} parent=0 // pred_check_branch
    %24 = sbr.rel (0) target = $region9
  $region8: #{custom_model_forward.4} parent=0 // pred_region
    _
  $region9: #{custom_model_forward.4} parent=0 // pred_fallthru
    _
  // Predicated region
  $region10: #{custom_model_forward.4} parent=0 // pred_check
    _
  $region11: #{custom_model_forward.4} parent=0 // pred_check_branch
    %26 = sbr.rel (0) target = $region13
  $region12: #{custom_model_forward.4} parent=0 // pred_region
    _
  $region13: #{custom_model_forward.4} parent=0 // pred_fallthru
    _
  // Predicated region
  $region14: #{custom_model_forward.4} parent=0 // pred_check
    _
  $region15: #{custom_model_forward.4} parent=0 // pred_check_branch
    %28 = sbr.rel (0) target = $region17
  $region16: #{custom_model_forward.4} parent=0 // pred_region
    _
  $region17: #{custom_model_forward.4} parent=0 // pred_fallthru
    _
  // Predicated region
  $region18: #{custom_model_forward.4} parent=0 // pred_check
    _
  $region19: #{custom_model_forward.4} parent=0 // pred_check_branch
    %30 = sbr.rel (0) target = $region21
  $region20: #{custom_model_forward.4} parent=0 // pred_region
    _
  $region21: #{custom_model_forward.4} parent=0 // pred_fallthru
    _
  // Predicated region
  $region22: #{custom_model_forward.4} parent=0 // pred_check
    _
  $region23: #{custom_model_forward.4} parent=0 // pred_check_branch
    %32 = sbr.rel (0) target = $region25
  $region24: #{custom_model_forward.4} parent=0 // pred_region
    _
  $region25: #{custom_model_forward.4} parent=0 // pred_fallthru
    _
  // Predicated region
  $region26: #{custom_model_forward.4} parent=0 // pred_check
    _
  $region27: #{custom_model_forward.4} parent=0 // pred_check_branch
    %34 = sbr.rel (0) target = $region29
  $region28: #{custom_model_forward.4} parent=0 // pred_region
    _
  $region29: #{custom_model_forward.4} parent=0 // pred_fallthru
    _
  // Predicated region
  $region30: #{custom_model_forward.4} parent=0 // pred_check
    _
  $region31: #{custom_model_forward.4} parent=0 // pred_check_branch
    %36 = sbr.rel (0) target = $region33
  $region32: #{custom_model_forward.4} parent=0 // pred_region
    _
  $region33: #{custom_model_forward.4} parent=0 // pred_fallthru
    _
  // Predicated region
  $region34: #{custom_model_forward.4} parent=0 // pred_check
    _
  $region35: #{custom_model_forward.4} parent=0 // pred_check_branch
    %38 = sbr.rel (0) target = $region37
  $region36: #{custom_model_forward.4} parent=0 // pred_region
    _
  $region37: #{custom_model_forward.4} parent=0 // pred_fallthru
    _
  // Predicated region
  $region38: #{custom_model_forward.4} parent=0 // pred_check
    _
  $region39: #{custom_model_forward.4} parent=0 // pred_check_branch
    %40 = sbr.rel (0) target = $region41
  $region40: #{custom_model_forward.4} parent=0 // pred_region
    _
  $region41: #{custom_model_forward.4} parent=0 // pred_fallthru
    _
  // Predicated region
  $region42: #{custom_model_forward.4} parent=0 // pred_check
    _
  $region43: #{custom_model_forward.4} parent=0 // pred_check_branch
    %42 = sbr.rel (0) target = $region45
  $region44: #{custom_model_forward.4} parent=0 // pred_region
    _
  $region45: #{custom_model_forward.4} parent=0 // pred_fallthru
    _
  // Predicated region
  $region46: #{custom_model_forward.4} parent=0 // pred_check
    _
  $region47: #{custom_model_forward.4} parent=0 // pred_check_branch
    %44 = sbr.rel (0) target = $region49
  $region48: #{custom_model_forward.4} parent=0 // pred_region
    _
  $region49: #{custom_model_forward.4} parent=0 // pred_fallthru
    _
  // Predicated region
  $region50: #{custom_model_forward.4} parent=0 // pred_check
    _
  $region51: #{custom_model_forward.4} parent=0 // pred_check_branch
    %46 = sbr.rel (0) target = $region53
  $region52: #{custom_model_forward.4} parent=0 // pred_region
    _
  $region53: #{custom_model_forward.4} parent=0 // pred_fallthru
    _
  // Predicated region
  $region54: #{custom_model_forward.4} parent=0 // pred_check
    _
  $region55: #{custom_model_forward.4} parent=0 // pred_check_branch
    %48 = sbr.rel (0) target = $region57
  $region56: #{custom_model_forward.4} parent=0 // pred_region
    _
  $region57: #{custom_model_forward.4} parent=0 // pred_fallthru
    _
  // Predicated region
  $region58: #{custom_model_forward.4} parent=0 // pred_check
    _
  $region59: #{custom_model_forward.4} parent=0 // pred_check_branch
    %50 = sbr.rel (0) target = $region61
  $region60: #{custom_model_forward.4} parent=0 // pred_region
    _
  $region61: #{custom_model_forward.4} parent=0 // pred_fallthru
    _
  // Predicated region
  $region62: #{custom_model_forward.4} parent=0 // pred_check
    _
  $region63: #{custom_model_forward.4} parent=0 // pred_check_branch
    %52 = sbr.rel (0) target = $region65
  $region64: #{custom_model_forward.4} parent=0 // pred_region
    _
  $region65: #{custom_model_forward.4} parent=0 // pred_fallthru
    _
  %v54 = vld [vmem:[%s0] sm:$0xff]
  %v55 = vld [vmem:[%s0 + $0x8] sm:$0xff]
  %v56 = vld [vmem:[%s2] sm:$0x1]
  %v57 = vld [vmem:[%s3] sm:$0x1]
  %vm58 = vcmask 261120
  %v59 = vsel %vm58, %v54, 0.0
  %60 = vadd.xlane.f32.xlu0 %v59
  %v61 = vpop.xlane.xlu0 %60
  %v62 = vsel %vm58, %v55, 0.0
  %63 = vadd.xlane.f32.xlu0 %v62
  %v64 = vpop.xlane.xlu0 %63
  %v65 = vrcp.pop 32.0
  %v66 = vmul.f32 %v61, %v65
  %v67 = vmul.f32 %v64, %v65
  %v68 = vsub.f32 %v54, %v66
  %v69 = vsub.f32 %v55, %v67
  %v70 = vmul.f32 %v68, %v68
  %v71 = vmul.f32 %v69, %v69
  %v72 = vsel %vm58, %v70, 0.0
  %73 = vadd.xlane.f32.xlu0 %v72
  %v74 = vpop.xlane.xlu0 %73
  %v75 = vsel %vm58, %v71, 0.0
  %76 = vadd.xlane.f32.xlu0 %v75
  %v77 = vpop.xlane.xlu0 %76
  %v78 = vmul.f32 %v74, %v65
  %v79 = vmul.f32 %v77, %v65
  %v80 = vadd.f32 %v78, 1e-05
  %v81 = vadd.f32 %v79, 1e-05
  %v82 = vrsqrt.pop %v80
  %v83 = vrsqrt.pop %v81
  %v84 = vmul.f32 %v68, %v82
  %v85 = vmul.f32 %v69, %v83
  %v87 = vlaneseq
  %v88 = vshrl.u32 %v87, 7
  %v89 = vsub.s32 0, %v88
  %v90 = vrot.slane %v56, %v89
  %v92 = vmul.f32 %v84, %v90
  %v93 = vmul.f32 %v85, %v90
  %v95 = vlaneseq
  %v96 = vshrl.u32 %v95, 7
  %v97 = vsub.s32 0, %v96
  %v98 = vrot.slane %v57, %v97
  %v100 = vadd.f32 %v92, %v98
  %v101 = vadd.f32 %v93, %v98
  %v102 = vld [vmem:[%s1] sm:$0xff]
  %v103 = vld [vmem:[%s1 + $0x8] sm:$0xff]
  %v104 = vld [vmem:[%s5] sm:$0x1]
  %v105 = vpack.c.bf16 %v101, %v100
  %v106 = vld [vmem:[%s4] sm:$0xf]
  %v107 = vld [vmem:[%s4 + $0x4] sm:$0xf]
  %v108 = vld [vmem:[%s4 + $0x8] sm:$0xf]
  %v109 = vld [vmem:[%s4 + $0xc] sm:$0xf]
  %v111 = vlaneseq
  %v112 = vshrl.u32 %v111, 7
  %v113 = vsub.s32 0, %v112
  %v114 = vrot.slane %v104, %v113
  %v120 = vunpack.c.l.b16 %v106
  %v121 = vunpack.c.l.b16 %v107
  %v122 = vunpack.c.l.b16 %v108
  %v123 = vunpack.c.l.b16 %v109
  %v124 = vpack.c.b16 %v121, %v120
  %v125 = vpack.c.b16 %v123, %v122
  %v129 = vsel %vm58, %v105, 0
  %131 = vmatprep.subr.bf16.mxu0 0
  %132 = vmatpush1.bf16.msra.mxu0 %v124
  %133 = vmatprep.subr.bf16.mxu0 0
  %134 = vmatpush1.bf16.msra.mxu0 %v125
  %135 = vmatprep.subr.bf16.mxu0 0
  %136 = vmatpush1.bf16.msra.mxu0 0
  %137 = vmatprep.subr.bf16.mxu0 0
  %138 = vmatpush1.bf16.msra.mxu0 0
  %139 = vmatprep.subr.bf16.mxu0 0
  %140 = vmatpush1.bf16.msra.mxu0 0
  %141 = vmatprep.subr.bf16.mxu0 0
  %142 = vmatpush1.bf16.msra.mxu0 0
  %143 = vmatprep.subr.bf16.mxu0 0
  %144 = vmatpush1.bf16.msra.mxu0 0
  %145 = vmatprep.subr.bf16.mxu0 0
  %146 = vmatpush1.bf16.msra.mxu0 0
  %147 = vmatprep.subr.bf16.mxu0 0
  %148 = vmatpush1.bf16.msra.mxu0 0
  %149 = vmatprep.subr.bf16.mxu0 0
  %150 = vmatpush1.bf16.msra.mxu0 0
  %151 = vmatprep.subr.bf16.mxu0 0
  %152 = vmatpush1.bf16.msra.mxu0 0
  %153 = vmatprep.subr.bf16.mxu0 0
  %154 = vmatpush1.bf16.msra.mxu0 0
  %155 = vmatprep.subr.bf16.mxu0 0
  %156 = vmatpush1.bf16.msra.mxu0 0
  %157 = vmatprep.subr.bf16.mxu0 0
  %158 = vmatpush1.bf16.msra.mxu0 0
  %159 = vmatprep.subr.bf16.mxu0 0
  %160 = vmatpush1.bf16.msra.mxu0 0
  %161 = vmatprep.subr.bf16.mxu0 0
  %162 = vmatpush1.bf16.msra.mxu0 0
  %163 = vmatprep.mubr.bf16.mxu0 0
  %164 = vmatmul.mubr.bf16.gmra.mrb[0].mxu0 %v129
  %v165 = vpop.f32.mrb[0].mxu0
  %v166 = vadd.f32 %v114, %v165
  %v167 = vpop.f32.mrb[0].mxu0
  %v168 = vpop.f32.mrb[0].mxu0
  %v169 = vadd.f32 %v114, %v168
  %v170 = vpop.f32.mrb[0].mxu0
  %171 = vdwg.mxu0
  %v172 = vld [vmem:[%s7] sm:$0x1]
  %v174 = vlaneseq
  %v175 = vshrl.u32 %v174, 7
  %v176 = vsub.s32 0, %v175
  %v177 = vrot.slane %v172, %v176
  %v179 = vpack.c.bf16 %v166, %v166
  %v180 = vpack.c.bf16 %v169, %v169
  %182 = vrot.lane.b32.xlu0 %v179, 96
  %v183 = vpop.permute.xlu0 %182
  %vm184 = vcmask 130048
  %v186 = vsel %vm184, %v179, 0
  %v189 = vsel %vm184, %v183, 0
  %191 = vmatprep.subr.bf16.mxu0 0
  %192 = vmatpush1.bf16.xpose.msra.mxu0 %v189
  %193 = vmatprep.subr.bf16.mxu0 0
  %194 = vmatpush1.bf16.xpose.msra.mxu0 0
  %195 = vmatprep.subr.bf16.mxu0 0
  %196 = vmatpush1.bf16.xpose.msra.mxu0 0
  %197 = vmatprep.subr.bf16.mxu0 0
  %198 = vmatpush1.bf16.xpose.msra.mxu0 0
  %199 = vmatprep.subr.bf16.mxu0 0
  %200 = vmatpush1.bf16.xpose.msra.mxu0 0
  %201 = vmatprep.subr.bf16.mxu0 0
  %202 = vmatpush1.bf16.xpose.msra.mxu0 0
  %203 = vmatprep.subr.bf16.mxu0 0
  %204 = vmatpush1.bf16.xpose.msra.mxu0 0
  %205 = vmatprep.subr.bf16.mxu0 0
  %206 = vmatpush1.bf16.xpose.msra.mxu0 0
  %207 = vmatprep.subr.bf16.mxu0 0
  %208 = vmatpush1.bf16.xpose.msra.mxu0 0
  %209 = vmatprep.subr.bf16.mxu0 0
  %210 = vmatpush1.bf16.xpose.msra.mxu0 0
  %211 = vmatprep.subr.bf16.mxu0 0
  %212 = vmatpush1.bf16.xpose.msra.mxu0 0
  %213 = vmatprep.subr.bf16.mxu0 0
  %214 = vmatpush1.bf16.xpose.msra.mxu0 0
  %215 = vmatprep.subr.bf16.mxu0 0
  %216 = vmatpush1.bf16.xpose.msra.mxu0 0
  %217 = vmatprep.subr.bf16.mxu0 0
  %218 = vmatpush1.bf16.xpose.msra.mxu0 0
  %219 = vmatprep.subr.bf16.mxu0 0
  %220 = vmatpush1.bf16.xpose.msra.mxu0 0
  %221 = vmatprep.subr.bf16.mxu0 0
  %222 = vmatpush1.bf16.xpose.msra.mxu0 0
  %223 = vmatprep.mubr.bf16.mxu0 0
  %224 = vmatmul.mubr.bf16.gmra.mrb[0].mxu0 %v186
  %v225 = vpop.f32.mrb[0].mxu0
  %v226 = vadd.f32 0.0, %v225
  %v227 = vpop.f32.mrb[0].mxu0
  %v228 = vpop.f32.mrb[0].mxu0
  %v229 = vpop.f32.mrb[0].mxu0
  %230 = vdwg.mxu0
  %232 = vrot.lane.b32.xlu0 %v180, 96
  %v233 = vpop.permute.xlu0 %232
  %v235 = vsel %vm184, %v180, 0
  %v238 = vsel %vm184, %v233, 0
  %240 = vmatprep.subr.bf16.mxu0 0
  %241 = vmatpush1.bf16.xpose.msra.mxu0 %v238
  %242 = vmatprep.subr.bf16.mxu0 0
  %243 = vmatpush1.bf16.xpose.msra.mxu0 0
  %244 = vmatprep.subr.bf16.mxu0 0
  %245 = vmatpush1.bf16.xpose.msra.mxu0 0
  %246 = vmatprep.subr.bf16.mxu0 0
  %247 = vmatpush1.bf16.xpose.msra.mxu0 0
  %248 = vmatprep.subr.bf16.mxu0 0
  %249 = vmatpush1.bf16.xpose.msra.mxu0 0
  %250 = vmatprep.subr.bf16.mxu0 0
  %251 = vmatpush1.bf16.xpose.msra.mxu0 0
  %252 = vmatprep.subr.bf16.mxu0 0
  %253 = vmatpush1.bf16.xpose.msra.mxu0 0
  %254 = vmatprep.subr.bf16.mxu0 0
  %255 = vmatpush1.bf16.xpose.msra.mxu0 0
  %256 = vmatprep.subr.bf16.mxu0 0
  %257 = vmatpush1.bf16.xpose.msra.mxu0 0
  %258 = vmatprep.subr.bf16.mxu0 0
  %259 = vmatpush1.bf16.xpose.msra.mxu0 0
  %260 = vmatprep.subr.bf16.mxu0 0
  %261 = vmatpush1.bf16.xpose.msra.mxu0 0
  %262 = vmatprep.subr.bf16.mxu0 0
  %263 = vmatpush1.bf16.xpose.msra.mxu0 0
  %264 = vmatprep.subr.bf16.mxu0 0
  %265 = vmatpush1.bf16.xpose.msra.mxu0 0
  %266 = vmatprep.subr.bf16.mxu0 0
  %267 = vmatpush1.bf16.xpose.msra.mxu0 0
  %268 = vmatprep.subr.bf16.mxu0 0
  %269 = vmatpush1.bf16.xpose.msra.mxu0 0
  %270 = vmatprep.subr.bf16.mxu0 0
  %271 = vmatpush1.bf16.xpose.msra.mxu0 0
  %272 = vmatprep.mubr.bf16.mxu0 0
  %273 = vmatmul.mubr.bf16.gmra.mrb[0].mxu0 %v235
  %v274 = vpop.f32.mrb[0].mxu0
  %v275 = vadd.f32 0.0, %v274
  %v276 = vpop.f32.mrb[0].mxu0
  %v277 = vpop.f32.mrb[0].mxu0
  %v278 = vpop.f32.mrb[0].mxu0
  %279 = vdwg.mxu0
  %v280 = vmul.f32 %v226, 0.25
  %v281 = vmul.f32 %v275, 0.25
  %v282 = vadd.f32 %v280, %v102
  %v283 = vadd.f32 %v281, %v103
  %vm284 = vcmask 64512
  %v285 = vsel %vm284, %v282, -inf
  %286 = vmax.xlane.f32.xlu0 %v285
  %v287 = vpop.xlane.xlu0 %286
  %v288 = vsel %vm284, %v283, -inf
  %289 = vmax.xlane.f32.xlu0 %v288
  %v290 = vpop.xlane.xlu0 %289
  %v291 = vsub.f32 %v282, %v287
  %v292 = vsub.f32 %v283, %v290
  %v293 = vmul.f32 %v291, 1.442695
  %v294 = vpow.pop %v293
  %v295 = vmul.f32 %v292, 1.442695
  %v296 = vpow.pop %v295
  %v297 = vsel %vm284, %v294, 0.0
  %298 = vadd.xlane.f32.xlu0 %v297
  %v299 = vpop.xlane.xlu0 %298
  %v300 = vsel %vm284, %v296, 0.0
  %301 = vadd.xlane.f32.xlu0 %v300
  %v302 = vpop.xlane.xlu0 %301
  %v303 = vrcp.pop %v299
  %v304 = vrcp.pop %v302
  %v305 = vmul.f32 %v294, %v303
  %v306 = vmul.f32 %v296, %v304
  %v307 = vpack.c.bf16 %v305, %v305
  %v308 = vpack.c.bf16 %v306, %v306
  %309 = vrot.lane.b32.xlu0 %v179, 64
  %v310 = vpop.permute.xlu0 %309
  %v312 = vsel %vm284, %v307, 0
  %vm314 = vcmask 1043456
  %v316 = vsel %vm314, %v310, 0
  %318 = vmatprep.subr.bf16.mxu0 0
  %319 = vmatpush1.bf16.msra.mxu0 %v316
  %320 = vmatprep.subr.bf16.mxu0 0
  %321 = vmatpush1.bf16.msra.mxu0 0
  %322 = vmatprep.subr.bf16.mxu0 0
  %323 = vmatpush1.bf16.msra.mxu0 0
  %324 = vmatprep.subr.bf16.mxu0 0
  %325 = vmatpush1.bf16.msra.mxu0 0
  %326 = vmatprep.subr.bf16.mxu0 0
  %327 = vmatpush1.bf16.msra.mxu0 0
  %328 = vmatprep.subr.bf16.mxu0 0
  %329 = vmatpush1.bf16.msra.mxu0 0
  %330 = vmatprep.subr.bf16.mxu0 0
  %331 = vmatpush1.bf16.msra.mxu0 0
  %332 = vmatprep.subr.bf16.mxu0 0
  %333 = vmatpush1.bf16.msra.mxu0 0
  %334 = vmatprep.subr.bf16.mxu0 0
  %335 = vmatpush1.bf16.msra.mxu0 0
  %336 = vmatprep.subr.bf16.mxu0 0
  %337 = vmatpush1.bf16.msra.mxu0 0
  %338 = vmatprep.subr.bf16.mxu0 0
  %339 = vmatpush1.bf16.msra.mxu0 0
  %340 = vmatprep.subr.bf16.mxu0 0
  %341 = vmatpush1.bf16.msra.mxu0 0
  %342 = vmatprep.subr.bf16.mxu0 0
  %343 = vmatpush1.bf16.msra.mxu0 0
  %344 = vmatprep.subr.bf16.mxu0 0
  %345 = vmatpush1.bf16.msra.mxu0 0
  %346 = vmatprep.subr.bf16.mxu0 0
  %347 = vmatpush1.bf16.msra.mxu0 0
  %348 = vmatprep.subr.bf16.mxu0 0
  %349 = vmatpush1.bf16.msra.mxu0 0
  %350 = vmatprep.mubr.bf16.mxu0 0
  %351 = vmatmul.mubr.bf16.gmra.mrb[0].mxu0 %v312
  %v352 = vpop.f32.mrb[0].mxu0
  %v353 = vadd.f32 0.0, %v352
  %v354 = vpop.f32.mrb[0].mxu0
  %v355 = vpop.f32.mrb[0].mxu0
  %v356 = vpop.f32.mrb[0].mxu0
  %357 = vdwg.mxu0
  %358 = vrot.lane.b32.xlu0 %v180, 64
  %v359 = vpop.permute.xlu0 %358
  %v361 = vsel %vm284, %v308, 0
  %v364 = vsel %vm314, %v359, 0
  %366 = vmatprep.subr.bf16.mxu0 0
  %367 = vmatpush1.bf16.msra.mxu0 %v364
  %368 = vmatprep.subr.bf16.mxu0 0
  %369 = vmatpush1.bf16.msra.mxu0 0
  %370 = vmatprep.subr.bf16.mxu0 0
  %371 = vmatpush1.bf16.msra.mxu0 0
  %372 = vmatprep.subr.bf16.mxu0 0
  %373 = vmatpush1.bf16.msra.mxu0 0
  %374 = vmatprep.subr.bf16.mxu0 0
  %375 = vmatpush1.bf16.msra.mxu0 0
  %376 = vmatprep.subr.bf16.mxu0 0
  %377 = vmatpush1.bf16.msra.mxu0 0
  %378 = vmatprep.subr.bf16.mxu0 0
  %379 = vmatpush1.bf16.msra.mxu0 0
  %380 = vmatprep.subr.bf16.mxu0 0
  %381 = vmatpush1.bf16.msra.mxu0 0
  %382 = vmatprep.subr.bf16.mxu0 0
  %383 = vmatpush1.bf16.msra.mxu0 0
  %384 = vmatprep.subr.bf16.mxu0 0
  %385 = vmatpush1.bf16.msra.mxu0 0
  %386 = vmatprep.subr.bf16.mxu0 0
  %387 = vmatpush1.bf16.msra.mxu0 0
  %388 = vmatprep.subr.bf16.mxu0 0
  %389 = vmatpush1.bf16.msra.mxu0 0
  %390 = vmatprep.subr.bf16.mxu0 0
  %391 = vmatpush1.bf16.msra.mxu0 0
  %392 = vmatprep.subr.bf16.mxu0 0
  %393 = vmatpush1.bf16.msra.mxu0 0
  %394 = vmatprep.subr.bf16.mxu0 0
  %395 = vmatpush1.bf16.msra.mxu0 0
  %396 = vmatprep.subr.bf16.mxu0 0
  %397 = vmatpush1.bf16.msra.mxu0 0
  %398 = vmatprep.mubr.bf16.mxu0 0
  %399 = vmatmul.mubr.bf16.gmra.mrb[0].mxu0 %v361
  %v400 = vpop.f32.mrb[0].mxu0
  %v401 = vadd.f32 0.0, %v400
  %v402 = vpop.f32.mrb[0].mxu0
  %v403 = vpop.f32.mrb[0].mxu0
  %v404 = vpop.f32.mrb[0].mxu0
  %405 = vdwg.mxu0
  %v406 = vpack.c.bf16 %v401, %v353
  %v407 = vld [vmem:[%s6] sm:$0xf]
  %v408 = vld [vmem:[%s6 + $0x4] sm:$0xf]
  %v411 = vunpack.c.l.b16 %v407
  %v412 = vunpack.c.l.b16 %v408
  %v413 = vpack.c.b16 %v412, %v411
  %v416 = vsel %vm184, %v406, 0
  %418 = vmatprep.subr.bf16.mxu0 0
  %419 = vmatpush1.bf16.msra.mxu0 %v413
  %420 = vmatprep.subr.bf16.mxu0 0
  %421 = vmatpush1.bf16.msra.mxu0 0
  %422 = vmatprep.subr.bf16.mxu0 0
  %423 = vmatpush1.bf16.msra.mxu0 0
  %424 = vmatprep.subr.bf16.mxu0 0
  %425 = vmatpush1.bf16.msra.mxu0 0
  %426 = vmatprep.subr.bf16.mxu0 0
  %427 = vmatpush1.bf16.msra.mxu0 0
  %428 = vmatprep.subr.bf16.mxu0 0
  %429 = vmatpush1.bf16.msra.mxu0 0
  %430 = vmatprep.subr.bf16.mxu0 0
  %431 = vmatpush1.bf16.msra.mxu0 0
  %432 = vmatprep.subr.bf16.mxu0 0
  %433 = vmatpush1.bf16.msra.mxu0 0
  %434 = vmatprep.subr.bf16.mxu0 0
  %435 = vmatpush1.bf16.msra.mxu0 0
  %436 = vmatprep.subr.bf16.mxu0 0
  %437 = vmatpush1.bf16.msra.mxu0 0
  %438 = vmatprep.subr.bf16.mxu0 0
  %439 = vmatpush1.bf16.msra.mxu0 0
  %440 = vmatprep.subr.bf16.mxu0 0
  %441 = vmatpush1.bf16.msra.mxu0 0
  %442 = vmatprep.subr.bf16.mxu0 0
  %443 = vmatpush1.bf16.msra.mxu0 0
  %444 = vmatprep.subr.bf16.mxu0 0
  %445 = vmatpush1.bf16.msra.mxu0 0
  %446 = vmatprep.subr.bf16.mxu0 0
  %447 = vmatpush1.bf16.msra.mxu0 0
  %448 = vmatprep.subr.bf16.mxu0 0
  %449 = vmatpush1.bf16.msra.mxu0 0
  %450 = vmatprep.mubr.bf16.mxu0 0
  %451 = vmatmul.mubr.bf16.gmra.mrb[0].mxu0 %v416
  %v452 = vpop.f32.mrb[0].mxu0
  %v453 = vadd.f32 0.0, %v452
  %v454 = vpop.f32.mrb[0].mxu0
  %v455 = vpop.f32.mrb[0].mxu0
  %v456 = vadd.f32 0.0, %v455
  %v457 = vpop.f32.mrb[0].mxu0
  %458 = vdwg.mxu0
  %v459 = vadd.f32 %v177, %v453
  %v460 = vadd.f32 %v177, %v456
  %461 = vrot.lane.b32.xlu0 %v179, 112
  %v462 = vpop.permute.xlu0 %461
  %463 = vrot.lane.b32.xlu0 %v179, 80
  %v464 = vpop.permute.xlu0 %463
  %v466 = vsel %vm184, %v462, 0
  %v469 = vsel %vm184, %v464, 0
  %471 = vmatprep.subr.bf16.mxu0 0
  %472 = vmatpush1.bf16.xpose.msra.mxu0 %v469
  %473 = vmatprep.subr.bf16.mxu0 0
  %474 = vmatpush1.bf16.xpose.msra.mxu0 0
  %475 = vmatprep.subr.bf16.mxu0 0
  %476 = vmatpush1.bf16.xpose.msra.mxu0 0
  %477 = vmatprep.subr.bf16.mxu0 0
  %478 = vmatpush1.bf16.xpose.msra.mxu0 0
  %479 = vmatprep.subr.bf16.mxu0 0
  %480 = vmatpush1.bf16.xpose.msra.mxu0 0
  %481 = vmatprep.subr.bf16.mxu0 0
  %482 = vmatpush1.bf16.xpose.msra.mxu0 0
  %483 = vmatprep.subr.bf16.mxu0 0
  %484 = vmatpush1.bf16.xpose.msra.mxu0 0
  %485 = vmatprep.subr.bf16.mxu0 0
  %486 = vmatpush1.bf16.xpose.msra.mxu0 0
  %487 = vmatprep.subr.bf16.mxu0 0
  %488 = vmatpush1.bf16.xpose.msra.mxu0 0
  %489 = vmatprep.subr.bf16.mxu0 0
  %490 = vmatpush1.bf16.xpose.msra.mxu0 0
  %491 = vmatprep.subr.bf16.mxu0 0
  %492 = vmatpush1.bf16.xpose.msra.mxu0 0
  %493 = vmatprep.subr.bf16.mxu0 0
  %494 = vmatpush1.bf16.xpose.msra.mxu0 0
  %495 = vmatprep.subr.bf16.mxu0 0
  %496 = vmatpush1.bf16.xpose.msra.mxu0 0
  %497 = vmatprep.subr.bf16.mxu0 0
  %498 = vmatpush1.bf16.xpose.msra.mxu0 0
  %499 = vmatprep.subr.bf16.mxu0 0
  %500 = vmatpush1.bf16.xpose.msra.mxu0 0
  %501 = vmatprep.subr.bf16.mxu0 0
  %502 = vmatpush1.bf16.xpose.msra.mxu0 0
  %503 = vmatprep.mubr.bf16.mxu0 0
  %504 = vmatmul.mubr.bf16.gmra.mrb[0].mxu0 %v466
  %v505 = vpop.f32.mrb[0].mxu0
  %v506 = vadd.f32 0.0, %v505
  %v507 = vpop.f32.mrb[0].mxu0
  %v508 = vpop.f32.mrb[0].mxu0
  %v509 = vpop.f32.mrb[0].mxu0
  %510 = vdwg.mxu0
  %511 = vrot.lane.b32.xlu0 %v180, 112
  %v512 = vpop.permute.xlu0 %511
  %513 = vrot.lane.b32.xlu0 %v180, 80
  %v514 = vpop.permute.xlu0 %513
  %v516 = vsel %vm184, %v512, 0
  %v519 = vsel %vm184, %v514, 0
  %521 = vmatprep.subr.bf16.mxu0 0
  %522 = vmatpush1.bf16.xpose.msra.mxu0 %v519
  %523 = vmatprep.subr.bf16.mxu0 0
  %524 = vmatpush1.bf16.xpose.msra.mxu0 0
  %525 = vmatprep.subr.bf16.mxu0 0
  %526 = vmatpush1.bf16.xpose.msra.mxu0 0
  %527 = vmatprep.subr.bf16.mxu0 0
  %528 = vmatpush1.bf16.xpose.msra.mxu0 0
  %529 = vmatprep.subr.bf16.mxu0 0
  %530 = vmatpush1.bf16.xpose.msra.mxu0 0
  %531 = vmatprep.subr.bf16.mxu0 0
  %532 = vmatpush1.bf16.xpose.msra.mxu0 0
  %533 = vmatprep.subr.bf16.mxu0 0
  %534 = vmatpush1.bf16.xpose.msra.mxu0 0
  %535 = vmatprep.subr.bf16.mxu0 0
  %536 = vmatpush1.bf16.xpose.msra.mxu0 0
  %537 = vmatprep.subr.bf16.mxu0 0
  %538 = vmatpush1.bf16.xpose.msra.mxu0 0
  %539 = vmatprep.subr.bf16.mxu0 0
  %540 = vmatpush1.bf16.xpose.msra.mxu0 0
  %541 = vmatprep.subr.bf16.mxu0 0
  %542 = vmatpush1.bf16.xpose.msra.mxu0 0
  %543 = vmatprep.subr.bf16.mxu0 0
  %544 = vmatpush1.bf16.xpose.msra.mxu0 0
  %545 = vmatprep.subr.bf16.mxu0 0
  %546 = vmatpush1.bf16.xpose.msra.mxu0 0
  %547 = vmatprep.subr.bf16.mxu0 0
  %548 = vmatpush1.bf16.xpose.msra.mxu0 0
  %549 = vmatprep.subr.bf16.mxu0 0
  %550 = vmatpush1.bf16.xpose.msra.mxu0 0
  %551 = vmatprep.subr.bf16.mxu0 0
  %552 = vmatpush1.bf16.xpose.msra.mxu0 0
  %553 = vmatprep.mubr.bf16.mxu0 0
  %554 = vmatmul.mubr.bf16.gmra.mrb[0].mxu0 %v516
  %v555 = vpop.f32.mrb[0].mxu0
  %v556 = vadd.f32 0.0, %v555
  %v557 = vpop.f32.mrb[0].mxu0
  %v558 = vpop.f32.mrb[0].mxu0
  %v559 = vpop.f32.mrb[0].mxu0
  %560 = vdwg.mxu0
  %v561 = vmul.f32 %v506, 0.25
  %v562 = vmul.f32 %v556, 0.25
  %v563 = vadd.f32 %v561, %v102
  %v564 = vadd.f32 %v562, %v103
  %v565 = vsel %vm284, %v563, -inf
  %566 = vmax.xlane.f32.xlu0 %v565
  %v567 = vpop.xlane.xlu0 %566
  %v568 = vsel %vm284, %v564, -inf
  %569 = vmax.xlane.f32.xlu0 %v568
  %v570 = vpop.xlane.xlu0 %569
  %v571 = vsub.f32 %v563, %v567
  %v572 = vsub.f32 %v564, %v570
  %v573 = vmul.f32 %v571, 1.442695
  %v574 = vpow.pop %v573
  %v575 = vmul.f32 %v572, 1.442695
  %v576 = vpow.pop %v575
  %v577 = vsel %vm284, %v574, 0.0
  %578 = vadd.xlane.f32.xlu0 %v577
  %v579 = vpop.xlane.xlu0 %578
  %v580 = vsel %vm284, %v576, 0.0
  %581 = vadd.xlane.f32.xlu0 %v580
  %v582 = vpop.xlane.xlu0 %581
  %v583 = vrcp.pop %v579
  %v584 = vrcp.pop %v582
  %v585 = vmul.f32 %v574, %v583
  %v586 = vmul.f32 %v576, %v584
  %v587 = vpack.c.bf16 %v585, %v585
  %v588 = vpack.c.bf16 %v586, %v586
  %589 = vrot.lane.b32.xlu0 %v179, 48
  %v590 = vpop.permute.xlu0 %589
  %v592 = vsel %vm284, %v587, 0
  %v595 = vsel %vm314, %v590, 0
  %597 = vmatprep.subr.bf16.mxu0 0
  %598 = vmatpush1.bf16.msra.mxu0 %v595
  %599 = vmatprep.subr.bf16.mxu0 0
  %600 = vmatpush1.bf16.msra.mxu0 0
  %601 = vmatprep.subr.bf16.mxu0 0
  %602 = vmatpush1.bf16.msra.mxu0 0
  %603 = vmatprep.subr.bf16.mxu0 0
  %604 = vmatpush1.bf16.msra.mxu0 0
  %605 = vmatprep.subr.bf16.mxu0 0
  %606 = vmatpush1.bf16.msra.mxu0 0
  %607 = vmatprep.subr.bf16.mxu0 0
  %608 = vmatpush1.bf16.msra.mxu0 0
  %609 = vmatprep.subr.bf16.mxu0 0
  %610 = vmatpush1.bf16.msra.mxu0 0
  %611 = vmatprep.subr.bf16.mxu0 0
  %612 = vmatpush1.bf16.msra.mxu0 0
  %613 = vmatprep.subr.bf16.mxu0 0
  %614 = vmatpush1.bf16.msra.mxu0 0
  %615 = vmatprep.subr.bf16.mxu0 0
  %616 = vmatpush1.bf16.msra.mxu0 0
  %617 = vmatprep.subr.bf16.mxu0 0
  %618 = vmatpush1.bf16.msra.mxu0 0
  %619 = vmatprep.subr.bf16.mxu0 0
  %620 = vmatpush1.bf16.msra.mxu0 0
  %621 = vmatprep.subr.bf16.mxu0 0
  %622 = vmatpush1.bf16.msra.mxu0 0
  %623 = vmatprep.subr.bf16.mxu0 0
  %624 = vmatpush1.bf16.msra.mxu0 0
  %625 = vmatprep.subr.bf16.mxu0 0
  %626 = vmatpush1.bf16.msra.mxu0 0
  %627 = vmatprep.subr.bf16.mxu0 0
  %628 = vmatpush1.bf16.msra.mxu0 0
  %629 = vmatprep.mubr.bf16.mxu0 0
  %630 = vmatmul.mubr.bf16.gmra.mrb[0].mxu0 %v592
  %v631 = vpop.f32.mrb[0].mxu0
  %v632 = vadd.f32 0.0, %v631
  %v633 = vpop.f32.mrb[0].mxu0
  %v634 = vpop.f32.mrb[0].mxu0
  %v635 = vpop.f32.mrb[0].mxu0
  %636 = vdwg.mxu0
  %637 = vrot.lane.b32.xlu0 %v180, 48
  %v638 = vpop.permute.xlu0 %637
  %v640 = vsel %vm284, %v588, 0
  %v643 = vsel %vm314, %v638, 0
  %645 = vmatprep.subr.bf16.mxu0 0
  %646 = vmatpush1.bf16.msra.mxu0 %v643
  %647 = vmatprep.subr.bf16.mxu0 0
  %648 = vmatpush1.bf16.msra.mxu0 0
  %649 = vmatprep.subr.bf16.mxu0 0
  %650 = vmatpush1.bf16.msra.mxu0 0
  %651 = vmatprep.subr.bf16.mxu0 0
  %652 = vmatpush1.bf16.msra.mxu0 0
  %653 = vmatprep.subr.bf16.mxu0 0
  %654 = vmatpush1.bf16.msra.mxu0 0
  %655 = vmatprep.subr.bf16.mxu0 0
  %656 = vmatpush1.bf16.msra.mxu0 0
  %657 = vmatprep.subr.bf16.mxu0 0
  %658 = vmatpush1.bf16.msra.mxu0 0
  %659 = vmatprep.subr.bf16.mxu0 0
  %660 = vmatpush1.bf16.msra.mxu0 0
  %661 = vmatprep.subr.bf16.mxu0 0
  %662 = vmatpush1.bf16.msra.mxu0 0
  %663 = vmatprep.subr.bf16.mxu0 0
  %664 = vmatpush1.bf16.msra.mxu0 0
  %665 = vmatprep.subr.bf16.mxu0 0
  %666 = vmatpush1.bf16.msra.mxu0 0
  %667 = vmatprep.subr.bf16.mxu0 0
  %668 = vmatpush1.bf16.msra.mxu0 0
  %669 = vmatprep.subr.bf16.mxu0 0
  %670 = vmatpush1.bf16.msra.mxu0 0
  %671 = vmatprep.subr.bf16.mxu0 0
  %672 = vmatpush1.bf16.msra.mxu0 0
  %673 = vmatprep.subr.bf16.mxu0 0
  %674 = vmatpush1.bf16.msra.mxu0 0
  %675 = vmatprep.subr.bf16.mxu0 0
  %676 = vmatpush1.bf16.msra.mxu0 0
  %677 = vmatprep.mubr.bf16.mxu0 0
  %678 = vmatmul.mubr.bf16.gmra.mrb[0].mxu0 %v640
  %v679 = vpop.f32.mrb[0].mxu0
  %v680 = vadd.f32 0.0, %v679
  %v681 = vpop.f32.mrb[0].mxu0
  %v682 = vpop.f32.mrb[0].mxu0
  %v683 = vpop.f32.mrb[0].mxu0
  %684 = vdwg.mxu0
  %v685 = vpack.c.bf16 %v680, %v632
  %v686 = vld [vmem:[%s6 + $0x8] sm:$0xf]
  %v687 = vld [vmem:[%s6 + $0xc] sm:$0xf]
  %v690 = vunpack.c.l.b16 %v686
  %v691 = vunpack.c.l.b16 %v687
  %v692 = vpack.c.b16 %v691, %v690
  %v695 = vsel %vm184, %v685, 0
  %697 = vmatprep.subr.bf16.mxu0 0
  %698 = vmatpush1.bf16.msra.mxu0 %v692
  %699 = vmatprep.subr.bf16.mxu0 0
  %700 = vmatpush1.bf16.msra.mxu0 0
  %701 = vmatprep.subr.bf16.mxu0 0
  %702 = vmatpush1.bf16.msra.mxu0 0
  %703 = vmatprep.subr.bf16.mxu0 0
  %704 = vmatpush1.bf16.msra.mxu0 0
  %705 = vmatprep.subr.bf16.mxu0 0
  %706 = vmatpush1.bf16.msra.mxu0 0
  %707 = vmatprep.subr.bf16.mxu0 0
  %708 = vmatpush1.bf16.msra.mxu0 0
  %709 = vmatprep.subr.bf16.mxu0 0
  %710 = vmatpush1.bf16.msra.mxu0 0
  %711 = vmatprep.subr.bf16.mxu0 0
  %712 = vmatpush1.bf16.msra.mxu0 0
  %713 = vmatprep.subr.bf16.mxu0 0
  %714 = vmatpush1.bf16.msra.mxu0 0
  %715 = vmatprep.subr.bf16.mxu0 0
  %716 = vmatpush1.bf16.msra.mxu0 0
  %717 = vmatprep.subr.bf16.mxu0 0
  %718 = vmatpush1.bf16.msra.mxu0 0
  %719 = vmatprep.subr.bf16.mxu0 0
  %720 = vmatpush1.bf16.msra.mxu0 0
  %721 = vmatprep.subr.bf16.mxu0 0
  %722 = vmatpush1.bf16.msra.mxu0 0
  %723 = vmatprep.subr.bf16.mxu0 0
  %724 = vmatpush1.bf16.msra.mxu0 0
  %725 = vmatprep.subr.bf16.mxu0 0
  %726 = vmatpush1.bf16.msra.mxu0 0
  %727 = vmatprep.subr.bf16.mxu0 0
  %728 = vmatpush1.bf16.msra.mxu0 0
  %729 = vmatprep.mubr.bf16.mxu0 0
  %730 = vmatmul.mubr.bf16.gmra.mrb[0].mxu0 %v695
  %v731 = vpop.f32.mrb[0].mxu0
  %v732 = vadd.f32 0.0, %v731
  %v733 = vpop.f32.mrb[0].mxu0
  %v734 = vpop.f32.mrb[0].mxu0
  %v735 = vadd.f32 0.0, %v734
  %v736 = vpop.f32.mrb[0].mxu0
  %737 = vdwg.mxu0
  %v738 = vadd.f32 %v459, %v732
  %v739 = vadd.f32 %v460, %v735
  %v740 = vadd.f32 %v100, %v738
  %v741 = vadd.f32 %v101, %v739
  %v742 = vld [vmem:[%s8] sm:$0x1]
  %v743 = vld [vmem:[%s9] sm:$0x1]
  %v744 = vsel %vm58, %v740, 0.0
  %745 = vadd.xlane.f32.xlu0 %v744
  %v746 = vpop.xlane.xlu0 %745
  %v747 = vsel %vm58, %v741, 0.0
  %748 = vadd.xlane.f32.xlu0 %v747
  %v749 = vpop.xlane.xlu0 %748
  %v750 = vmul.f32 %v746, %v65
  %v751 = vmul.f32 %v749, %v65
  %v752 = vsub.f32 %v740, %v750
  %v753 = vsub.f32 %v741, %v751
  %v754 = vmul.f32 %v752, %v752
  %v755 = vmul.f32 %v753, %v753
  %v756 = vsel %vm58, %v754, 0.0
  %757 = vadd.xlane.f32.xlu0 %v756
  %v758 = vpop.xlane.xlu0 %757
  %v759 = vsel %vm58, %v755, 0.0
  %760 = vadd.xlane.f32.xlu0 %v759
  %v761 = vpop.xlane.xlu0 %760
  %v762 = vmul.f32 %v758, %v65
  %v763 = vmul.f32 %v761, %v65
  %v764 = vadd.f32 %v762, 1e-05
  %v765 = vadd.f32 %v763, 1e-05
  %v766 = vrsqrt.pop %v764
  %v767 = vrsqrt.pop %v765
  %v768 = vmul.f32 %v752, %v766
  %v769 = vmul.f32 %v753, %v767
  %v771 = vlaneseq
  %v772 = vshrl.u32 %v771, 7
  %v773 = vsub.s32 0, %v772
  %v774 = vrot.slane %v742, %v773
  %v776 = vmul.f32 %v768, %v774
  %v777 = vmul.f32 %v769, %v774
  %v779 = vlaneseq
  %v780 = vshrl.u32 %v779, 7
  %v781 = vsub.s32 0, %v780
  %v782 = vrot.slane %v743, %v781
  %v784 = vadd.f32 %v776, %v782
  %v785 = vadd.f32 %v777, %v782
  %v786 = vld [vmem:[%s11] sm:$0x1]
  %v787 = vld [vmem:[%s13] sm:$0x1]
  %v788 = vpack.c.bf16 %v785, %v784
  %v789 = vld [vmem:[%s10] sm:$0xf]
  %v790 = vld [vmem:[%s10 + $0x4] sm:$0xf]
  %v791 = vld [vmem:[%s10 + $0x8] sm:$0xf]
  %v792 = vld [vmem:[%s10 + $0xc] sm:$0xf]
  %v794 = vlaneseq
  %v795 = vshrl.u32 %v794, 7
  %v796 = vsub.s32 0, %v795
  %v797 = vrot.slane %v786, %v796
  %v803 = vunpack.c.l.b16 %v789
  %v804 = vunpack.c.l.b16 %v790
  %v805 = vunpack.c.l.b16 %v791
  %v806 = vunpack.c.l.b16 %v792
  %v807 = vpack.c.b16 %v804, %v803
  %v808 = vpack.c.b16 %v806, %v805
  %v812 = vsel %vm58, %v788, 0
  %814 = vmatprep.subr.bf16.mxu0 0
  %815 = vmatpush1.bf16.msra.mxu0 %v807
  %816 = vmatprep.subr.bf16.mxu0 0
  %817 = vmatpush1.bf16.msra.mxu0 %v808
  %818 = vmatprep.subr.bf16.mxu0 0
  %819 = vmatpush1.bf16.msra.mxu0 0
  %820 = vmatprep.subr.bf16.mxu0 0
  %821 = vmatpush1.bf16.msra.mxu0 0
  %822 = vmatprep.subr.bf16.mxu0 0
  %823 = vmatpush1.bf16.msra.mxu0 0
  %824 = vmatprep.subr.bf16.mxu0 0
  %825 = vmatpush1.bf16.msra.mxu0 0
  %826 = vmatprep.subr.bf16.mxu0 0
  %827 = vmatpush1.bf16.msra.mxu0 0
  %828 = vmatprep.subr.bf16.mxu0 0
  %829 = vmatpush1.bf16.msra.mxu0 0
  %830 = vmatprep.subr.bf16.mxu0 0
  %831 = vmatpush1.bf16.msra.mxu0 0
  %832 = vmatprep.subr.bf16.mxu0 0
  %833 = vmatpush1.bf16.msra.mxu0 0
  %834 = vmatprep.subr.bf16.mxu0 0
  %835 = vmatpush1.bf16.msra.mxu0 0
  %836 = vmatprep.subr.bf16.mxu0 0
  %837 = vmatpush1.bf16.msra.mxu0 0
  %838 = vmatprep.subr.bf16.mxu0 0
  %839 = vmatpush1.bf16.msra.mxu0 0
  %840 = vmatprep.subr.bf16.mxu0 0
  %841 = vmatpush1.bf16.msra.mxu0 0
  %842 = vmatprep.subr.bf16.mxu0 0
  %843 = vmatpush1.bf16.msra.mxu0 0
  %844 = vmatprep.subr.bf16.mxu0 0
  %845 = vmatpush1.bf16.msra.mxu0 0
  %846 = vmatprep.mubr.bf16.mxu0 0
  %847 = vmatmul.mubr.bf16.gmra.mrb[0].mxu0 %v812
  %v848 = vpop.f32.mrb[0].mxu0
  %v849 = vadd.f32 %v797, %v848
  %v850 = vpop.f32.mrb[0].mxu0
  %v851 = vpop.f32.mrb[0].mxu0
  %v852 = vadd.f32 %v797, %v851
  %v853 = vpop.f32.mrb[0].mxu0
  %854 = vdwg.mxu0
  %v855 = vmul.f32 %v849, %v849
  %v856 = vmul.f32 %v852, %v852
  %v857 = vmul.f32 %v849, %v855
  %v858 = vmul.f32 %v852, %v856
  %v859 = vmul.f32 %v857, 0.044715
  %v860 = vmul.f32 %v858, 0.044715
  %v861 = vadd.f32 %v849, %v859
  %v862 = vadd.f32 %v852, %v860
  %v863 = vmul.f32 %v861, 0.7978846
  %v864 = vmul.f32 %v862, 0.7978846
  %v865 = vtanh.pop %v863
  %v866 = vtanh.pop %v864
  %v867 = vadd.f32 %v865, 1.0
  %v868 = vadd.f32 %v866, 1.0
  %v869 = vmul.f32 %v867, 0.5
  %v870 = vmul.f32 %v868, 0.5
  %v871 = vmul.f32 %v849, %v869
  %v872 = vmul.f32 %v852, %v870
  %v873 = vpack.c.bf16 %v872, %v871
  %v874 = vld [vmem:[%s12] sm:$0xf]
  %v875 = vld [vmem:[%s12 + $0x4] sm:$0xf]
  %v876 = vld [vmem:[%s12 + $0x8] sm:$0xf]
  %v877 = vld [vmem:[%s12 + $0xc] sm:$0xf]
  %v878 = vld [vmem:[%s12 + $0x10] sm:$0xf]
  %v879 = vld [vmem:[%s12 + $0x14] sm:$0xf]
  %v880 = vld [vmem:[%s12 + $0x18] sm:$0xf]
  %v881 = vld [vmem:[%s12 + $0x1c] sm:$0xf]
  %v883 = vlaneseq
  %v884 = vshrl.u32 %v883, 7
  %v885 = vsub.s32 0, %v884
  %v886 = vrot.slane %v787, %v885
  %v896 = vunpack.c.l.b16 %v874
  %v897 = vunpack.c.l.b16 %v875
  %v898 = vunpack.c.l.b16 %v876
  %v899 = vunpack.c.l.b16 %v877
  %v900 = vunpack.c.l.b16 %v878
  %v901 = vunpack.c.l.b16 %v879
  %v902 = vunpack.c.l.b16 %v880
  %v903 = vunpack.c.l.b16 %v881
  %v904 = vpack.c.b16 %v897, %v896
  %v905 = vpack.c.b16 %v899, %v898
  %v906 = vpack.c.b16 %v901, %v900
  %v907 = vpack.c.b16 %v903, %v902
  %vm912 = vcmask 523264
  %v914 = vsel %vm912, %v873, 0
  %916 = vmatprep.subr.bf16.mxu0 0
  %917 = vmatpush1.bf16.msra.mxu0 %v904
  %918 = vmatprep.subr.bf16.mxu0 0
  %919 = vmatpush1.bf16.msra.mxu0 %v905
  %920 = vmatprep.subr.bf16.mxu0 0
  %921 = vmatpush1.bf16.msra.mxu0 %v906
  %922 = vmatprep.subr.bf16.mxu0 0
  %923 = vmatpush1.bf16.msra.mxu0 %v907
  %924 = vmatprep.subr.bf16.mxu0 0
  %925 = vmatpush1.bf16.msra.mxu0 0
  %926 = vmatprep.subr.bf16.mxu0 0
  %927 = vmatpush1.bf16.msra.mxu0 0
  %928 = vmatprep.subr.bf16.mxu0 0
  %929 = vmatpush1.bf16.msra.mxu0 0
  %930 = vmatprep.subr.bf16.mxu0 0
  %931 = vmatpush1.bf16.msra.mxu0 0
  %932 = vmatprep.subr.bf16.mxu0 0
  %933 = vmatpush1.bf16.msra.mxu0 0
  %934 = vmatprep.subr.bf16.mxu0 0
  %935 = vmatpush1.bf16.msra.mxu0 0
  %936 = vmatprep.subr.bf16.mxu0 0
  %937 = vmatpush1.bf16.msra.mxu0 0
  %938 = vmatprep.subr.bf16.mxu0 0
  %939 = vmatpush1.bf16.msra.mxu0 0
  %940 = vmatprep.subr.bf16.mxu0 0
  %941 = vmatpush1.bf16.msra.mxu0 0
  %942 = vmatprep.subr.bf16.mxu0 0
  %943 = vmatpush1.bf16.msra.mxu0 0
  %944 = vmatprep.subr.bf16.mxu0 0
  %945 = vmatpush1.bf16.msra.mxu0 0
  %946 = vmatprep.subr.bf16.mxu0 0
  %947 = vmatpush1.bf16.msra.mxu0 0
  %948 = vmatprep.mubr.bf16.mxu0 0
  %949 = vmatmul.mubr.bf16.gmra.mrb[0].mxu0 %v914
  %v950 = vpop.f32.mrb[0].mxu0
  %v951 = vadd.f32 %v886, %v950
  %v952 = vpop.f32.mrb[0].mxu0
  %v953 = vpop.f32.mrb[0].mxu0
  %v954 = vadd.f32 %v886, %v953
  %v955 = vpop.f32.mrb[0].mxu0
  %956 = vdwg.mxu0
  %v957 = vadd.f32 %v784, %v951
  %v958 = vadd.f32 %v785, %v954
  %v959 = vld [vmem:[%s14] sm:$0x1]
  %v960 = vld [vmem:[%s15] sm:$0x1]
  %v961 = vsel %vm58, %v957, 0.0
  %962 = vadd.xlane.f32.xlu0 %v961
  %v963 = vpop.xlane.xlu0 %962
  %v964 = vsel %vm58, %v958, 0.0
  %965 = vadd.xlane.f32.xlu0 %v964
  %v966 = vpop.xlane.xlu0 %965
  %v967 = vmul.f32 %v963, %v65
  %v968 = vmul.f32 %v966, %v65
  %v969 = vsub.f32 %v957, %v967
  %v970 = vsub.f32 %v958, %v968
  %v971 = vmul.f32 %v969, %v969
  %v972 = vmul.f32 %v970, %v970
  %v973 = vsel %vm58, %v971, 0.0
  %974 = vadd.xlane.f32.xlu0 %v973
  %v975 = vpop.xlane.xlu0 %974
  %v976 = vsel %vm58, %v972, 0.0
  %977 = vadd.xlane.f32.xlu0 %v976
  %v978 = vpop.xlane.xlu0 %977
  %v979 = vmul.f32 %v975, %v65
  %v980 = vmul.f32 %v978, %v65
  %v981 = vadd.f32 %v979, 1e-05
  %v982 = vadd.f32 %v980, 1e-05
  %v983 = vrsqrt.pop %v981
  %v984 = vrsqrt.pop %v982
  %v985 = vmul.f32 %v969, %v983
  %v986 = vmul.f32 %v970, %v984
  %v988 = vlaneseq
  %v989 = vshrl.u32 %v988, 7
  %v990 = vsub.s32 0, %v989
  %v991 = vrot.slane %v959, %v990
  %v993 = vmul.f32 %v985, %v991
  %v994 = vmul.f32 %v986, %v991
  %v996 = vlaneseq
  %v997 = vshrl.u32 %v996, 7
  %v998 = vsub.s32 0, %v997
  %v999 = vrot.slane %v960, %v998
  %v1001 = vadd.f32 %v993, %v999
  %v1002 = vadd.f32 %v994, %v999
  %1003 = vst.msk [vmem:[%s16] sm:$0xff] %vm58, %v1001
  %1004 = vst.msk [vmem:[%s16 + $0x8] sm:$0xff] %vm58, %v1002
  // Predicated region
  $region66: #{custom_model_forward.4} parent=0 // pred_check
    _
  $region67: #{custom_model_forward.4} parent=0 // pred_check_branch
    %1006 = sbr.rel (0) target = $region69
  $region68: #{custom_model_forward.4} parent=0 // pred_region
    _
  $region69: #{custom_model_forward.4} parent=0 // pred_fallthru
    _
  // Predicated region
  $region70: #{custom_model_forward.4} parent=0 // pred_check
    _
  $region71: #{custom_model_forward.4} parent=0 // pred_check_branch
    %1008 = sbr.rel (0) target = $region73
  $region72: #{custom_model_forward.4} parent=0 // pred_region
    _
  $region73: #{custom_model_forward.4} parent=0 // pred_fallthru
    _

// kernel: custom_model_forward.5
$region0: #{custom_model_forward.5}
  #allocation0 [shape = 'u32[]', space=smem, size = 0x4, offset = 0x4, fixed_abs, tag = 'smem constant byte address 0x4 - core index']
  #allocation1 [shape = 'u32[144,128]{1,0:T(1,128)}', space=vmem, size = 0x12000, scoped, tag = 'internal scratch']
  %s0 = inlined_call_operand.vmem [shape: f32[2,8,32], index: 0, kind: input, shape index: {}]
  %s1 = inlined_call_operand.vmem [shape: f32[2,8,32], index: 1, kind: input, shape index: {}]
  %s2 = inlined_call_operand.vmem [shape: f32[2,8,8], index: 2, kind: input, shape index: {}]
  %s3 = inlined_call_operand.vmem [shape: f32[2,8,8], index: 3, kind: input, shape index: {}]
  %s4 = inlined_call_operand.vmem [shape: f32[1,32], index: 4, kind: input, shape index: {}]
  %s5 = inlined_call_operand.vmem [shape: f32[1,32], index: 5, kind: input, shape index: {}]
  %s6 = inlined_call_operand.vmem [shape: bf16[32,96], index: 6, kind: input, shape index: {}]
  %s7 = inlined_call_operand.vmem [shape: f32[1,96], index: 7, kind: input, shape index: {}]
  %s8 = inlined_call_operand.vmem [shape: bf16[32,32], index: 8, kind: input, shape index: {}]
  %s9 = inlined_call_operand.vmem [shape: f32[1,32], index: 9, kind: input, shape index: {}]
  %s10 = inlined_call_operand.vmem [shape: f32[1,32], index: 10, kind: input, shape index: {}]
  %s11 = inlined_call_operand.vmem [shape: f32[1,32], index: 11, kind: input, shape index: {}]
  %s12 = inlined_call_operand.vmem [shape: bf16[32,32], index: 12, kind: input, shape index: {}]
  %s13 = inlined_call_operand.vmem [shape: f32[1,32], index: 13, kind: input, shape index: {}]
  %s14 = inlined_call_operand.vmem [shape: bf16[32,64], index: 14, kind: input, shape index: {}]
  %s15 = inlined_call_operand.vmem [shape: f32[1,64], index: 15, kind: input, shape index: {}]
  %s16 = inlined_call_operand.vmem [shape: bf16[32,32], index: 16, kind: input, shape index: {}]
  %s17 = inlined_call_operand.vmem [shape: f32[1,32], index: 17, kind: input, shape index: {}]
  %s18 = inlined_call_operand.vmem [shape: f32[1,32], index: 18, kind: input, shape index: {}]
  %s19 = inlined_call_operand.vmem [shape: f32[1,32], index: 19, kind: input, shape index: {}]
  %s20 = inlined_call_operand.vmem [shape: bf16[32,64], index: 20, kind: input, shape index: {}]
  %s21 = inlined_call_operand.vmem [shape: f32[1,64], index: 21, kind: input, shape index: {}]
  %s22 = inlined_call_operand.vmem [shape: bf16[64,32], index: 22, kind: input, shape index: {}]
  %s23 = inlined_call_operand.vmem [shape: f32[1,32], index: 23, kind: input, shape index: {}]
  %s24 = inlined_call_operand.vmem [shape: f32[2,8,32], index: 24, kind: output, shape index: {}]
  %s25 = sld [smem:[#allocation0]]
  $region106: #{custom_model_forward.5} parent=0
    _
  %s27 = ssub.s32 1, %s25
  %s28 = scalar_select 0, %s27, %s25
  // Predicated region
  $region2: #{custom_model_forward.5} parent=0 // pred_check
    _
  $region3: #{custom_model_forward.5} parent=0 // pred_check_branch
    %30 = sbr.rel (0) target = $region5
  $region4: #{custom_model_forward.5} parent=0 // pred_region
    _
  $region5: #{custom_model_forward.5} parent=0 // pred_fallthru
    _
  // Predicated region
  $region6: #{custom_model_forward.5} parent=0 // pred_check
    _
  $region7: #{custom_model_forward.5} parent=0 // pred_check_branch
    %32 = sbr.rel (0) target = $region9
  $region8: #{custom_model_forward.5} parent=0 // pred_region
    _
  $region9: #{custom_model_forward.5} parent=0 // pred_fallthru
    _
  // Predicated region
  $region10: #{custom_model_forward.5} parent=0 // pred_check
    _
  $region11: #{custom_model_forward.5} parent=0 // pred_check_branch
    %34 = sbr.rel (0) target = $region13
  $region12: #{custom_model_forward.5} parent=0 // pred_region
    _
  $region13: #{custom_model_forward.5} parent=0 // pred_fallthru
    _
  // Predicated region
  $region14: #{custom_model_forward.5} parent=0 // pred_check
    _
  $region15: #{custom_model_forward.5} parent=0 // pred_check_branch
    %36 = sbr.rel (0) target = $region17
  $region16: #{custom_model_forward.5} parent=0 // pred_region
    _
  $region17: #{custom_model_forward.5} parent=0 // pred_fallthru
    _
  // Predicated region
  $region18: #{custom_model_forward.5} parent=0 // pred_check
    _
  $region19: #{custom_model_forward.5} parent=0 // pred_check_branch
    %38 = sbr.rel (0) target = $region21
  $region20: #{custom_model_forward.5} parent=0 // pred_region
    _
  $region21: #{custom_model_forward.5} parent=0 // pred_fallthru
    _
  // Predicated region
  $region22: #{custom_model_forward.5} parent=0 // pred_check
    _
  $region23: #{custom_model_forward.5} parent=0 // pred_check_branch
    %40 = sbr.rel (0) target = $region25
  $region24: #{custom_model_forward.5} parent=0 // pred_region
    _
  $region25: #{custom_model_forward.5} parent=0 // pred_fallthru
    _
  // Predicated region
  $region26: #{custom_model_forward.5} parent=0 // pred_check
    _
  $region27: #{custom_model_forward.5} parent=0 // pred_check_branch
    %42 = sbr.rel (0) target = $region29
  $region28: #{custom_model_forward.5} parent=0 // pred_region
    _
  $region29: #{custom_model_forward.5} parent=0 // pred_fallthru
    _
  // Predicated region
  $region30: #{custom_model_forward.5} parent=0 // pred_check
    _
  $region31: #{custom_model_forward.5} parent=0 // pred_check_branch
    %44 = sbr.rel (0) target = $region33
  $region32: #{custom_model_forward.5} parent=0 // pred_region
    _
  $region33: #{custom_model_forward.5} parent=0 // pred_fallthru
    _
  // Predicated region
  $region34: #{custom_model_forward.5} parent=0 // pred_check
    _
  $region35: #{custom_model_forward.5} parent=0 // pred_check_branch
    %46 = sbr.rel (0) target = $region37
  $region36: #{custom_model_forward.5} parent=0 // pred_region
    _
  $region37: #{custom_model_forward.5} parent=0 // pred_fallthru
    _
  // Predicated region
  $region38: #{custom_model_forward.5} parent=0 // pred_check
    _
  $region39: #{custom_model_forward.5} parent=0 // pred_check_branch
    %48 = sbr.rel (0) target = $region41
  $region40: #{custom_model_forward.5} parent=0 // pred_region
    _
  $region41: #{custom_model_forward.5} parent=0 // pred_fallthru
    _
  // Predicated region
  $region42: #{custom_model_forward.5} parent=0 // pred_check
    _
  $region43: #{custom_model_forward.5} parent=0 // pred_check_branch
    %50 = sbr.rel (0) target = $region45
  $region44: #{custom_model_forward.5} parent=0 // pred_region
    _
  $region45: #{custom_model_forward.5} parent=0 // pred_fallthru
    _
  // Predicated region
  $region46: #{custom_model_forward.5} parent=0 // pred_check
    _
  $region47: #{custom_model_forward.5} parent=0 // pred_check_branch
    %52 = sbr.rel (0) target = $region49
  $region48: #{custom_model_forward.5} parent=0 // pred_region
    _
  $region49: #{custom_model_forward.5} parent=0 // pred_fallthru
    _
  // Predicated region
  $region50: #{custom_model_forward.5} parent=0 // pred_check
    _
  $region51: #{custom_model_forward.5} parent=0 // pred_check_branch
    %54 = sbr.rel (0) target = $region53
  $region52: #{custom_model_forward.5} parent=0 // pred_region
    _
  $region53: #{custom_model_forward.5} parent=0 // pred_fallthru
    _
  // Predicated region
  $region54: #{custom_model_forward.5} parent=0 // pred_check
    _
  $region55: #{custom_model_forward.5} parent=0 // pred_check_branch
    %56 = sbr.rel (0) target = $region57
  $region56: #{custom_model_forward.5} parent=0 // pred_region
    _
  $region57: #{custom_model_forward.5} parent=0 // pred_fallthru
    _
  // Predicated region
  $region58: #{custom_model_forward.5} parent=0 // pred_check
    _
  $region59: #{custom_model_forward.5} parent=0 // pred_check_branch
    %58 = sbr.rel (0) target = $region61
  $region60: #{custom_model_forward.5} parent=0 // pred_region
    _
  $region61: #{custom_model_forward.5} parent=0 // pred_fallthru
    _
  // Predicated region
  $region62: #{custom_model_forward.5} parent=0 // pred_check
    _
  $region63: #{custom_model_forward.5} parent=0 // pred_check_branch
    %60 = sbr.rel (0) target = $region65
  $region64: #{custom_model_forward.5} parent=0 // pred_region
    _
  $region65: #{custom_model_forward.5} parent=0 // pred_fallthru
    _
  // Predicated region
  $region66: #{custom_model_forward.5} parent=0 // pred_check
    _
  $region67: #{custom_model_forward.5} parent=0 // pred_check_branch
    %62 = sbr.rel (0) target = $region69
  $region68: #{custom_model_forward.5} parent=0 // pred_region
    _
  $region69: #{custom_model_forward.5} parent=0 // pred_fallthru
    _
  // Predicated region
  $region70: #{custom_model_forward.5} parent=0 // pred_check
    _
  $region71: #{custom_model_forward.5} parent=0 // pred_check_branch
    %64 = sbr.rel (0) target = $region73
  $region72: #{custom_model_forward.5} parent=0 // pred_region
    _
  $region73: #{custom_model_forward.5} parent=0 // pred_fallthru
    _
  // Predicated region
  $region74: #{custom_model_forward.5} parent=0 // pred_check
    _
  $region75: #{custom_model_forward.5} parent=0 // pred_check_branch
    %66 = sbr.rel (0) target = $region77
  $region76: #{custom_model_forward.5} parent=0 // pred_region
    _
  $region77: #{custom_model_forward.5} parent=0 // pred_fallthru
    _
  // Predicated region
  $region78: #{custom_model_forward.5} parent=0 // pred_check
    _
  $region79: #{custom_model_forward.5} parent=0 // pred_check_branch
    %68 = sbr.rel (0) target = $region81
  $region80: #{custom_model_forward.5} parent=0 // pred_region
    _
  $region81: #{custom_model_forward.5} parent=0 // pred_fallthru
    _
  // Predicated region
  $region82: #{custom_model_forward.5} parent=0 // pred_check
    _
  $region83: #{custom_model_forward.5} parent=0 // pred_check_branch
    %70 = sbr.rel (0) target = $region85
  $region84: #{custom_model_forward.5} parent=0 // pred_region
    _
  $region85: #{custom_model_forward.5} parent=0 // pred_fallthru
    _
  // Predicated region
  $region86: #{custom_model_forward.5} parent=0 // pred_check
    _
  $region87: #{custom_model_forward.5} parent=0 // pred_check_branch
    %72 = sbr.rel (0) target = $region89
  $region88: #{custom_model_forward.5} parent=0 // pred_region
    _
  $region89: #{custom_model_forward.5} parent=0 // pred_fallthru
    _
  // Predicated region
  $region90: #{custom_model_forward.5} parent=0 // pred_check
    _
  $region91: #{custom_model_forward.5} parent=0 // pred_check_branch
    %74 = sbr.rel (0) target = $region93
  $region92: #{custom_model_forward.5} parent=0 // pred_region
    _
  $region93: #{custom_model_forward.5} parent=0 // pred_fallthru
    _
  // Predicated region
  $region94: #{custom_model_forward.5} parent=0 // pred_check
    _
  $region95: #{custom_model_forward.5} parent=0 // pred_check_branch
    %76 = sbr.rel (0) target = $region97
  $region96: #{custom_model_forward.5} parent=0 // pred_region
    _
  $region97: #{custom_model_forward.5} parent=0 // pred_fallthru
    _
  %v78 = vld [vmem:[%s0] sm:$0xff]
  %v79 = vld [vmem:[%s0 + $0x8] sm:$0xff]
  %v80 = vld [vmem:[%s1] sm:$0xff]
  %v81 = vld [vmem:[%s1 + $0x8] sm:$0xff]
  %v82 = vld [vmem:[%s4] sm:$0x1]
  %v83 = vld [vmem:[%s5] sm:$0x1]
  %vm84 = vcmask 261120
  %v85 = vsel %vm84, %v78, 0.0
  %86 = vadd.xlane.f32.xlu0 %v85
  %v87 = vpop.xlane.xlu0 %86
  %v88 = vsel %vm84, %v79, 0.0
  %89 = vadd.xlane.f32.xlu0 %v88
  %v90 = vpop.xlane.xlu0 %89
  %v91 = vrcp.pop 32.0
  %v92 = vmul.f32 %v87, %v91
  %v93 = vmul.f32 %v90, %v91
  %v94 = vsub.f32 %v78, %v92
  %v95 = vsub.f32 %v79, %v93
  %v96 = vmul.f32 %v94, %v94
  %v97 = vmul.f32 %v95, %v95
  %v98 = vsel %vm84, %v96, 0.0
  %99 = vadd.xlane.f32.xlu0 %v98
  %v100 = vpop.xlane.xlu0 %99
  %v101 = vsel %vm84, %v97, 0.0
  %102 = vadd.xlane.f32.xlu0 %v101
  %v103 = vpop.xlane.xlu0 %102
  %v104 = vmul.f32 %v100, %v91
  %v105 = vmul.f32 %v103, %v91
  %v106 = vadd.f32 %v104, 1e-05
  %v107 = vadd.f32 %v105, 1e-05
  %v108 = vrsqrt.pop %v106
  %v109 = vrsqrt.pop %v107
  %v110 = vmul.f32 %v94, %v108
  %v111 = vmul.f32 %v95, %v109
  %v113 = vlaneseq
  %v114 = vshrl.u32 %v113, 7
  %v115 = vsub.s32 0, %v114
  %v116 = vrot.slane %v82, %v115
  %v118 = vmul.f32 %v110, %v116
  %v119 = vmul.f32 %v111, %v116
  %v121 = vlaneseq
  %v122 = vshrl.u32 %v121, 7
  %v123 = vsub.s32 0, %v122
  %v124 = vrot.slane %v83, %v123
  %v126 = vadd.f32 %v118, %v124
  %v127 = vadd.f32 %v119, %v124
  %v128 = vld [vmem:[%s7] sm:$0x1]
  %v129 = vpack.c.bf16 %v127, %v126
  %v130 = vld [vmem:[%s6] sm:$0xf]
  %v131 = vld [vmem:[%s6 + $0x4] sm:$0xf]
  %v132 = vld [vmem:[%s6 + $0x8] sm:$0xf]
  %v133 = vld [vmem:[%s6 + $0xc] sm:$0xf]
  %v135 = vlaneseq
  %v136 = vshrl.u32 %v135, 7
  %v137 = vsub.s32 0, %v136
  %v138 = vrot.slane %v128, %v137
  %v144 = vunpack.c.l.b16 %v130
  %v145 = vunpack.c.l.b16 %v131
  %v146 = vunpack.c.l.b16 %v132
  %v147 = vunpack.c.l.b16 %v133
  %v148 = vpack.c.b16 %v145, %v144
  %v149 = vpack.c.b16 %v147, %v146
  %v153 = vsel %vm84, %v129, 0
  %155 = vmatprep.subr.bf16.mxu0 0
  %156 = vmatpush1.bf16.msra.mxu0 %v148
  %157 = vmatprep.subr.bf16.mxu0 0
  %158 = vmatpush1.bf16.msra.mxu0 %v149
  %159 = vmatprep.subr.bf16.mxu0 0
  %160 = vmatpush1.bf16.msra.mxu0 0
  %161 = vmatprep.subr.bf16.mxu0 0
  %162 = vmatpush1.bf16.msra.mxu0 0
  %163 = vmatprep.subr.bf16.mxu0 0
  %164 = vmatpush1.bf16.msra.mxu0 0
  %165 = vmatprep.subr.bf16.mxu0 0
  %166 = vmatpush1.bf16.msra.mxu0 0
  %167 = vmatprep.subr.bf16.mxu0 0
  %168 = vmatpush1.bf16.msra.mxu0 0
  %169 = vmatprep.subr.bf16.mxu0 0
  %170 = vmatpush1.bf16.msra.mxu0 0
  %171 = vmatprep.subr.bf16.mxu0 0
  %172 = vmatpush1.bf16.msra.mxu0 0
  %173 = vmatprep.subr.bf16.mxu0 0
  %174 = vmatpush1.bf16.msra.mxu0 0
  %175 = vmatprep.subr.bf16.mxu0 0
  %176 = vmatpush1.bf16.msra.mxu0 0
  %177 = vmatprep.subr.bf16.mxu0 0
  %178 = vmatpush1.bf16.msra.mxu0 0
  %179 = vmatprep.subr.bf16.mxu0 0
  %180 = vmatpush1.bf16.msra.mxu0 0
  %181 = vmatprep.subr.bf16.mxu0 0
  %182 = vmatpush1.bf16.msra.mxu0 0
  %183 = vmatprep.subr.bf16.mxu0 0
  %184 = vmatpush1.bf16.msra.mxu0 0
  %185 = vmatprep.subr.bf16.mxu0 0
  %186 = vmatpush1.bf16.msra.mxu0 0
  %187 = vmatprep.mubr.bf16.mxu0 0
  %188 = vmatmul.mubr.bf16.gmra.mrb[0].mxu0 %v153
  %v189 = vpop.f32.mrb[0].mxu0
  %v190 = vadd.f32 %v138, %v189
  %v191 = vpop.f32.mrb[0].mxu0
  %v192 = vpop.f32.mrb[0].mxu0
  %v193 = vadd.f32 %v138, %v192
  %v194 = vpop.f32.mrb[0].mxu0
  %195 = vdwg.mxu0
  %v196 = vld [vmem:[%s2] sm:$0xff]
  %v197 = vld [vmem:[%s2 + $0x8] sm:$0xff]
  %v198 = vld [vmem:[%s9] sm:$0x1]
  %v200 = vlaneseq
  %v201 = vshrl.u32 %v200, 7
  %v202 = vsub.s32 0, %v201
  %v203 = vrot.slane %v198, %v202
  %v205 = vpack.c.bf16 %v190, %v190
  %v206 = vpack.c.bf16 %v193, %v193
  %208 = vrot.lane.b32.xlu0 %v205, 96
  %v209 = vpop.permute.xlu0 %208
  %vm210 = vcmask 130048
  %v212 = vsel %vm210, %v205, 0
  %v215 = vsel %vm210, %v209, 0
  %217 = vmatprep.subr.bf16.mxu0 0
  %218 = vmatpush1.bf16.xpose.msra.mxu0 %v215
  %219 = vmatprep.subr.bf16.mxu0 0
  %220 = vmatpush1.bf16.xpose.msra.mxu0 0
  %221 = vmatprep.subr.bf16.mxu0 0
  %222 = vmatpush1.bf16.xpose.msra.mxu0 0
  %223 = vmatprep.subr.bf16.mxu0 0
  %224 = vmatpush1.bf16.xpose.msra.mxu0 0
  %225 = vmatprep.subr.bf16.mxu0 0
  %226 = vmatpush1.bf16.xpose.msra.mxu0 0
  %227 = vmatprep.subr.bf16.mxu0 0
  %228 = vmatpush1.bf16.xpose.msra.mxu0 0
  %229 = vmatprep.subr.bf16.mxu0 0
  %230 = vmatpush1.bf16.xpose.msra.mxu0 0
  %231 = vmatprep.subr.bf16.mxu0 0
  %232 = vmatpush1.bf16.xpose.msra.mxu0 0
  %233 = vmatprep.subr.bf16.mxu0 0
  %234 = vmatpush1.bf16.xpose.msra.mxu0 0
  %235 = vmatprep.subr.bf16.mxu0 0
  %236 = vmatpush1.bf16.xpose.msra.mxu0 0
  %237 = vmatprep.subr.bf16.mxu0 0
  %238 = vmatpush1.bf16.xpose.msra.mxu0 0
  %239 = vmatprep.subr.bf16.mxu0 0
  %240 = vmatpush1.bf16.xpose.msra.mxu0 0
  %241 = vmatprep.subr.bf16.mxu0 0
  %242 = vmatpush1.bf16.xpose.msra.mxu0 0
  %243 = vmatprep.subr.bf16.mxu0 0
  %244 = vmatpush1.bf16.xpose.msra.mxu0 0
  %245 = vmatprep.subr.bf16.mxu0 0
  %246 = vmatpush1.bf16.xpose.msra.mxu0 0
  %247 = vmatprep.subr.bf16.mxu0 0
  %248 = vmatpush1.bf16.xpose.msra.mxu0 0
  %249 = vmatprep.mubr.bf16.mxu0 0
  %250 = vmatmul.mubr.bf16.gmra.mrb[0].mxu0 %v212
  %v251 = vpop.f32.mrb[0].mxu0
  %v252 = vadd.f32 0.0, %v251
  %v253 = vpop.f32.mrb[0].mxu0
  %v254 = vpop.f32.mrb[0].mxu0
  %v255 = vpop.f32.mrb[0].mxu0
  %256 = vdwg.mxu0
  %258 = vrot.lane.b32.xlu0 %v206, 96
  %v259 = vpop.permute.xlu0 %258
  %v261 = vsel %vm210, %v206, 0
  %v264 = vsel %vm210, %v259, 0
  %266 = vmatprep.subr.bf16.mxu0 0
  %267 = vmatpush1.bf16.xpose.msra.mxu0 %v264
  %268 = vmatprep.subr.bf16.mxu0 0
  %269 = vmatpush1.bf16.xpose.msra.mxu0 0
  %270 = vmatprep.subr.bf16.mxu0 0
  %271 = vmatpush1.bf16.xpose.msra.mxu0 0
  %272 = vmatprep.subr.bf16.mxu0 0
  %273 = vmatpush1.bf16.xpose.msra.mxu0 0
  %274 = vmatprep.subr.bf16.mxu0 0
  %275 = vmatpush1.bf16.xpose.msra.mxu0 0
  %276 = vmatprep.subr.bf16.mxu0 0
  %277 = vmatpush1.bf16.xpose.msra.mxu0 0
  %278 = vmatprep.subr.bf16.mxu0 0
  %279 = vmatpush1.bf16.xpose.msra.mxu0 0
  %280 = vmatprep.subr.bf16.mxu0 0
  %281 = vmatpush1.bf16.xpose.msra.mxu0 0
  %282 = vmatprep.subr.bf16.mxu0 0
  %283 = vmatpush1.bf16.xpose.msra.mxu0 0
  %284 = vmatprep.subr.bf16.mxu0 0
  %285 = vmatpush1.bf16.xpose.msra.mxu0 0
  %286 = vmatprep.subr.bf16.mxu0 0
  %287 = vmatpush1.bf16.xpose.msra.mxu0 0
  %288 = vmatprep.subr.bf16.mxu0 0
  %289 = vmatpush1.bf16.xpose.msra.mxu0 0
  %290 = vmatprep.subr.bf16.mxu0 0
  %291 = vmatpush1.bf16.xpose.msra.mxu0 0
  %292 = vmatprep.subr.bf16.mxu0 0
  %293 = vmatpush1.bf16.xpose.msra.mxu0 0
  %294 = vmatprep.subr.bf16.mxu0 0
  %295 = vmatpush1.bf16.xpose.msra.mxu0 0
  %296 = vmatprep.subr.bf16.mxu0 0
  %297 = vmatpush1.bf16.xpose.msra.mxu0 0
  %298 = vmatprep.mubr.bf16.mxu0 0
  %299 = vmatmul.mubr.bf16.gmra.mrb[0].mxu0 %v261
  %v300 = vpop.f32.mrb[0].mxu0
  %v301 = vadd.f32 0.0, %v300
  %v302 = vpop.f32.mrb[0].mxu0
  %v303 = vpop.f32.mrb[0].mxu0
  %v304 = vpop.f32.mrb[0].mxu0
  %305 = vdwg.mxu0
  %v306 = vmul.f32 %v252, 0.25
  %v307 = vmul.f32 %v301, 0.25
  %v308 = vadd.f32 %v306, %v196
  %v309 = vadd.f32 %v307, %v197
  %vm310 = vcmask 64512
  %v311 = vsel %vm310, %v308, -inf
  %312 = vmax.xlane.f32.xlu0 %v311
  %v313 = vpop.xlane.xlu0 %312
  %v314 = vsel %vm310, %v309, -inf
  %315 = vmax.xlane.f32.xlu0 %v314
  %v316 = vpop.xlane.xlu0 %315
  %v317 = vsub.f32 %v308, %v313
  %v318 = vsub.f32 %v309, %v316
  %v319 = vmul.f32 %v317, 1.442695
  %v320 = vpow.pop %v319
  %v321 = vmul.f32 %v318, 1.442695
  %v322 = vpow.pop %v321
  %v323 = vsel %vm310, %v320, 0.0
  %324 = vadd.xlane.f32.xlu0 %v323
  %v325 = vpop.xlane.xlu0 %324
  %v326 = vsel %vm310, %v322, 0.0
  %327 = vadd.xlane.f32.xlu0 %v326
  %v328 = vpop.xlane.xlu0 %327
  %v329 = vrcp.pop %v325
  %v330 = vrcp.pop %v328
  %v331 = vmul.f32 %v320, %v329
  %v332 = vmul.f32 %v322, %v330
  %v333 = vpack.c.bf16 %v331, %v331
  %v334 = vpack.c.bf16 %v332, %v332
  %335 = vrot.lane.b32.xlu0 %v205, 64
  %v336 = vpop.permute.xlu0 %335
  %v338 = vsel %vm310, %v333, 0
  %vm340 = vcmask 1043456
  %v342 = vsel %vm340, %v336, 0
  %344 = vmatprep.subr.bf16.mxu0 0
  %345 = vmatpush1.bf16.msra.mxu0 %v342
  %346 = vmatprep.subr.bf16.mxu0 0
  %347 = vmatpush1.bf16.msra.mxu0 0
  %348 = vmatprep.subr.bf16.mxu0 0
  %349 = vmatpush1.bf16.msra.mxu0 0
  %350 = vmatprep.subr.bf16.mxu0 0
  %351 = vmatpush1.bf16.msra.mxu0 0
  %352 = vmatprep.subr.bf16.mxu0 0
  %353 = vmatpush1.bf16.msra.mxu0 0
  %354 = vmatprep.subr.bf16.mxu0 0
  %355 = vmatpush1.bf16.msra.mxu0 0
  %356 = vmatprep.subr.bf16.mxu0 0
  %357 = vmatpush1.bf16.msra.mxu0 0
  %358 = vmatprep.subr.bf16.mxu0 0
  %359 = vmatpush1.bf16.msra.mxu0 0
  %360 = vmatprep.subr.bf16.mxu0 0
  %361 = vmatpush1.bf16.msra.mxu0 0
  %362 = vmatprep.subr.bf16.mxu0 0
  %363 = vmatpush1.bf16.msra.mxu0 0
  %364 = vmatprep.subr.bf16.mxu0 0
  %365 = vmatpush1.bf16.msra.mxu0 0
  %366 = vmatprep.subr.bf16.mxu0 0
  %367 = vmatpush1.bf16.msra.mxu0 0
  %368 = vmatprep.subr.bf16.mxu0 0
  %369 = vmatpush1.bf16.msra.mxu0 0
  %370 = vmatprep.subr.bf16.mxu0 0
  %371 = vmatpush1.bf16.msra.mxu0 0
  %372 = vmatprep.subr.bf16.mxu0 0
  %373 = vmatpush1.bf16.msra.mxu0 0
  %374 = vmatprep.subr.bf16.mxu0 0
  %375 = vmatpush1.bf16.msra.mxu0 0
  %376 = vmatprep.mubr.bf16.mxu0 0
  %377 = vmatmul.mubr.bf16.gmra.mrb[0].mxu0 %v338
  %v378 = vpop.f32.mrb[0].mxu0
  %v379 = vadd.f32 0.0, %v378
  %v380 = vpop.f32.mrb[0].mxu0
  %v381 = vpop.f32.mrb[0].mxu0
  %v382 = vpop.f32.mrb[0].mxu0
  %383 = vdwg.mxu0
  %384 = vrot.lane.b32.xlu0 %v206, 64
  %v385 = vpop.permute.xlu0 %384
  %v387 = vsel %vm310, %v334, 0
  %v390 = vsel %vm340, %v385, 0
  %392 = vmatprep.subr.bf16.mxu0 0
  %393 = vmatpush1.bf16.msra.mxu0 %v390
  %394 = vmatprep.subr.bf16.mxu0 0
  %395 = vmatpush1.bf16.msra.mxu0 0
  %396 = vmatprep.subr.bf16.mxu0 0
  %397 = vmatpush1.bf16.msra.mxu0 0
  %398 = vmatprep.subr.bf16.mxu0 0
  %399 = vmatpush1.bf16.msra.mxu0 0
  %400 = vmatprep.subr.bf16.mxu0 0
  %401 = vmatpush1.bf16.msra.mxu0 0
  %402 = vmatprep.subr.bf16.mxu0 0
  %403 = vmatpush1.bf16.msra.mxu0 0
  %404 = vmatprep.subr.bf16.mxu0 0
  %405 = vmatpush1.bf16.msra.mxu0 0
  %406 = vmatprep.subr.bf16.mxu0 0
  %407 = vmatpush1.bf16.msra.mxu0 0
  %408 = vmatprep.subr.bf16.mxu0 0
  %409 = vmatpush1.bf16.msra.mxu0 0
  %410 = vmatprep.subr.bf16.mxu0 0
  %411 = vmatpush1.bf16.msra.mxu0 0
  %412 = vmatprep.subr.bf16.mxu0 0
  %413 = vmatpush1.bf16.msra.mxu0 0
  %414 = vmatprep.subr.bf16.mxu0 0
  %415 = vmatpush1.bf16.msra.mxu0 0
  %416 = vmatprep.subr.bf16.mxu0 0
  %417 = vmatpush1.bf16.msra.mxu0 0
  %418 = vmatprep.subr.bf16.mxu0 0
  %419 = vmatpush1.bf16.msra.mxu0 0
  %420 = vmatprep.subr.bf16.mxu0 0
  %421 = vmatpush1.bf16.msra.mxu0 0
  %422 = vmatprep.subr.bf16.mxu0 0
  %423 = vmatpush1.bf16.msra.mxu0 0
  %424 = vmatprep.mubr.bf16.mxu0 0
  %425 = vmatmul.mubr.bf16.gmra.mrb[0].mxu0 %v387
  %v426 = vpop.f32.mrb[0].mxu0
  %v427 = vadd.f32 0.0, %v426
  %v428 = vpop.f32.mrb[0].mxu0
  %v429 = vpop.f32.mrb[0].mxu0
  %v430 = vpop.f32.mrb[0].mxu0
  %431 = vdwg.mxu0
  %v432 = vpack.c.bf16 %v427, %v379
  %v433 = vld [vmem:[%s8] sm:$0xf]
  %v434 = vld [vmem:[%s8 + $0x4] sm:$0xf]
  %v437 = vunpack.c.l.b16 %v433
  %v438 = vunpack.c.l.b16 %v434
  %v439 = vpack.c.b16 %v438, %v437
  %v442 = vsel %vm210, %v432, 0
  %444 = vmatprep.subr.bf16.mxu0 0
  %445 = vmatpush1.bf16.msra.mxu0 %v439
  %446 = vmatprep.subr.bf16.mxu0 0
  %447 = vmatpush1.bf16.msra.mxu0 0
  %448 = vmatprep.subr.bf16.mxu0 0
  %449 = vmatpush1.bf16.msra.mxu0 0
  %450 = vmatprep.subr.bf16.mxu0 0
  %451 = vmatpush1.bf16.msra.mxu0 0
  %452 = vmatprep.subr.bf16.mxu0 0
  %453 = vmatpush1.bf16.msra.mxu0 0
  %454 = vmatprep.subr.bf16.mxu0 0
  %455 = vmatpush1.bf16.msra.mxu0 0
  %456 = vmatprep.subr.bf16.mxu0 0
  %457 = vmatpush1.bf16.msra.mxu0 0
  %458 = vmatprep.subr.bf16.mxu0 0
  %459 = vmatpush1.bf16.msra.mxu0 0
  %460 = vmatprep.subr.bf16.mxu0 0
  %461 = vmatpush1.bf16.msra.mxu0 0
  %462 = vmatprep.subr.bf16.mxu0 0
  %463 = vmatpush1.bf16.msra.mxu0 0
  %464 = vmatprep.subr.bf16.mxu0 0
  %465 = vmatpush1.bf16.msra.mxu0 0
  %466 = vmatprep.subr.bf16.mxu0 0
  %467 = vmatpush1.bf16.msra.mxu0 0
  %468 = vmatprep.subr.bf16.mxu0 0
  %469 = vmatpush1.bf16.msra.mxu0 0
  %470 = vmatprep.subr.bf16.mxu0 0
  %471 = vmatpush1.bf16.msra.mxu0 0
  %472 = vmatprep.subr.bf16.mxu0 0
  %473 = vmatpush1.bf16.msra.mxu0 0
  %474 = vmatprep.subr.bf16.mxu0 0
  %475 = vmatpush1.bf16.msra.mxu0 0
  %476 = vmatprep.mubr.bf16.mxu0 0
  %477 = vmatmul.mubr.bf16.gmra.mrb[0].mxu0 %v442
  %v478 = vpop.f32.mrb[0].mxu0
  %v479 = vadd.f32 0.0, %v478
  %v480 = vpop.f32.mrb[0].mxu0
  %v481 = vpop.f32.mrb[0].mxu0
  %v482 = vadd.f32 0.0, %v481
  %v483 = vpop.f32.mrb[0].mxu0
  %484 = vdwg.mxu0
  %v485 = vadd.f32 %v203, %v479
  %v486 = vadd.f32 %v203, %v482
  %487 = vrot.lane.b32.xlu0 %v205, 112
  %v488 = vpop.permute.xlu0 %487
  %489 = vrot.lane.b32.xlu0 %v205, 80
  %v490 = vpop.permute.xlu0 %489
  %v492 = vsel %vm210, %v488, 0
  %v495 = vsel %vm210, %v490, 0
  %497 = vmatprep.subr.bf16.mxu0 0
  %498 = vmatpush1.bf16.xpose.msra.mxu0 %v495
  %499 = vmatprep.subr.bf16.mxu0 0
  %500 = vmatpush1.bf16.xpose.msra.mxu0 0
  %501 = vmatprep.subr.bf16.mxu0 0
  %502 = vmatpush1.bf16.xpose.msra.mxu0 0
  %503 = vmatprep.subr.bf16.mxu0 0
  %504 = vmatpush1.bf16.xpose.msra.mxu0 0
  %505 = vmatprep.subr.bf16.mxu0 0
  %506 = vmatpush1.bf16.xpose.msra.mxu0 0
  %507 = vmatprep.subr.bf16.mxu0 0
  %508 = vmatpush1.bf16.xpose.msra.mxu0 0
  %509 = vmatprep.subr.bf16.mxu0 0
  %510 = vmatpush1.bf16.xpose.msra.mxu0 0
  %511 = vmatprep.subr.bf16.mxu0 0
  %512 = vmatpush1.bf16.xpose.msra.mxu0 0
  %513 = vmatprep.subr.bf16.mxu0 0
  %514 = vmatpush1.bf16.xpose.msra.mxu0 0
  %515 = vmatprep.subr.bf16.mxu0 0
  %516 = vmatpush1.bf16.xpose.msra.mxu0 0
  %517 = vmatprep.subr.bf16.mxu0 0
  %518 = vmatpush1.bf16.xpose.msra.mxu0 0
  %519 = vmatprep.subr.bf16.mxu0 0
  %520 = vmatpush1.bf16.xpose.msra.mxu0 0
  %521 = vmatprep.subr.bf16.mxu0 0
  %522 = vmatpush1.bf16.xpose.msra.mxu0 0
  %523 = vmatprep.subr.bf16.mxu0 0
  %524 = vmatpush1.bf16.xpose.msra.mxu0 0
  %525 = vmatprep.subr.bf16.mxu0 0
  %526 = vmatpush1.bf16.xpose.msra.mxu0 0
  %527 = vmatprep.subr.bf16.mxu0 0
  %528 = vmatpush1.bf16.xpose.msra.mxu0 0
  %529 = vmatprep.mubr.bf16.mxu0 0
  %530 = vmatmul.mubr.bf16.gmra.mrb[0].mxu0 %v492
  %v531 = vpop.f32.mrb[0].mxu0
  %v532 = vadd.f32 0.0, %v531
  %v533 = vpop.f32.mrb[0].mxu0
  %v534 = vpop.f32.mrb[0].mxu0
  %v535 = vpop.f32.mrb[0].mxu0
  %536 = vdwg.mxu0
  %537 = vrot.lane.b32.xlu0 %v206, 112
  %v538 = vpop.permute.xlu0 %537
  %539 = vrot.lane.b32.xlu0 %v206, 80
  %v540 = vpop.permute.xlu0 %539
  %v542 = vsel %vm210, %v538, 0
  %v545 = vsel %vm210, %v540, 0
  %547 = vmatprep.subr.bf16.mxu0 0
  %548 = vmatpush1.bf16.xpose.msra.mxu0 %v545
  %549 = vmatprep.subr.bf16.mxu0 0
  %550 = vmatpush1.bf16.xpose.msra.mxu0 0
  %551 = vmatprep.subr.bf16.mxu0 0
  %552 = vmatpush1.bf16.xpose.msra.mxu0 0
  %553 = vmatprep.subr.bf16.mxu0 0
  %554 = vmatpush1.bf16.xpose.msra.mxu0 0
  %555 = vmatprep.subr.bf16.mxu0 0
  %556 = vmatpush1.bf16.xpose.msra.mxu0 0
  %557 = vmatprep.subr.bf16.mxu0 0
  %558 = vmatpush1.bf16.xpose.msra.mxu0 0
  %559 = vmatprep.subr.bf16.mxu0 0
  %560 = vmatpush1.bf16.xpose.msra.mxu0 0
  %561 = vmatprep.subr.bf16.mxu0 0
  %562 = vmatpush1.bf16.xpose.msra.mxu0 0
  %563 = vmatprep.subr.bf16.mxu0 0
  %564 = vmatpush1.bf16.xpose.msra.mxu0 0
  %565 = vmatprep.subr.bf16.mxu0 0
  %566 = vmatpush1.bf16.xpose.msra.mxu0 0
  %567 = vmatprep.subr.bf16.mxu0 0
  %568 = vmatpush1.bf16.xpose.msra.mxu0 0
  %569 = vmatprep.subr.bf16.mxu0 0
  %570 = vmatpush1.bf16.xpose.msra.mxu0 0
  %571 = vmatprep.subr.bf16.mxu0 0
  %572 = vmatpush1.bf16.xpose.msra.mxu0 0
  %573 = vmatprep.subr.bf16.mxu0 0
  %574 = vmatpush1.bf16.xpose.msra.mxu0 0
  %575 = vmatprep.subr.bf16.mxu0 0
  %576 = vmatpush1.bf16.xpose.msra.mxu0 0
  %577 = vmatprep.subr.bf16.mxu0 0
  %578 = vmatpush1.bf16.xpose.msra.mxu0 0
  %579 = vmatprep.mubr.bf16.mxu0 0
  %580 = vmatmul.mubr.bf16.gmra.mrb[0].mxu0 %v542
  %v581 = vpop.f32.mrb[0].mxu0
  %v582 = vadd.f32 0.0, %v581
  %v583 = vpop.f32.mrb[0].mxu0
  %v584 = vpop.f32.mrb[0].mxu0
  %v585 = vpop.f32.mrb[0].mxu0
  %586 = vdwg.mxu0
  %v587 = vmul.f32 %v532, 0.25
  %v588 = vmul.f32 %v582, 0.25
  %v589 = vadd.f32 %v587, %v196
  %v590 = vadd.f32 %v588, %v197
  %v591 = vsel %vm310, %v589, -inf
  %592 = vmax.xlane.f32.xlu0 %v591
  %v593 = vpop.xlane.xlu0 %592
  %v594 = vsel %vm310, %v590, -inf
  %595 = vmax.xlane.f32.xlu0 %v594
  %v596 = vpop.xlane.xlu0 %595
  %v597 = vsub.f32 %v589, %v593
  %v598 = vsub.f32 %v590, %v596
  %v599 = vmul.f32 %v597, 1.442695
  %v600 = vpow.pop %v599
  %v601 = vmul.f32 %v598, 1.442695
  %v602 = vpow.pop %v601
  %v603 = vsel %vm310, %v600, 0.0
  %604 = vadd.xlane.f32.xlu0 %v603
  %v605 = vpop.xlane.xlu0 %604
  %v606 = vsel %vm310, %v602, 0.0
  %607 = vadd.xlane.f32.xlu0 %v606
  %v608 = vpop.xlane.xlu0 %607
  %v609 = vrcp.pop %v605
  %v610 = vrcp.pop %v608
  %v611 = vmul.f32 %v600, %v609
  %v612 = vmul.f32 %v602, %v610
  %v613 = vpack.c.bf16 %v611, %v611
  %v614 = vpack.c.bf16 %v612, %v612
  %615 = vrot.lane.b32.xlu0 %v205, 48
  %v616 = vpop.permute.xlu0 %615
  %v618 = vsel %vm310, %v613, 0
  %v621 = vsel %vm340, %v616, 0
  %623 = vmatprep.subr.bf16.mxu0 0
  %624 = vmatpush1.bf16.msra.mxu0 %v621
  %625 = vmatprep.subr.bf16.mxu0 0
  %626 = vmatpush1.bf16.msra.mxu0 0
  %627 = vmatprep.subr.bf16.mxu0 0
  %628 = vmatpush1.bf16.msra.mxu0 0
  %629 = vmatprep.subr.bf16.mxu0 0
  %630 = vmatpush1.bf16.msra.mxu0 0
  %631 = vmatprep.subr.bf16.mxu0 0
  %632 = vmatpush1.bf16.msra.mxu0 0
  %633 = vmatprep.subr.bf16.mxu0 0
  %634 = vmatpush1.bf16.msra.mxu0 0
  %635 = vmatprep.subr.bf16.mxu0 0
  %636 = vmatpush1.bf16.msra.mxu0 0
  %637 = vmatprep.subr.bf16.mxu0 0
  %638 = vmatpush1.bf16.msra.mxu0 0
  %639 = vmatprep.subr.bf16.mxu0 0
  %640 = vmatpush1.bf16.msra.mxu0 0
  %641 = vmatprep.subr.bf16.mxu0 0
  %642 = vmatpush1.bf16.msra.mxu0 0
  %643 = vmatprep.subr.bf16.mxu0 0
  %644 = vmatpush1.bf16.msra.mxu0 0
  %645 = vmatprep.subr.bf16.mxu0 0
  %646 = vmatpush1.bf16.msra.mxu0 0
  %647 = vmatprep.subr.bf16.mxu0 0
  %648 = vmatpush1.bf16.msra.mxu0 0
  %649 = vmatprep.subr.bf16.mxu0 0
  %650 = vmatpush1.bf16.msra.mxu0 0
  %651 = vmatprep.subr.bf16.mxu0 0
  %652 = vmatpush1.bf16.msra.mxu0 0
  %653 = vmatprep.subr.bf16.mxu0 0
  %654 = vmatpush1.bf16.msra.mxu0 0
  %655 = vmatprep.mubr.bf16.mxu0 0
  %656 = vmatmul.mubr.bf16.gmra.mrb[0].mxu0 %v618
  %v657 = vpop.f32.mrb[0].mxu0
  %v658 = vadd.f32 0.0, %v657
  %v659 = vpop.f32.mrb[0].mxu0
  %v660 = vpop.f32.mrb[0].mxu0
  %v661 = vpop.f32.mrb[0].mxu0
  %662 = vdwg.mxu0
  %663 = vrot.lane.b32.xlu0 %v206, 48
  %v664 = vpop.permute.xlu0 %663
  %v666 = vsel %vm310, %v614, 0
  %v669 = vsel %vm340, %v664, 0
  %671 = vmatprep.subr.bf16.mxu0 0
  %672 = vmatpush1.bf16.msra.mxu0 %v669
  %673 = vmatprep.subr.bf16.mxu0 0
  %674 = vmatpush1.bf16.msra.mxu0 0
  %675 = vmatprep.subr.bf16.mxu0 0
  %676 = vmatpush1.bf16.msra.mxu0 0
  %677 = vmatprep.subr.bf16.mxu0 0
  %678 = vmatpush1.bf16.msra.mxu0 0
  %679 = vmatprep.subr.bf16.mxu0 0
  %680 = vmatpush1.bf16.msra.mxu0 0
  %681 = vmatprep.subr.bf16.mxu0 0
  %682 = vmatpush1.bf16.msra.mxu0 0
  %683 = vmatprep.subr.bf16.mxu0 0
  %684 = vmatpush1.bf16.msra.mxu0 0
  %685 = vmatprep.subr.bf16.mxu0 0
  %686 = vmatpush1.bf16.msra.mxu0 0
  %687 = vmatprep.subr.bf16.mxu0 0
  %688 = vmatpush1.bf16.msra.mxu0 0
  %689 = vmatprep.subr.bf16.mxu0 0
  %690 = vmatpush1.bf16.msra.mxu0 0
  %691 = vmatprep.subr.bf16.mxu0 0
  %692 = vmatpush1.bf16.msra.mxu0 0
  %693 = vmatprep.subr.bf16.mxu0 0
  %694 = vmatpush1.bf16.msra.mxu0 0
  %695 = vmatprep.subr.bf16.mxu0 0
  %696 = vmatpush1.bf16.msra.mxu0 0
  %697 = vmatprep.subr.bf16.mxu0 0
  %698 = vmatpush1.bf16.msra.mxu0 0
  %699 = vmatprep.subr.bf16.mxu0 0
  %700 = vmatpush1.bf16.msra.mxu0 0
  %701 = vmatprep.subr.bf16.mxu0 0
  %702 = vmatpush1.bf16.msra.mxu0 0
  %703 = vmatprep.mubr.bf16.mxu0 0
  %704 = vmatmul.mubr.bf16.gmra.mrb[0].mxu0 %v666
  %v705 = vpop.f32.mrb[0].mxu0
  %v706 = vadd.f32 0.0, %v705
  %v707 = vpop.f32.mrb[0].mxu0
  %v708 = vpop.f32.mrb[0].mxu0
  %v709 = vpop.f32.mrb[0].mxu0
  %710 = vdwg.mxu0
  %v711 = vpack.c.bf16 %v706, %v658
  %v712 = vld [vmem:[%s8 + $0x8] sm:$0xf]
  %v713 = vld [vmem:[%s8 + $0xc] sm:$0xf]
  %v716 = vunpack.c.l.b16 %v712
  %v717 = vunpack.c.l.b16 %v713
  %v718 = vpack.c.b16 %v717, %v716
  %v721 = vsel %vm210, %v711, 0
  %723 = vmatprep.subr.bf16.mxu0 0
  %724 = vmatpush1.bf16.msra.mxu0 %v718
  %725 = vmatprep.subr.bf16.mxu0 0
  %726 = vmatpush1.bf16.msra.mxu0 0
  %727 = vmatprep.subr.bf16.mxu0 0
  %728 = vmatpush1.bf16.msra.mxu0 0
  %729 = vmatprep.subr.bf16.mxu0 0
  %730 = vmatpush1.bf16.msra.mxu0 0
  %731 = vmatprep.subr.bf16.mxu0 0
  %732 = vmatpush1.bf16.msra.mxu0 0
  %733 = vmatprep.subr.bf16.mxu0 0
  %734 = vmatpush1.bf16.msra.mxu0 0
  %735 = vmatprep.subr.bf16.mxu0 0
  %736 = vmatpush1.bf16.msra.mxu0 0
  %737 = vmatprep.subr.bf16.mxu0 0
  %738 = vmatpush1.bf16.msra.mxu0 0
  %739 = vmatprep.subr.bf16.mxu0 0
  %740 = vmatpush1.bf16.msra.mxu0 0
  %741 = vmatprep.subr.bf16.mxu0 0
  %742 = vmatpush1.bf16.msra.mxu0 0
  %743 = vmatprep.subr.bf16.mxu0 0
  %744 = vmatpush1.bf16.msra.mxu0 0
  %745 = vmatprep.subr.bf16.mxu0 0
  %746 = vmatpush1.bf16.msra.mxu0 0
  %747 = vmatprep.subr.bf16.mxu0 0
  %748 = vmatpush1.bf16.msra.mxu0 0
  %749 = vmatprep.subr.bf16.mxu0 0
  %750 = vmatpush1.bf16.msra.mxu0 0
  %751 = vmatprep.subr.bf16.mxu0 0
  %752 = vmatpush1.bf16.msra.mxu0 0
  %753 = vmatprep.subr.bf16.mxu0 0
  %754 = vmatpush1.bf16.msra.mxu0 0
  %755 = vmatprep.mubr.bf16.mxu0 0
  %756 = vmatmul.mubr.bf16.gmra.mrb[0].mxu0 %v721
  %v757 = vpop.f32.mrb[0].mxu0
  %v758 = vadd.f32 0.0, %v757
  %v759 = vpop.f32.mrb[0].mxu0
  %v760 = vpop.f32.mrb[0].mxu0
  %v761 = vadd.f32 0.0, %v760
  %v762 = vpop.f32.mrb[0].mxu0
  %763 = vdwg.mxu0
  %v764 = vadd.f32 %v485, %v758
  %v765 = vadd.f32 %v486, %v761
  %v766 = vadd.f32 %v78, %v764
  %v767 = vadd.f32 %v79, %v765
  %v768 = vld [vmem:[%s10] sm:$0x1]
  %v769 = vld [vmem:[%s11] sm:$0x1]
  %v770 = vsel %vm84, %v766, 0.0
  %771 = vadd.xlane.f32.xlu0 %v770
  %v772 = vpop.xlane.xlu0 %771
  %v773 = vsel %vm84, %v767, 0.0
  %774 = vadd.xlane.f32.xlu0 %v773
  %v775 = vpop.xlane.xlu0 %774
  %v776 = vmul.f32 %v772, %v91
  %v777 = vmul.f32 %v775, %v91
  %v778 = vsub.f32 %v766, %v776
  %v779 = vsub.f32 %v767, %v777
  %v780 = vmul.f32 %v778, %v778
  %v781 = vmul.f32 %v779, %v779
  %v782 = vsel %vm84, %v780, 0.0
  %783 = vadd.xlane.f32.xlu0 %v782
  %v784 = vpop.xlane.xlu0 %783
  %v785 = vsel %vm84, %v781, 0.0
  %786 = vadd.xlane.f32.xlu0 %v785
  %v787 = vpop.xlane.xlu0 %786
  %v788 = vmul.f32 %v784, %v91
  %v789 = vmul.f32 %v787, %v91
  %v790 = vadd.f32 %v788, 1e-05
  %v791 = vadd.f32 %v789, 1e-05
  %v792 = vrsqrt.pop %v790
  %v793 = vrsqrt.pop %v791
  %v794 = vmul.f32 %v778, %v792
  %v795 = vmul.f32 %v779, %v793
  %v797 = vlaneseq
  %v798 = vshrl.u32 %v797, 7
  %v799 = vsub.s32 0, %v798
  %v800 = vrot.slane %v768, %v799
  %v802 = vmul.f32 %v794, %v800
  %v803 = vmul.f32 %v795, %v800
  %v805 = vlaneseq
  %v806 = vshrl.u32 %v805, 7
  %v807 = vsub.s32 0, %v806
  %v808 = vrot.slane %v769, %v807
  %v810 = vadd.f32 %v802, %v808
  %v811 = vadd.f32 %v803, %v808
  %v812 = vld [vmem:[%s13] sm:$0x1]
  %v813 = vpack.c.bf16 %v811, %v810
  %v814 = vld [vmem:[%s12] sm:$0xf]
  %v815 = vld [vmem:[%s12 + $0x4] sm:$0xf]
  %v816 = vld [vmem:[%s12 + $0x8] sm:$0xf]
  %v817 = vld [vmem:[%s12 + $0xc] sm:$0xf]
  %v819 = vlaneseq
  %v820 = vshrl.u32 %v819, 7
  %v821 = vsub.s32 0, %v820
  %v822 = vrot.slane %v812, %v821
  %v828 = vunpack.c.l.b16 %v814
  %v829 = vunpack.c.l.b16 %v815
  %v830 = vunpack.c.l.b16 %v816
  %v831 = vunpack.c.l.b16 %v817
  %v832 = vpack.c.b16 %v829, %v828
  %v833 = vpack.c.b16 %v831, %v830
  %v837 = vsel %vm84, %v813, 0
  %839 = vmatprep.subr.bf16.mxu0 0
  %840 = vmatpush1.bf16.msra.mxu0 %v832
  %841 = vmatprep.subr.bf16.mxu0 0
  %842 = vmatpush1.bf16.msra.mxu0 %v833
  %843 = vmatprep.subr.bf16.mxu0 0
  %844 = vmatpush1.bf16.msra.mxu0 0
  %845 = vmatprep.subr.bf16.mxu0 0
  %846 = vmatpush1.bf16.msra.mxu0 0
  %847 = vmatprep.subr.bf16.mxu0 0
  %848 = vmatpush1.bf16.msra.mxu0 0
  %849 = vmatprep.subr.bf16.mxu0 0
  %850 = vmatpush1.bf16.msra.mxu0 0
  %851 = vmatprep.subr.bf16.mxu0 0
  %852 = vmatpush1.bf16.msra.mxu0 0
  %853 = vmatprep.subr.bf16.mxu0 0
  %854 = vmatpush1.bf16.msra.mxu0 0
  %855 = vmatprep.subr.bf16.mxu0 0
  %856 = vmatpush1.bf16.msra.mxu0 0
  %857 = vmatprep.subr.bf16.mxu0 0
  %858 = vmatpush1.bf16.msra.mxu0 0
  %859 = vmatprep.subr.bf16.mxu0 0
  %860 = vmatpush1.bf16.msra.mxu0 0
  %861 = vmatprep.subr.bf16.mxu0 0
  %862 = vmatpush1.bf16.msra.mxu0 0
  %863 = vmatprep.subr.bf16.mxu0 0
  %864 = vmatpush1.bf16.msra.mxu0 0
  %865 = vmatprep.subr.bf16.mxu0 0
  %866 = vmatpush1.bf16.msra.mxu0 0
  %867 = vmatprep.subr.bf16.mxu0 0
  %868 = vmatpush1.bf16.msra.mxu0 0
  %869 = vmatprep.subr.bf16.mxu0 0
  %870 = vmatpush1.bf16.msra.mxu0 0
  %871 = vmatprep.mubr.bf16.mxu0 0
  %872 = vmatmul.mubr.bf16.gmra.mrb[0].mxu0 %v837
  %v873 = vpop.f32.mrb[0].mxu0
  %v874 = vadd.f32 %v822, %v873
  %v875 = vpop.f32.mrb[0].mxu0
  %v876 = vpop.f32.mrb[0].mxu0
  %v877 = vadd.f32 %v822, %v876
  %v878 = vpop.f32.mrb[0].mxu0
  %879 = vdwg.mxu0
  %v880 = vld [vmem:[%s15] sm:$0x1]
  %v881 = vpack.c.bf16 %v81, %v80
  %v882 = vld [vmem:[%s14] sm:$0xf]
  %v883 = vld [vmem:[%s14 + $0x4] sm:$0xf]
  %v884 = vld [vmem:[%s14 + $0x8] sm:$0xf]
  %v885 = vld [vmem:[%s14 + $0xc] sm:$0xf]
  %v887 = vlaneseq
  %v888 = vshrl.u32 %v887, 7
  %v889 = vsub.s32 0, %v888
  %v890 = vrot.slane %v880, %v889
  %v896 = vunpack.c.l.b16 %v882
  %v897 = vunpack.c.l.b16 %v883
  %v898 = vunpack.c.l.b16 %v884
  %v899 = vunpack.c.l.b16 %v885
  %v900 = vpack.c.b16 %v897, %v896
  %v901 = vpack.c.b16 %v899, %v898
  %v905 = vsel %vm84, %v881, 0
  %907 = vmatprep.subr.bf16.mxu0 0
  %908 = vmatpush1.bf16.msra.mxu0 %v900
  %909 = vmatprep.subr.bf16.mxu0 0
  %910 = vmatpush1.bf16.msra.mxu0 %v901
  %911 = vmatprep.subr.bf16.mxu0 0
  %912 = vmatpush1.bf16.msra.mxu0 0
  %913 = vmatprep.subr.bf16.mxu0 0
  %914 = vmatpush1.bf16.msra.mxu0 0
  %915 = vmatprep.subr.bf16.mxu0 0
  %916 = vmatpush1.bf16.msra.mxu0 0
  %917 = vmatprep.subr.bf16.mxu0 0
  %918 = vmatpush1.bf16.msra.mxu0 0
  %919 = vmatprep.subr.bf16.mxu0 0
  %920 = vmatpush1.bf16.msra.mxu0 0
  %921 = vmatprep.subr.bf16.mxu0 0
  %922 = vmatpush1.bf16.msra.mxu0 0
  %923 = vmatprep.subr.bf16.mxu0 0
  %924 = vmatpush1.bf16.msra.mxu0 0
  %925 = vmatprep.subr.bf16.mxu0 0
  %926 = vmatpush1.bf16.msra.mxu0 0
  %927 = vmatprep.subr.bf16.mxu0 0
  %928 = vmatpush1.bf16.msra.mxu0 0
  %929 = vmatprep.subr.bf16.mxu0 0
  %930 = vmatpush1.bf16.msra.mxu0 0
  %931 = vmatprep.subr.bf16.mxu0 0
  %932 = vmatpush1.bf16.msra.mxu0 0
  %933 = vmatprep.subr.bf16.mxu0 0
  %934 = vmatpush1.bf16.msra.mxu0 0
  %935 = vmatprep.subr.bf16.mxu0 0
  %936 = vmatpush1.bf16.msra.mxu0 0
  %937 = vmatprep.subr.bf16.mxu0 0
  %938 = vmatpush1.bf16.msra.mxu0 0
  %939 = vmatprep.mubr.bf16.mxu0 0
  %940 = vmatmul.mubr.bf16.gmra.mrb[0].mxu0 %v905
  %v941 = vpop.f32.mrb[0].mxu0
  %v942 = vadd.f32 %v890, %v941
  %v943 = vpop.f32.mrb[0].mxu0
  %v944 = vpop.f32.mrb[0].mxu0
  %v945 = vadd.f32 %v890, %v944
  %v946 = vpop.f32.mrb[0].mxu0
  %947 = vdwg.mxu0
  %v948 = vld [vmem:[%s3] sm:$0xff]
  %v949 = vld [vmem:[%s3 + $0x8] sm:$0xff]
  %v950 = vld [vmem:[%s17] sm:$0x1]
  %v952 = vlaneseq
  %v953 = vshrl.u32 %v952, 7
  %v954 = vsub.s32 0, %v953
  %v955 = vrot.slane %v950, %v954
  %v957 = vpack.c.bf16 %v874, %v874
  %v958 = vpack.c.bf16 %v877, %v877
  %v959 = vpack.c.bf16 %v942, %v942
  %v960 = vpack.c.bf16 %v945, %v945
  %v962 = vsel %vm210, %v957, 0
  %v965 = vsel %vm210, %v959, 0
  %967 = vmatprep.subr.bf16.mxu0 0
  %968 = vmatpush1.bf16.xpose.msra.mxu0 %v965
  %969 = vmatprep.subr.bf16.mxu0 0
  %970 = vmatpush1.bf16.xpose.msra.mxu0 0
  %971 = vmatprep.subr.bf16.mxu0 0
  %972 = vmatpush1.bf16.xpose.msra.mxu0 0
  %973 = vmatprep.subr.bf16.mxu0 0
  %974 = vmatpush1.bf16.xpose.msra.mxu0 0
  %975 = vmatprep.subr.bf16.mxu0 0
  %976 = vmatpush1.bf16.xpose.msra.mxu0 0
  %977 = vmatprep.subr.bf16.mxu0 0
  %978 = vmatpush1.bf16.xpose.msra.mxu0 0
  %979 = vmatprep.subr.bf16.mxu0 0
  %980 = vmatpush1.bf16.xpose.msra.mxu0 0
  %981 = vmatprep.subr.bf16.mxu0 0
  %982 = vmatpush1.bf16.xpose.msra.mxu0 0
  %983 = vmatprep.subr.bf16.mxu0 0
  %984 = vmatpush1.bf16.xpose.msra.mxu0 0
  %985 = vmatprep.subr.bf16.mxu0 0
  %986 = vmatpush1.bf16.xpose.msra.mxu0 0
  %987 = vmatprep.subr.bf16.mxu0 0
  %988 = vmatpush1.bf16.xpose.msra.mxu0 0
  %989 = vmatprep.subr.bf16.mxu0 0
  %990 = vmatpush1.bf16.xpose.msra.mxu0 0
  %991 = vmatprep.subr.bf16.mxu0 0
  %992 = vmatpush1.bf16.xpose.msra.mxu0 0
  %993 = vmatprep.subr.bf16.mxu0 0
  %994 = vmatpush1.bf16.xpose.msra.mxu0 0
  %995 = vmatprep.subr.bf16.mxu0 0
  %996 = vmatpush1.bf16.xpose.msra.mxu0 0
  %997 = vmatprep.subr.bf16.mxu0 0
  %998 = vmatpush1.bf16.xpose.msra.mxu0 0
  %999 = vmatprep.mubr.bf16.mxu0 0
  %1000 = vmatmul.mubr.bf16.gmra.mrb[0].mxu0 %v962
  %v1001 = vpop.f32.mrb[0].mxu0
  %v1002 = vadd.f32 0.0, %v1001
  %v1003 = vpop.f32.mrb[0].mxu0
  %v1004 = vpop.f32.mrb[0].mxu0
  %v1005 = vpop.f32.mrb[0].mxu0
  %1006 = vdwg.mxu0
  %v1008 = vsel %vm210, %v958, 0
  %v1011 = vsel %vm210, %v960, 0
  %1013 = vmatprep.subr.bf16.mxu0 0
  %1014 = vmatpush1.bf16.xpose.msra.mxu0 %v1011
  %1015 = vmatprep.subr.bf16.mxu0 0
  %1016 = vmatpush1.bf16.xpose.msra.mxu0 0
  %1017 = vmatprep.subr.bf16.mxu0 0
  %1018 = vmatpush1.bf16.xpose.msra.mxu0 0
  %1019 = vmatprep.subr.bf16.mxu0 0
  %1020 = vmatpush1.bf16.xpose.msra.mxu0 0
  %1021 = vmatprep.subr.bf16.mxu0 0
  %1022 = vmatpush1.bf16.xpose.msra.mxu0 0
  %1023 = vmatprep.subr.bf16.mxu0 0
  %1024 = vmatpush1.bf16.xpose.msra.mxu0 0
  %1025 = vmatprep.subr.bf16.mxu0 0
  %1026 = vmatpush1.bf16.xpose.msra.mxu0 0
  %1027 = vmatprep.subr.bf16.mxu0 0
  %1028 = vmatpush1.bf16.xpose.msra.mxu0 0
  %1029 = vmatprep.subr.bf16.mxu0 0
  %1030 = vmatpush1.bf16.xpose.msra.mxu0 0
  %1031 = vmatprep.subr.bf16.mxu0 0
  %1032 = vmatpush1.bf16.xpose.msra.mxu0 0
  %1033 = vmatprep.subr.bf16.mxu0 0
  %1034 = vmatpush1.bf16.xpose.msra.mxu0 0
  %1035 = vmatprep.subr.bf16.mxu0 0
  %1036 = vmatpush1.bf16.xpose.msra.mxu0 0
  %1037 = vmatprep.subr.bf16.mxu0 0
  %1038 = vmatpush1.bf16.xpose.msra.mxu0 0
  %1039 = vmatprep.subr.bf16.mxu0 0
  %1040 = vmatpush1.bf16.xpose.msra.mxu0 0
  %1041 = vmatprep.subr.bf16.mxu0 0
  %1042 = vmatpush1.bf16.xpose.msra.mxu0 0
  %1043 = vmatprep.subr.bf16.mxu0 0
  %1044 = vmatpush1.bf16.xpose.msra.mxu0 0
  %1045 = vmatprep.mubr.bf16.mxu0 0
  %1046 = vmatmul.mubr.bf16.gmra.mrb[0].mxu0 %v1008
  %v1047 = vpop.f32.mrb[0].mxu0
  %v1048 = vadd.f32 0.0, %v1047
  %v1049 = vpop.f32.mrb[0].mxu0
  %v1050 = vpop.f32.mrb[0].mxu0
  %v1051 = vpop.f32.mrb[0].mxu0
  %1052 = vdwg.mxu0
  %v1053 = vmul.f32 %v1002, 0.25
  %v1054 = vmul.f32 %v1048, 0.25
  %v1055 = vadd.f32 %v1053, %v948
  %v1056 = vadd.f32 %v1054, %v949
  %v1057 = vsel %vm310, %v1055, -inf
  %1058 = vmax.xlane.f32.xlu0 %v1057
  %v1059 = vpop.xlane.xlu0 %1058
  %v1060 = vsel %vm310, %v1056, -inf
  %1061 = vmax.xlane.f32.xlu0 %v1060
  %v1062 = vpop.xlane.xlu0 %1061
  %v1063 = vsub.f32 %v1055, %v1059
  %v1064 = vsub.f32 %v1056, %v1062
  %v1065 = vmul.f32 %v1063, 1.442695
  %v1066 = vpow.pop %v1065
  %v1067 = vmul.f32 %v1064, 1.442695
  %v1068 = vpow.pop %v1067
  %v1069 = vsel %vm310, %v1066, 0.0
  %1070 = vadd.xlane.f32.xlu0 %v1069
  %v1071 = vpop.xlane.xlu0 %1070
  %v1072 = vsel %vm310, %v1068, 0.0
  %1073 = vadd.xlane.f32.xlu0 %v1072
  %v1074 = vpop.xlane.xlu0 %1073
  %v1075 = vrcp.pop %v1071
  %v1076 = vrcp.pop %v1074
  %v1077 = vmul.f32 %v1066, %v1075
  %v1078 = vmul.f32 %v1068, %v1076
  %v1079 = vpack.c.bf16 %v1077, %v1077
  %v1080 = vpack.c.bf16 %v1078, %v1078
  %1082 = vrot.lane.b32.xlu0 %v959, 96
  %v1083 = vpop.permute.xlu0 %1082
  %v1085 = vsel %vm310, %v1079, 0
  %v1088 = vsel %vm340, %v1083, 0
  %1090 = vmatprep.subr.bf16.mxu0 0
  %1091 = vmatpush1.bf16.msra.mxu0 %v1088
  %1092 = vmatprep.subr.bf16.mxu0 0
  %1093 = vmatpush1.bf16.msra.mxu0 0
  %1094 = vmatprep.subr.bf16.mxu0 0
  %1095 = vmatpush1.bf16.msra.mxu0 0
  %1096 = vmatprep.subr.bf16.mxu0 0
  %1097 = vmatpush1.bf16.msra.mxu0 0
  %1098 = vmatprep.subr.bf16.mxu0 0
  %1099 = vmatpush1.bf16.msra.mxu0 0
  %1100 = vmatprep.subr.bf16.mxu0 0
  %1101 = vmatpush1.bf16.msra.mxu0 0
  %1102 = vmatprep.subr.bf16.mxu0 0
  %1103 = vmatpush1.bf16.msra.mxu0 0
  %1104 = vmatprep.subr.bf16.mxu0 0
  %1105 = vmatpush1.bf16.msra.mxu0 0
  %1106 = vmatprep.subr.bf16.mxu0 0
  %1107 = vmatpush1.bf16.msra.mxu0 0
  %1108 = vmatprep.subr.bf16.mxu0 0
  %1109 = vmatpush1.bf16.msra.mxu0 0
  %1110 = vmatprep.subr.bf16.mxu0 0
  %1111 = vmatpush1.bf16.msra.mxu0 0
  %1112 = vmatprep.subr.bf16.mxu0 0
  %1113 = vmatpush1.bf16.msra.mxu0 0
  %1114 = vmatprep.subr.bf16.mxu0 0
  %1115 = vmatpush1.bf16.msra.mxu0 0
  %1116 = vmatprep.subr.bf16.mxu0 0
  %1117 = vmatpush1.bf16.msra.mxu0 0
  %1118 = vmatprep.subr.bf16.mxu0 0
  %1119 = vmatpush1.bf16.msra.mxu0 0
  %1120 = vmatprep.subr.bf16.mxu0 0
  %1121 = vmatpush1.bf16.msra.mxu0 0
  %1122 = vmatprep.mubr.bf16.mxu0 0
  %1123 = vmatmul.mubr.bf16.gmra.mrb[0].mxu0 %v1085
  %v1124 = vpop.f32.mrb[0].mxu0
  %v1125 = vadd.f32 0.0, %v1124
  %v1126 = vpop.f32.mrb[0].mxu0
  %v1127 = vpop.f32.mrb[0].mxu0
  %v1128 = vpop.f32.mrb[0].mxu0
  %1129 = vdwg.mxu0
  %1131 = vrot.lane.b32.xlu0 %v960, 96
  %v1132 = vpop.permute.xlu0 %1131
  %v1134 = vsel %vm310, %v1080, 0
  %v1137 = vsel %vm340, %v1132, 0
  %1139 = vmatprep.subr.bf16.mxu0 0
  %1140 = vmatpush1.bf16.msra.mxu0 %v1137
  %1141 = vmatprep.subr.bf16.mxu0 0
  %1142 = vmatpush1.bf16.msra.mxu0 0
  %1143 = vmatprep.subr.bf16.mxu0 0
  %1144 = vmatpush1.bf16.msra.mxu0 0
  %1145 = vmatprep.subr.bf16.mxu0 0
  %1146 = vmatpush1.bf16.msra.mxu0 0
  %1147 = vmatprep.subr.bf16.mxu0 0
  %1148 = vmatpush1.bf16.msra.mxu0 0
  %1149 = vmatprep.subr.bf16.mxu0 0
  %1150 = vmatpush1.bf16.msra.mxu0 0
  %1151 = vmatprep.subr.bf16.mxu0 0
  %1152 = vmatpush1.bf16.msra.mxu0 0
  %1153 = vmatprep.subr.bf16.mxu0 0
  %1154 = vmatpush1.bf16.msra.mxu0 0
  %1155 = vmatprep.subr.bf16.mxu0 0
  %1156 = vmatpush1.bf16.msra.mxu0 0
  %1157 = vmatprep.subr.bf16.mxu0 0
  %1158 = vmatpush1.bf16.msra.mxu0 0
  %1159 = vmatprep.subr.bf16.mxu0 0
  %1160 = vmatpush1.bf16.msra.mxu0 0
  %1161 = vmatprep.subr.bf16.mxu0 0
  %1162 = vmatpush1.bf16.msra.mxu0 0
  %1163 = vmatprep.subr.bf16.mxu0 0
  %1164 = vmatpush1.bf16.msra.mxu0 0
  %1165 = vmatprep.subr.bf16.mxu0 0
  %1166 = vmatpush1.bf16.msra.mxu0 0
  %1167 = vmatprep.subr.bf16.mxu0 0
  %1168 = vmatpush1.bf16.msra.mxu0 0
  %1169 = vmatprep.subr.bf16.mxu0 0
  %1170 = vmatpush1.bf16.msra.mxu0 0
  %1171 = vmatprep.mubr.bf16.mxu0 0
  %1172 = vmatmul.mubr.bf16.gmra.mrb[0].mxu0 %v1134
  %v1173 = vpop.f32.mrb[0].mxu0
  %v1174 = vadd.f32 0.0, %v1173
  %v1175 = vpop.f32.mrb[0].mxu0
  %v1176 = vpop.f32.mrb[0].mxu0
  %v1177 = vpop.f32.mrb[0].mxu0
  %1178 = vdwg.mxu0
  %v1179 = vpack.c.bf16 %v1174, %v1125
  %v1180 = vld [vmem:[%s16] sm:$0xf]
  %v1181 = vld [vmem:[%s16 + $0x4] sm:$0xf]
  %v1184 = vunpack.c.l.b16 %v1180
  %v1185 = vunpack.c.l.b16 %v1181
  %v1186 = vpack.c.b16 %v1185, %v1184
  %v1189 = vsel %vm210, %v1179, 0
  %1191 = vmatprep.subr.bf16.mxu0 0
  %1192 = vmatpush1.bf16.msra.mxu0 %v1186
  %1193 = vmatprep.subr.bf16.mxu0 0
  %1194 = vmatpush1.bf16.msra.mxu0 0
  %1195 = vmatprep.subr.bf16.mxu0 0
  %1196 = vmatpush1.bf16.msra.mxu0 0
  %1197 = vmatprep.subr.bf16.mxu0 0
  %1198 = vmatpush1.bf16.msra.mxu0 0
  %1199 = vmatprep.subr.bf16.mxu0 0
  %1200 = vmatpush1.bf16.msra.mxu0 0
  %1201 = vmatprep.subr.bf16.mxu0 0
  %1202 = vmatpush1.bf16.msra.mxu0 0
  %1203 = vmatprep.subr.bf16.mxu0 0
  %1204 = vmatpush1.bf16.msra.mxu0 0
  %1205 = vmatprep.subr.bf16.mxu0 0
  %1206 = vmatpush1.bf16.msra.mxu0 0
  %1207 = vmatprep.subr.bf16.mxu0 0
  %1208 = vmatpush1.bf16.msra.mxu0 0
  %1209 = vmatprep.subr.bf16.mxu0 0
  %1210 = vmatpush1.bf16.msra.mxu0 0
  %1211 = vmatprep.subr.bf16.mxu0 0
  %1212 = vmatpush1.bf16.msra.mxu0 0
  %1213 = vmatprep.subr.bf16.mxu0 0
  %1214 = vmatpush1.bf16.msra.mxu0 0
  %1215 = vmatprep.subr.bf16.mxu0 0
  %1216 = vmatpush1.bf16.msra.mxu0 0
  %1217 = vmatprep.subr.bf16.mxu0 0
  %1218 = vmatpush1.bf16.msra.mxu0 0
  %1219 = vmatprep.subr.bf16.mxu0 0
  %1220 = vmatpush1.bf16.msra.mxu0 0
  %1221 = vmatprep.subr.bf16.mxu0 0
  %1222 = vmatpush1.bf16.msra.mxu0 0
  %1223 = vmatprep.mubr.bf16.mxu0 0
  %1224 = vmatmul.mubr.bf16.gmra.mrb[0].mxu0 %v1189
  %v1225 = vpop.f32.mrb[0].mxu0
  %v1226 = vadd.f32 0.0, %v1225
  %v1227 = vpop.f32.mrb[0].mxu0
  %v1228 = vpop.f32.mrb[0].mxu0
  %v1229 = vadd.f32 0.0, %v1228
  %v1230 = vpop.f32.mrb[0].mxu0
  %1231 = vdwg.mxu0
  %v1232 = vadd.f32 %v955, %v1226
  %v1233 = vadd.f32 %v955, %v1229
  %1235 = vrot.lane.b32.xlu0 %v957, 112
  %v1236 = vpop.permute.xlu0 %1235
  %1237 = vrot.lane.b32.xlu0 %v959, 112
  %v1238 = vpop.permute.xlu0 %1237
  %v1240 = vsel %vm210, %v1236, 0
  %v1243 = vsel %vm210, %v1238, 0
  %1245 = vmatprep.subr.bf16.mxu0 0
  %1246 = vmatpush1.bf16.xpose.msra.mxu0 %v1243
  %1247 = vmatprep.subr.bf16.mxu0 0
  %1248 = vmatpush1.bf16.xpose.msra.mxu0 0
  %1249 = vmatprep.subr.bf16.mxu0 0
  %1250 = vmatpush1.bf16.xpose.msra.mxu0 0
  %1251 = vmatprep.subr.bf16.mxu0 0
  %1252 = vmatpush1.bf16.xpose.msra.mxu0 0
  %1253 = vmatprep.subr.bf16.mxu0 0
  %1254 = vmatpush1.bf16.xpose.msra.mxu0 0
  %1255 = vmatprep.subr.bf16.mxu0 0
  %1256 = vmatpush1.bf16.xpose.msra.mxu0 0
  %1257 = vmatprep.subr.bf16.mxu0 0
  %1258 = vmatpush1.bf16.xpose.msra.mxu0 0
  %1259 = vmatprep.subr.bf16.mxu0 0
  %1260 = vmatpush1.bf16.xpose.msra.mxu0 0
  %1261 = vmatprep.subr.bf16.mxu0 0
  %1262 = vmatpush1.bf16.xpose.msra.mxu0 0
  %1263 = vmatprep.subr.bf16.mxu0 0
  %1264 = vmatpush1.bf16.xpose.msra.mxu0 0
  %1265 = vmatprep.subr.bf16.mxu0 0
  %1266 = vmatpush1.bf16.xpose.msra.mxu0 0
  %1267 = vmatprep.subr.bf16.mxu0 0
  %1268 = vmatpush1.bf16.xpose.msra.mxu0 0
  %1269 = vmatprep.subr.bf16.mxu0 0
  %1270 = vmatpush1.bf16.xpose.msra.mxu0 0
  %1271 = vmatprep.subr.bf16.mxu0 0
  %1272 = vmatpush1.bf16.xpose.msra.mxu0 0
  %1273 = vmatprep.subr.bf16.mxu0 0
  %1274 = vmatpush1.bf16.xpose.msra.mxu0 0
  %1275 = vmatprep.subr.bf16.mxu0 0
  %1276 = vmatpush1.bf16.xpose.msra.mxu0 0
  %1277 = vmatprep.mubr.bf16.mxu0 0
  %1278 = vmatmul.mubr.bf16.gmra.mrb[0].mxu0 %v1240
  %v1279 = vpop.f32.mrb[0].mxu0
  %v1280 = vadd.f32 0.0, %v1279
  %v1281 = vpop.f32.mrb[0].mxu0
  %v1282 = vpop.f32.mrb[0].mxu0
  %v1283 = vpop.f32.mrb[0].mxu0
  %1284 = vdwg.mxu0
  %1286 = vrot.lane.b32.xlu0 %v958, 112
  %v1287 = vpop.permute.xlu0 %1286
  %1288 = vrot.lane.b32.xlu0 %v960, 112
  %v1289 = vpop.permute.xlu0 %1288
  %v1291 = vsel %vm210, %v1287, 0
  %v1294 = vsel %vm210, %v1289, 0
  %1296 = vmatprep.subr.bf16.mxu0 0
  %1297 = vmatpush1.bf16.xpose.msra.mxu0 %v1294
  %1298 = vmatprep.subr.bf16.mxu0 0
  %1299 = vmatpush1.bf16.xpose.msra.mxu0 0
  %1300 = vmatprep.subr.bf16.mxu0 0
  %1301 = vmatpush1.bf16.xpose.msra.mxu0 0
  %1302 = vmatprep.subr.bf16.mxu0 0
  %1303 = vmatpush1.bf16.xpose.msra.mxu0 0
  %1304 = vmatprep.subr.bf16.mxu0 0
  %1305 = vmatpush1.bf16.xpose.msra.mxu0 0
  %1306 = vmatprep.subr.bf16.mxu0 0
  %1307 = vmatpush1.bf16.xpose.msra.mxu0 0
  %1308 = vmatprep.subr.bf16.mxu0 0
  %1309 = vmatpush1.bf16.xpose.msra.mxu0 0
  %1310 = vmatprep.subr.bf16.mxu0 0
  %1311 = vmatpush1.bf16.xpose.msra.mxu0 0
  %1312 = vmatprep.subr.bf16.mxu0 0
  %1313 = vmatpush1.bf16.xpose.msra.mxu0 0
  %1314 = vmatprep.subr.bf16.mxu0 0
  %1315 = vmatpush1.bf16.xpose.msra.mxu0 0
  %1316 = vmatprep.subr.bf16.mxu0 0
  %1317 = vmatpush1.bf16.xpose.msra.mxu0 0
  %1318 = vmatprep.subr.bf16.mxu0 0
  %1319 = vmatpush1.bf16.xpose.msra.mxu0 0
  %1320 = vmatprep.subr.bf16.mxu0 0
  %1321 = vmatpush1.bf16.xpose.msra.mxu0 0
  %1322 = vmatprep.subr.bf16.mxu0 0
  %1323 = vmatpush1.bf16.xpose.msra.mxu0 0
  %1324 = vmatprep.subr.bf16.mxu0 0
  %1325 = vmatpush1.bf16.xpose.msra.mxu0 0
  %1326 = vmatprep.subr.bf16.mxu0 0
  %1327 = vmatpush1.bf16.xpose.msra.mxu0 0
  %1328 = vmatprep.mubr.bf16.mxu0 0
  %1329 = vmatmul.mubr.bf16.gmra.mrb[0].mxu0 %v1291
  %v1330 = vpop.f32.mrb[0].mxu0
  %v1331 = vadd.f32 0.0, %v1330
  %v1332 = vpop.f32.mrb[0].mxu0
  %v1333 = vpop.f32.mrb[0].mxu0
  %v1334 = vpop.f32.mrb[0].mxu0
  %1335 = vdwg.mxu0
  %v1336 = vmul.f32 %v1280, 0.25
  %v1337 = vmul.f32 %v1331, 0.25
  %v1338 = vadd.f32 %v1336, %v948
  %v1339 = vadd.f32 %v1337, %v949
  %v1340 = vsel %vm310, %v1338, -inf
  %1341 = vmax.xlane.f32.xlu0 %v1340
  %v1342 = vpop.xlane.xlu0 %1341
  %v1343 = vsel %vm310, %v1339, -inf
  %1344 = vmax.xlane.f32.xlu0 %v1343
  %v1345 = vpop.xlane.xlu0 %1344
  %v1346 = vsub.f32 %v1338, %v1342
  %v1347 = vsub.f32 %v1339, %v1345
  %v1348 = vmul.f32 %v1346, 1.442695
  %v1349 = vpow.pop %v1348
  %v1350 = vmul.f32 %v1347, 1.442695
  %v1351 = vpow.pop %v1350
  %v1352 = vsel %vm310, %v1349, 0.0
  %1353 = vadd.xlane.f32.xlu0 %v1352
  %v1354 = vpop.xlane.xlu0 %1353
  %v1355 = vsel %vm310, %v1351, 0.0
  %1356 = vadd.xlane.f32.xlu0 %v1355
  %v1357 = vpop.xlane.xlu0 %1356
  %v1358 = vrcp.pop %v1354
  %v1359 = vrcp.pop %v1357
  %v1360 = vmul.f32 %v1349, %v1358
  %v1361 = vmul.f32 %v1351, %v1359
  %v1362 = vpack.c.bf16 %v1360, %v1360
  %v1363 = vpack.c.bf16 %v1361, %v1361
  %1364 = vrot.lane.b32.xlu0 %v959, 80
  %v1365 = vpop.permute.xlu0 %1364
  %v1367 = vsel %vm310, %v1362, 0
  %v1370 = vsel %vm340, %v1365, 0
  %1372 = vmatprep.subr.bf16.mxu0 0
  %1373 = vmatpush1.bf16.msra.mxu0 %v1370
  %1374 = vmatprep.subr.bf16.mxu0 0
  %1375 = vmatpush1.bf16.msra.mxu0 0
  %1376 = vmatprep.subr.bf16.mxu0 0
  %1377 = vmatpush1.bf16.msra.mxu0 0
  %1378 = vmatprep.subr.bf16.mxu0 0
  %1379 = vmatpush1.bf16.msra.mxu0 0
  %1380 = vmatprep.subr.bf16.mxu0 0
  %1381 = vmatpush1.bf16.msra.mxu0 0
  %1382 = vmatprep.subr.bf16.mxu0 0
  %1383 = vmatpush1.bf16.msra.mxu0 0
  %1384 = vmatprep.subr.bf16.mxu0 0
  %1385 = vmatpush1.bf16.msra.mxu0 0
  %1386 = vmatprep.subr.bf16.mxu0 0
  %1387 = vmatpush1.bf16.msra.mxu0 0
  %1388 = vmatprep.subr.bf16.mxu0 0
  %1389 = vmatpush1.bf16.msra.mxu0 0
  %1390 = vmatprep.subr.bf16.mxu0 0
  %1391 = vmatpush1.bf16.msra.mxu0 0
  %1392 = vmatprep.subr.bf16.mxu0 0
  %1393 = vmatpush1.bf16.msra.mxu0 0
  %1394 = vmatprep.subr.bf16.mxu0 0
  %1395 = vmatpush1.bf16.msra.mxu0 0
  %1396 = vmatprep.subr.bf16.mxu0 0
  %1397 = vmatpush1.bf16.msra.mxu0 0
  %1398 = vmatprep.subr.bf16.mxu0 0
  %1399 = vmatpush1.bf16.msra.mxu0 0
  %1400 = vmatprep.subr.bf16.mxu0 0
  %1401 = vmatpush1.bf16.msra.mxu0 0
  %1402 = vmatprep.subr.bf16.mxu0 0
  %1403 = vmatpush1.bf16.msra.mxu0 0
  %1404 = vmatprep.mubr.bf16.mxu0 0
  %1405 = vmatmul.mubr.bf16.gmra.mrb[0].mxu0 %v1367
  %v1406 = vpop.f32.mrb[0].mxu0
  %v1407 = vadd.f32 0.0, %v1406
  %v1408 = vpop.f32.mrb[0].mxu0
  %v1409 = vpop.f32.mrb[0].mxu0
  %v1410 = vpop.f32.mrb[0].mxu0
  %1411 = vdwg.mxu0
  %1412 = vrot.lane.b32.xlu0 %v960, 80
  %v1413 = vpop.permute.xlu0 %1412
  %v1415 = vsel %vm310, %v1363, 0
  %v1418 = vsel %vm340, %v1413, 0
  %1420 = vmatprep.subr.bf16.mxu0 0
  %1421 = vmatpush1.bf16.msra.mxu0 %v1418
  %1422 = vmatprep.subr.bf16.mxu0 0
  %1423 = vmatpush1.bf16.msra.mxu0 0
  %1424 = vmatprep.subr.bf16.mxu0 0
  %1425 = vmatpush1.bf16.msra.mxu0 0
  %1426 = vmatprep.subr.bf16.mxu0 0
  %1427 = vmatpush1.bf16.msra.mxu0 0
  %1428 = vmatprep.subr.bf16.mxu0 0
  %1429 = vmatpush1.bf16.msra.mxu0 0
  %1430 = vmatprep.subr.bf16.mxu0 0
  %1431 = vmatpush1.bf16.msra.mxu0 0
  %1432 = vmatprep.subr.bf16.mxu0 0
  %1433 = vmatpush1.bf16.msra.mxu0 0
  %1434 = vmatprep.subr.bf16.mxu0 0
  %1435 = vmatpush1.bf16.msra.mxu0 0
  %1436 = vmatprep.subr.bf16.mxu0 0
  %1437 = vmatpush1.bf16.msra.mxu0 0
  %1438 = vmatprep.subr.bf16.mxu0 0
  %1439 = vmatpush1.bf16.msra.mxu0 0
  %1440 = vmatprep.subr.bf16.mxu0 0
  %1441 = vmatpush1.bf16.msra.mxu0 0
  %1442 = vmatprep.subr.bf16.mxu0 0
  %1443 = vmatpush1.bf16.msra.mxu0 0
  %1444 = vmatprep.subr.bf16.mxu0 0
  %1445 = vmatpush1.bf16.msra.mxu0 0
  %1446 = vmatprep.subr.bf16.mxu0 0
  %1447 = vmatpush1.bf16.msra.mxu0 0
  %1448 = vmatprep.subr.bf16.mxu0 0
  %1449 = vmatpush1.bf16.msra.mxu0 0
  %1450 = vmatprep.subr.bf16.mxu0 0
  %1451 = vmatpush1.bf16.msra.mxu0 0
  %1452 = vmatprep.mubr.bf16.mxu0 0
  %1453 = vmatmul.mubr.bf16.gmra.mrb[0].mxu0 %v1415
  %v1454 = vpop.f32.mrb[0].mxu0
  %v1455 = vadd.f32 0.0, %v1454
  %v1456 = vpop.f32.mrb[0].mxu0
  %v1457 = vpop.f32.mrb[0].mxu0
  %v1458 = vpop.f32.mrb[0].mxu0
  %1459 = vdwg.mxu0
  %v1460 = vpack.c.bf16 %v1455, %v1407
  %v1461 = vld [vmem:[%s16 + $0x8] sm:$0xf]
  %v1462 = vld [vmem:[%s16 + $0xc] sm:$0xf]
  %v1465 = vunpack.c.l.b16 %v1461
  %v1466 = vunpack.c.l.b16 %v1462
  %v1467 = vpack.c.b16 %v1466, %v1465
  %v1470 = vsel %vm210, %v1460, 0
  %1472 = vmatprep.subr.bf16.mxu0 0
  %1473 = vmatpush1.bf16.msra.mxu0 %v1467
  %1474 = vmatprep.subr.bf16.mxu0 0
  %1475 = vmatpush1.bf16.msra.mxu0 0
  %1476 = vmatprep.subr.bf16.mxu0 0
  %1477 = vmatpush1.bf16.msra.mxu0 0
  %1478 = vmatprep.subr.bf16.mxu0 0
  %1479 = vmatpush1.bf16.msra.mxu0 0
  %1480 = vmatprep.subr.bf16.mxu0 0
  %1481 = vmatpush1.bf16.msra.mxu0 0
  %1482 = vmatprep.subr.bf16.mxu0 0
  %1483 = vmatpush1.bf16.msra.mxu0 0
  %1484 = vmatprep.subr.bf16.mxu0 0
  %1485 = vmatpush1.bf16.msra.mxu0 0
  %1486 = vmatprep.subr.bf16.mxu0 0
  %1487 = vmatpush1.bf16.msra.mxu0 0
  %1488 = vmatprep.subr.bf16.mxu0 0
  %1489 = vmatpush1.bf16.msra.mxu0 0
  %1490 = vmatprep.subr.bf16.mxu0 0
  %1491 = vmatpush1.bf16.msra.mxu0 0
  %1492 = vmatprep.subr.bf16.mxu0 0
  %1493 = vmatpush1.bf16.msra.mxu0 0
  %1494 = vmatprep.subr.bf16.mxu0 0
  %1495 = vmatpush1.bf16.msra.mxu0 0
  %1496 = vmatprep.subr.bf16.mxu0 0
  %1497 = vmatpush1.bf16.msra.mxu0 0
  %1498 = vmatprep.subr.bf16.mxu0 0
  %1499 = vmatpush1.bf16.msra.mxu0 0
  %1500 = vmatprep.subr.bf16.mxu0 0
  %1501 = vmatpush1.bf16.msra.mxu0 0
  %1502 = vmatprep.subr.bf16.mxu0 0
  %1503 = vmatpush1.bf16.msra.mxu0 0
  %1504 = vmatprep.mubr.bf16.mxu0 0
  %1505 = vmatmul.mubr.bf16.gmra.mrb[0].mxu0 %v1470
  %v1506 = vpop.f32.mrb[0].mxu0
  %v1507 = vadd.f32 0.0, %v1506
  %v1508 = vpop.f32.mrb[0].mxu0
  %v1509 = vpop.f32.mrb[0].mxu0
  %v1510 = vadd.f32 0.0, %v1509
  %v1511 = vpop.f32.mrb[0].mxu0
  %1512 = vdwg.mxu0
  %v1513 = vadd.f32 %v1232, %v1507
  %v1514 = vadd.f32 %v1233, %v1510
  %v1515 = vadd.f32 %v766, %v1513
  %v1516 = vadd.f32 %v767, %v1514
  %v1517 = vld [vmem:[%s18] sm:$0x1]
  %v1518 = vld [vmem:[%s19] sm:$0x1]
  %v1519 = vsel %vm84, %v1515, 0.0
  %1520 = vadd.xlane.f32.xlu0 %v1519
  %v1521 = vpop.xlane.xlu0 %1520
  %v1522 = vsel %vm84, %v1516, 0.0
  %1523 = vadd.xlane.f32.xlu0 %v1522
  %v1524 = vpop.xlane.xlu0 %1523
  %v1525 = vmul.f32 %v1521, %v91
  %v1526 = vmul.f32 %v1524, %v91
  %v1527 = vsub.f32 %v1515, %v1525
  %v1528 = vsub.f32 %v1516, %v1526
  %v1529 = vmul.f32 %v1527, %v1527
  %v1530 = vmul.f32 %v1528, %v1528
  %v1531 = vsel %vm84, %v1529, 0.0
  %1532 = vadd.xlane.f32.xlu0 %v1531
  %v1533 = vpop.xlane.xlu0 %1532
  %v1534 = vsel %vm84, %v1530, 0.0
  %1535 = vadd.xlane.f32.xlu0 %v1534
  %v1536 = vpop.xlane.xlu0 %1535
  %v1537 = vmul.f32 %v1533, %v91
  %v1538 = vmul.f32 %v1536, %v91
  %v1539 = vadd.f32 %v1537, 1e-05
  %v1540 = vadd.f32 %v1538, 1e-05
  %v1541 = vrsqrt.pop %v1539
  %v1542 = vrsqrt.pop %v1540
  %v1543 = vmul.f32 %v1527, %v1541
  %v1544 = vmul.f32 %v1528, %v1542
  %v1546 = vlaneseq
  %v1547 = vshrl.u32 %v1546, 7
  %v1548 = vsub.s32 0, %v1547
  %v1549 = vrot.slane %v1517, %v1548
  %v1551 = vmul.f32 %v1543, %v1549
  %v1552 = vmul.f32 %v1544, %v1549
  %v1554 = vlaneseq
  %v1555 = vshrl.u32 %v1554, 7
  %v1556 = vsub.s32 0, %v1555
  %v1557 = vrot.slane %v1518, %v1556
  %v1559 = vadd.f32 %v1551, %v1557
  %v1560 = vadd.f32 %v1552, %v1557
  %v1561 = vld [vmem:[%s21] sm:$0x1]
  %v1562 = vld [vmem:[%s23] sm:$0x1]
  %v1563 = vpack.c.bf16 %v1560, %v1559
  %v1564 = vld [vmem:[%s20] sm:$0xf]
  %v1565 = vld [vmem:[%s20 + $0x4] sm:$0xf]
  %v1566 = vld [vmem:[%s20 + $0x8] sm:$0xf]
  %v1567 = vld [vmem:[%s20 + $0xc] sm:$0xf]
  %v1569 = vlaneseq
  %v1570 = vshrl.u32 %v1569, 7
  %v1571 = vsub.s32 0, %v1570
  %v1572 = vrot.slane %v1561, %v1571
  %v1578 = vunpack.c.l.b16 %v1564
  %v1579 = vunpack.c.l.b16 %v1565
  %v1580 = vunpack.c.l.b16 %v1566
  %v1581 = vunpack.c.l.b16 %v1567
  %v1582 = vpack.c.b16 %v1579, %v1578
  %v1583 = vpack.c.b16 %v1581, %v1580
  %v1587 = vsel %vm84, %v1563, 0
  %1589 = vmatprep.subr.bf16.mxu0 0
  %1590 = vmatpush1.bf16.msra.mxu0 %v1582
  %1591 = vmatprep.subr.bf16.mxu0 0
  %1592 = vmatpush1.bf16.msra.mxu0 %v1583
  %1593 = vmatprep.subr.bf16.mxu0 0
  %1594 = vmatpush1.bf16.msra.mxu0 0
  %1595 = vmatprep.subr.bf16.mxu0 0
  %1596 = vmatpush1.bf16.msra.mxu0 0
  %1597 = vmatprep.subr.bf16.mxu0 0
  %1598 = vmatpush1.bf16.msra.mxu0 0
  %1599 = vmatprep.subr.bf16.mxu0 0
  %1600 = vmatpush1.bf16.msra.mxu0 0
  %1601 = vmatprep.subr.bf16.mxu0 0
  %1602 = vmatpush1.bf16.msra.mxu0 0
  %1603 = vmatprep.subr.bf16.mxu0 0
  %1604 = vmatpush1.bf16.msra.mxu0 0
  %1605 = vmatprep.subr.bf16.mxu0 0
  %1606 = vmatpush1.bf16.msra.mxu0 0
  %1607 = vmatprep.subr.bf16.mxu0 0
  %1608 = vmatpush1.bf16.msra.mxu0 0
  %1609 = vmatprep.subr.bf16.mxu0 0
  %1610 = vmatpush1.bf16.msra.mxu0 0
  %1611 = vmatprep.subr.bf16.mxu0 0
  %1612 = vmatpush1.bf16.msra.mxu0 0
  %1613 = vmatprep.subr.bf16.mxu0 0
  %1614 = vmatpush1.bf16.msra.mxu0 0
  %1615 = vmatprep.subr.bf16.mxu0 0
  %1616 = vmatpush1.bf16.msra.mxu0 0
  %1617 = vmatprep.subr.bf16.mxu0 0
  %1618 = vmatpush1.bf16.msra.mxu0 0
  %1619 = vmatprep.subr.bf16.mxu0 0
  %1620 = vmatpush1.bf16.msra.mxu0 0
  %1621 = vmatprep.mubr.bf16.mxu0 0
  %1622 = vmatmul.mubr.bf16.gmra.mrb[0].mxu0 %v1587
  %v1623 = vpop.f32.mrb[0].mxu0
  %v1624 = vadd.f32 %v1572, %v1623
  %v1625 = vpop.f32.mrb[0].mxu0
  %v1626 = vpop.f32.mrb[0].mxu0
  %v1627 = vadd.f32 %v1572, %v1626
  %v1628 = vpop.f32.mrb[0].mxu0
  %1629 = vdwg.mxu0
  %v1630 = vmul.f32 %v1624, %v1624
  %v1631 = vmul.f32 %v1627, %v1627
  %v1632 = vmul.f32 %v1624, %v1630
  %v1633 = vmul.f32 %v1627, %v1631
  %v1634 = vmul.f32 %v1632, 0.044715
  %v1635 = vmul.f32 %v1633, 0.044715
  %v1636 = vadd.f32 %v1624, %v1634
  %v1637 = vadd.f32 %v1627, %v1635
  %v1638 = vmul.f32 %v1636, 0.7978846
  %v1639 = vmul.f32 %v1637, 0.7978846
  %v1640 = vtanh.pop %v1638
  %v1641 = vtanh.pop %v1639
  %v1642 = vadd.f32 %v1640, 1.0
  %v1643 = vadd.f32 %v1641, 1.0
  %v1644 = vmul.f32 %v1642, 0.5
  %v1645 = vmul.f32 %v1643, 0.5
  %v1646 = vmul.f32 %v1624, %v1644
  %v1647 = vmul.f32 %v1627, %v1645
  %v1648 = vpack.c.bf16 %v1647, %v1646
  %v1649 = vld [vmem:[%s22] sm:$0xf]
  %v1650 = vld [vmem:[%s22 + $0x4] sm:$0xf]
  %v1651 = vld [vmem:[%s22 + $0x8] sm:$0xf]
  %v1652 = vld [vmem:[%s22 + $0xc] sm:$0xf]
  %v1653 = vld [vmem:[%s22 + $0x10] sm:$0xf]
  %v1654 = vld [vmem:[%s22 + $0x14] sm:$0xf]
  %v1655 = vld [vmem:[%s22 + $0x18] sm:$0xf]
  %v1656 = vld [vmem:[%s22 + $0x1c] sm:$0xf]
  %v1658 = vlaneseq
  %v1659 = vshrl.u32 %v1658, 7
  %v1660 = vsub.s32 0, %v1659
  %v1661 = vrot.slane %v1562, %v1660
  %v1671 = vunpack.c.l.b16 %v1649
  %v1672 = vunpack.c.l.b16 %v1650
  %v1673 = vunpack.c.l.b16 %v1651
  %v1674 = vunpack.c.l.b16 %v1652
  %v1675 = vunpack.c.l.b16 %v1653
  %v1676 = vunpack.c.l.b16 %v1654
  %v1677 = vunpack.c.l.b16 %v1655
  %v1678 = vunpack.c.l.b16 %v1656
  %v1679 = vpack.c.b16 %v1672, %v1671
  %v1680 = vpack.c.b16 %v1674, %v1673
  %v1681 = vpack.c.b16 %v1676, %v1675
  %v1682 = vpack.c.b16 %v1678, %v1677
  %vm1687 = vcmask 523264
  %v1689 = vsel %vm1687, %v1648, 0
  %1691 = vmatprep.subr.bf16.mxu0 0
  %1692 = vmatpush1.bf16.msra.mxu0 %v1679
  %1693 = vmatprep.subr.bf16.mxu0 0
  %1694 = vmatpush1.bf16.msra.mxu0 %v1680
  %1695 = vmatprep.subr.bf16.mxu0 0
  %1696 = vmatpush1.bf16.msra.mxu0 %v1681
  %1697 = vmatprep.subr.bf16.mxu0 0
  %1698 = vmatpush1.bf16.msra.mxu0 %v1682
  %1699 = vmatprep.subr.bf16.mxu0 0
  %1700 = vmatpush1.bf16.msra.mxu0 0
  %1701 = vmatprep.subr.bf16.mxu0 0
  %1702 = vmatpush1.bf16.msra.mxu0 0
  %1703 = vmatprep.subr.bf16.mxu0 0
  %1704 = vmatpush1.bf16.msra.mxu0 0
  %1705 = vmatprep.subr.bf16.mxu0 0
  %1706 = vmatpush1.bf16.msra.mxu0 0
  %1707 = vmatprep.subr.bf16.mxu0 0
  %1708 = vmatpush1.bf16.msra.mxu0 0
  %1709 = vmatprep.subr.bf16.mxu0 0
  %1710 = vmatpush1.bf16.msra.mxu0 0
  %1711 = vmatprep.subr.bf16.mxu0 0
  %1712 = vmatpush1.bf16.msra.mxu0 0
  %1713 = vmatprep.subr.bf16.mxu0 0
  %1714 = vmatpush1.bf16.msra.mxu0 0
  %1715 = vmatprep.subr.bf16.mxu0 0
  %1716 = vmatpush1.bf16.msra.mxu0 0
  %1717 = vmatprep.subr.bf16.mxu0 0
  %1718 = vmatpush1.bf16.msra.mxu0 0
  %1719 = vmatprep.subr.bf16.mxu0 0
  %1720 = vmatpush1.bf16.msra.mxu0 0
  %1721 = vmatprep.subr.bf16.mxu0 0
  %1722 = vmatpush1.bf16.msra.mxu0 0
  %1723 = vmatprep.mubr.bf16.mxu0 0
  %1724 = vmatmul.mubr.bf16.gmra.mrb[0].mxu0 %v1689
  %v1725 = vpop.f32.mrb[0].mxu0
  %v1726 = vadd.f32 %v1661, %v1725
  %v1727 = vpop.f32.mrb[0].mxu0
  %v1728 = vpop.f32.mrb[0].mxu0
  %v1729 = vadd.f32 %v1661, %v1728
  %v1730 = vpop.f32.mrb[0].mxu0
  %1731 = vdwg.mxu0
  %v1732 = vadd.f32 %v1515, %v1726
  %v1733 = vadd.f32 %v1516, %v1729
  %1734 = vst.msk [vmem:[%s24] sm:$0xff] %vm84, %v1732
  %1735 = vst.msk [vmem:[%s24 + $0x8] sm:$0xff] %vm84, %v1733
  // Predicated region
  $region98: #{custom_model_forward.5} parent=0 // pred_check
    _
  $region99: #{custom_model_forward.5} parent=0 // pred_check_branch
    %1737 = sbr.rel (0) target = $region101
  $region100: #{custom_model_forward.5} parent=0 // pred_region
    _
  $region101: #{custom_model_forward.5} parent=0 // pred_fallthru
    _
  // Predicated region
  $region102: #{custom_model_forward.5} parent=0 // pred_check
    _
  $region103: #{custom_model_forward.5} parent=0 // pred_check_branch
    %1739 = sbr.rel (0) target = $region105
  $region104: #{custom_model_forward.5} parent=0 // pred_region
    _
  $region105: #{custom_model_forward.5} parent=0 // pred_fallthru
    _

</llo_original>
